<compile_context>
chip_gen: v7x
topology: tpu7x:2x2x1
jax: 0.10.0
libtpu: 0.0.40
codegen_flags: <defaults>
</compile_context>

<pallas_src>
import functools

import jax
import jax.numpy as jnp
from jax import lax
from jax.experimental import pallas as pl
from jax.experimental.pallas import tpu as pltpu

LANE = 128  # TPU lane width: pad Cout / contraction dims to this.


def _round_up(x, m):
    return (x + m - 1) // m * m


def _fused_two_conv_relu_kernel(p1_ref, w1_ref, b1_ref, w2_ref, b2_ref, o_ref,
                                y1_ref, slab2_ref, *,
                                n, ho1, wo1, ho2, wo2, kh, kw, c1p):
    """Conv(valid,stride1)+ReLU -> Conv(valid,stride1)+ReLU, fused.

    p1_ref   : (M1, K1p)          layer-1 im2col patches (zero-padded K)
    w1_ref   : (K1p, C1p)         layer-1 weights (zero-padded)
    b1_ref   : (1, C1p)           layer-1 bias (zero-padded)
    w2_ref   : (kh*kw*C1p, C2p)   layer-2 weights (zero-padded)
    b2_ref   : (1, C2p)           layer-2 bias (zero-padded)
    o_ref    : (M2, C2p)          output slab (N*Ho2*Wo2, padded Cout2)
    y1_ref   : VMEM scratch (n, ho1, wo1, c1p)   layer-1 activations
    slab2_ref: VMEM scratch (M2, kh*kw*c1p)      layer-2 im2col slab
    """
    m2 = n * ho2 * wo2

    # ---- Layer 1: one big MXU matmul + bias + ReLU on the 2D accumulator ----
    y1 = jnp.dot(p1_ref[...], w1_ref[...], preferred_element_type=jnp.float32)
    y1 = jnp.maximum(y1 + b1_ref[...], 0.0)                    # (M1, C1p)
    # Stash NHWC so the layer-2 windows are plain static slices.
    y1_ref[...] = y1.reshape(n, ho1, wo1, c1p)

    # ---- Layer 2: stage the im2col slab once (kh*kw lane-aligned 128-wide
    # column blocks), then a single K = kh*kw*c1p matmul. ----
    for i in range(kh):
        for j in range(kw):
            idx = i * kw + j
            win = y1_ref[:, i:i + ho2, j:j + wo2, :]           # (n, ho2, wo2, c1p)
            slab2_ref[:, idx * c1p:(idx + 1) * c1p] = win.reshape(m2, c1p)

    y2 = jnp.dot(slab2_ref[...], w2_ref[...], preferred_element_type=jnp.float32)
    o_ref[...] = jnp.maximum(y2 + b2_ref[...], 0.0)            # lane-dense store


def sequential_forward(x_nchw, params):
    """Sequential(Conv2d(cin,c1,k), ReLU, Conv2d(c1,c2,k), ReLU) on NCHW input.

    params = [(w1, b1), (w2, b2)] with w in HWIO layout (kh, kw, cin, cout)
    and b of shape (cout,) -- numerically identical to the PyTorch module.
    """
    (w1, b1), (w2, b2) = params

    n, cin, h, w = x_nchw.shape
    kh, kw, cin1, c1 = w1.shape
    kh2, kw2, c1_w2, c2 = w2.shape
    assert cin == cin1 and c1 == c1_w2 and (kh, kw) == (kh2, kw2)

    ho1, wo1 = h - kh + 1, w - kw + 1
    ho2, wo2 = ho1 - kh + 1, wo1 - kw + 1
    m1, m2 = n * ho1 * wo1, n * ho2 * wo2

    k1 = kh * kw * cin
    k1p = _round_up(k1, LANE)
    c1p = _round_up(c1, LANE)
    c2p = _round_up(c2, LANE)

    # --- layout plumbing in XLA (tiny tensors): im2col for layer 1 and
    # zero-padding of channel / contraction dims to the 128-lane width ---
    x_nhwc = jnp.transpose(x_nchw, (0, 2, 3, 1))
    patches = [x_nhwc[:, i:i + ho1, j:j + wo1, :]
               for i in range(kh) for j in range(kw)]
    p1 = jnp.concatenate(patches, axis=-1).reshape(m1, k1)      # (m1, kh*kw*cin)
    p1 = jnp.pad(p1, ((0, 0), (0, k1p - k1)))                   # (m1, k1p)

    w1p = jnp.pad(w1.reshape(k1, c1), ((0, k1p - k1), (0, c1p - c1)))
    b1p = jnp.pad(b1.reshape(1, c1), ((0, 0), (0, c1p - c1)))
    w2p = jnp.pad(w2, ((0, 0), (0, 0), (0, c1p - c1), (0, c2p - c2)))
    w2p = w2p.reshape(kh * kw * c1p, c2p)
    b2p = jnp.pad(b2.reshape(1, c2), ((0, 0), (0, c2p - c2)))

    kernel = functools.partial(
        _fused_two_conv_relu_kernel,
        n=n, ho1=ho1, wo1=wo1, ho2=ho2, wo2=wo2, kh=kh, kw=kw, c1p=c1p)

    out2d = pl.pallas_call(
        kernel,
        out_shape=jax.ShapeDtypeStruct((m2, c2p), jnp.float32),
        in_specs=[pl.BlockSpec(memory_space=pltpu.MemorySpace.VMEM)] * 5,
        out_specs=pl.BlockSpec(memory_space=pltpu.MemorySpace.VMEM),
        scratch_shapes=[
            pltpu.VMEM((n, ho1, wo1, c1p), jnp.float32),        # layer-1 acts
            pltpu.VMEM((m2, kh * kw * c1p), jnp.float32),       # layer-2 im2col
        ],
    )(p1, w1p, b1p, w2p, b2p)

    # Lane-dense 2D slab -> NCHW, dropping the channel padding.
    out = out2d.reshape(n, ho2, wo2, c2p)[:, :, :, :c2]
    return jnp.transpose(out, (0, 3, 1, 2))


def _reference_forward(x_nchw, params):
    """Pure-JAX reference (lax conv) for the correctness check."""
    x = jnp.transpose(x_nchw, (0, 2, 3, 1))
    for w, b in params:
        y = lax.conv_general_dilated(
            x, w, window_strides=(1, 1), padding="VALID",
            dimension_numbers=("NHWC", "HWIO", "NHWC"),
        )
        x = jnp.maximum(y + b.reshape(1, 1, 1, -1), 0.0)
    return jnp.transpose(x, (0, 3, 1, 2))


if __name__ == "__main__":
    # TODO(synk): generic Sequential chains arbitrary modules; only the
    # docstring's Conv2d(1,20,5)/ReLU/Conv2d(20,64,5)/ReLU stack is kernelized.
    key = jax.random.PRNGKey(0)
    k_x, k_w1, k_b1, k_w2, k_b2 = jax.random.split(key, 5)

    # Input, PyTorch convention: NCHW = (2, 1, 16, 16)
    x = jax.random.normal(k_x, (2, 1, 16, 16), dtype=jnp.float32)

    # Conv2d(1, 20, 5): weight HWIO (KH, KW, Cin, Cout), bias (Cout,)
    w1 = jax.random.normal(k_w1, (5, 5, 1, 20), dtype=jnp.float32) * 0.1
    b1 = jax.random.normal(k_b1, (20,), dtype=jnp.float32) * 0.1
    # Conv2d(20, 64, 5)
    w2 = jax.random.normal(k_w2, (5, 5, 20, 64), dtype=jnp.float32) * 0.1
    b2 = jax.random.normal(k_b2, (64,), dtype=jnp.float32) * 0.1

    params = [(w1, b1), (w2, b2)]

    out = jax.block_until_ready(sequential_forward(x, params))
    assert out.shape == (2, 64, 8, 8), out.shape

    ref = jax.block_until_ready(_reference_forward(x, params))
    assert jnp.allclose(out, ref, atol=1e-4, rtol=1e-4), "mismatch vs reference"

    print("KERNEL_OK")
</pallas_src>

<mosaic_0001>
module attributes {stable_mosaic.version = 11 : i64} {
  func.func @_fused_two_conv_relu_kernel(%arg0: memref<288x128xf32, #tpu.memory_space<vmem>>, %arg1: memref<128x128xf32, #tpu.memory_space<vmem>>, %arg2: memref<1x128xf32, #tpu.memory_space<vmem>>, %arg3: memref<3200x128xf32, #tpu.memory_space<vmem>>, %arg4: memref<1x128xf32, #tpu.memory_space<vmem>>, %arg5: memref<128x128xf32, #tpu.memory_space<vmem>>, %arg6: memref<2x12x12x128xf32, #tpu.memory_space<vmem>>, %arg7: memref<128x3200xf32, #tpu.memory_space<vmem>>) attributes {dimension_semantics = [], scalar_prefetch = 0 : i64, scratch_operands = 2 : i64, tpu.core_type = #tpu.core_type<tc>} {
    %c0 = arith.constant 0 : index
    %c0_0 = arith.constant 0 : index
    %0 = vector.load %arg0[%c0, %c0_0] : memref<288x128xf32, #tpu.memory_space<vmem>>, vector<288x128xf32>
    %c0_1 = arith.constant 0 : index
    %c0_2 = arith.constant 0 : index
    %1 = vector.load %arg1[%c0_1, %c0_2] : memref<128x128xf32, #tpu.memory_space<vmem>>, vector<128x128xf32>
    %cst = arith.constant dense<0.000000e+00> : vector<288x128xf32>
    %2 = tpu.matmul %0, %1, %cst {dimension_numbers = #tpu.dot_dimension_numbers<[1], [0], [0], [1], [0, 0, 1, 1], [], []>} : vector<288x128xf32>, vector<128x128xf32>, vector<288x128xf32> -> vector<288x128xf32>
    %c0_3 = arith.constant 0 : index
    %c0_4 = arith.constant 0 : index
    %3 = vector.load %arg2[%c0_3, %c0_4] : memref<1x128xf32, #tpu.memory_space<vmem>>, vector<1x128xf32>
    %4 = vector.broadcast %3 : vector<1x128xf32> to vector<288x128xf32>
    %5 = arith.addf %2, %4 : vector<288x128xf32>
    %cst_5 = arith.constant 0.000000e+00 : f32
    %6 = vector.broadcast %cst_5 : f32 to vector<288x128xf32>
    %7 = arith.maximumf %5, %6 : vector<288x128xf32>
    %8 = vector.shape_cast %7 : vector<288x128xf32> to vector<2x12x12x128xf32>
    %c0_6 = arith.constant 0 : index
    %c0_7 = arith.constant 0 : index
    %c0_8 = arith.constant 0 : index
    %c0_9 = arith.constant 0 : index
    %9 = vector.load %arg6[%c0_6, %c0_7, %c0_8, %c0_9] : memref<2x12x12x128xf32, #tpu.memory_space<vmem>>, vector<2x12x12x128xf32>
    tpu.vector_store %arg6[%c0_6, %c0_7, %c0_8, %c0_9], %8 {strides = array<i32>} : memref<2x12x12x128xf32, #tpu.memory_space<vmem>>, vector<2x12x12x128xf32>,
    %c0_10 = arith.constant 0 : index
    %c0_11 = arith.constant 0 : index
    %c0_12 = arith.constant 0 : index
    %c0_13 = arith.constant 0 : index
    %10 = vector.load %arg6[%c0_10, %c0_11, %c0_12, %c0_13] : memref<2x12x12x128xf32, #tpu.memory_space<vmem>>, vector<2x8x8x128xf32>
    %11 = vector.shape_cast %10 : vector<2x8x8x128xf32> to vector<128x128xf32>
    %c0_14 = arith.constant 0 : index
    %c0_15 = arith.constant 0 : index
    %12 = vector.load %arg7[%c0_14, %c0_15] : memref<128x3200xf32, #tpu.memory_space<vmem>>, vector<128x128xf32>
    tpu.vector_store %arg7[%c0_14, %c0_15], %11 {strides = array<i32>} : memref<128x3200xf32, #tpu.memory_space<vmem>>, vector<128x128xf32>,
    %c0_16 = arith.constant 0 : index
    %c0_17 = arith.constant 0 : index
    %c1 = arith.constant 1 : index
    %c0_18 = arith.constant 0 : index
    %13 = vector.load %arg6[%c0_16, %c0_17, %c1, %c0_18] : memref<2x12x12x128xf32, #tpu.memory_space<vmem>>, vector<2x8x8x128xf32>
    %14 = vector.shape_cast %13 : vector<2x8x8x128xf32> to vector<128x128xf32>
    %c0_19 = arith.constant 0 : index
    %c128 = arith.constant 128 : index
    %15 = vector.load %arg7[%c0_19, %c128] : memref<128x3200xf32, #tpu.memory_space<vmem>>, vector<128x128xf32>
    tpu.vector_store %arg7[%c0_19, %c128], %14 {strides = array<i32>} : memref<128x3200xf32, #tpu.memory_space<vmem>>, vector<128x128xf32>,
    %c0_20 = arith.constant 0 : index
    %c0_21 = arith.constant 0 : index
    %c2 = arith.constant 2 : index
    %c0_22 = arith.constant 0 : index
    %16 = vector.load %arg6[%c0_20, %c0_21, %c2, %c0_22] : memref<2x12x12x128xf32, #tpu.memory_space<vmem>>, vector<2x8x8x128xf32>
    %17 = vector.shape_cast %16 : vector<2x8x8x128xf32> to vector<128x128xf32>
    %c0_23 = arith.constant 0 : index
    %c256 = arith.constant 256 : index
    %18 = vector.load %arg7[%c0_23, %c256] : memref<128x3200xf32, #tpu.memory_space<vmem>>, vector<128x128xf32>
    tpu.vector_store %arg7[%c0_23, %c256], %17 {strides = array<i32>} : memref<128x3200xf32, #tpu.memory_space<vmem>>, vector<128x128xf32>,
    %c0_24 = arith.constant 0 : index
    %c0_25 = arith.constant 0 : index
    %c3 = arith.constant 3 : index
    %c0_26 = arith.constant 0 : index
    %19 = vector.load %arg6[%c0_24, %c0_25, %c3, %c0_26] : memref<2x12x12x128xf32, #tpu.memory_space<vmem>>, vector<2x8x8x128xf32>
    %20 = vector.shape_cast %19 : vector<2x8x8x128xf32> to vector<128x128xf32>
    %c0_27 = arith.constant 0 : index
    %c384 = arith.constant 384 : index
    %21 = vector.load %arg7[%c0_27, %c384] : memref<128x3200xf32, #tpu.memory_space<vmem>>, vector<128x128xf32>
    tpu.vector_store %arg7[%c0_27, %c384], %20 {strides = array<i32>} : memref<128x3200xf32, #tpu.memory_space<vmem>>, vector<128x128xf32>,
    %c0_28 = arith.constant 0 : index
    %c0_29 = arith.constant 0 : index
    %c4 = arith.constant 4 : index
    %c0_30 = arith.constant 0 : index
    %22 = vector.load %arg6[%c0_28, %c0_29, %c4, %c0_30] : memref<2x12x12x128xf32, #tpu.memory_space<vmem>>, vector<2x8x8x128xf32>
    %23 = vector.shape_cast %22 : vector<2x8x8x128xf32> to vector<128x128xf32>
    %c0_31 = arith.constant 0 : index
    %c512 = arith.constant 512 : index
    %24 = vector.load %arg7[%c0_31, %c512] : memref<128x3200xf32, #tpu.memory_space<vmem>>, vector<128x128xf32>
    tpu.vector_store %arg7[%c0_31, %c512], %23 {strides = array<i32>} : memref<128x3200xf32, #tpu.memory_space<vmem>>, vector<128x128xf32>,
    %c0_32 = arith.constant 0 : index
    %c1_33 = arith.constant 1 : index
    %c0_34 = arith.constant 0 : index
    %c0_35 = arith.constant 0 : index
    %25 = vector.load %arg6[%c0_32, %c1_33, %c0_34, %c0_35] : memref<2x12x12x128xf32, #tpu.memory_space<vmem>>, vector<2x8x8x128xf32>
    %26 = vector.shape_cast %25 : vector<2x8x8x128xf32> to vector<128x128xf32>
    %c0_36 = arith.constant 0 : index
    %c640 = arith.constant 640 : index
    %27 = vector.load %arg7[%c0_36, %c640] : memref<128x3200xf32, #tpu.memory_space<vmem>>, vector<128x128xf32>
    tpu.vector_store %arg7[%c0_36, %c640], %26 {strides = array<i32>} : memref<128x3200xf32, #tpu.memory_space<vmem>>, vector<128x128xf32>,
    %c0_37 = arith.constant 0 : index
    %c1_38 = arith.constant 1 : index
    %c1_39 = arith.constant 1 : index
    %c0_40 = arith.constant 0 : index
    %28 = vector.load %arg6[%c0_37, %c1_38, %c1_39, %c0_40] : memref<2x12x12x128xf32, #tpu.memory_space<vmem>>, vector<2x8x8x128xf32>
    %29 = vector.shape_cast %28 : vector<2x8x8x128xf32> to vector<128x128xf32>
    %c0_41 = arith.constant 0 : index
    %c768 = arith.constant 768 : index
    %30 = vector.load %arg7[%c0_41, %c768] : memref<128x3200xf32, #tpu.memory_space<vmem>>, vector<128x128xf32>
    tpu.vector_store %arg7[%c0_41, %c768], %29 {strides = array<i32>} : memref<128x3200xf32, #tpu.memory_space<vmem>>, vector<128x128xf32>,
    %c0_42 = arith.constant 0 : index
    %c1_43 = arith.constant 1 : index
    %c2_44 = arith.constant 2 : index
    %c0_45 = arith.constant 0 : index
    %31 = vector.load %arg6[%c0_42, %c1_43, %c2_44, %c0_45] : memref<2x12x12x128xf32, #tpu.memory_space<vmem>>, vector<2x8x8x128xf32>
    %32 = vector.shape_cast %31 : vector<2x8x8x128xf32> to vector<128x128xf32>
    %c0_46 = arith.constant 0 : index
    %c896 = arith.constant 896 : index
    %33 = vector.load %arg7[%c0_46, %c896] : memref<128x3200xf32, #tpu.memory_space<vmem>>, vector<128x128xf32>
    tpu.vector_store %arg7[%c0_46, %c896], %32 {strides = array<i32>} : memref<128x3200xf32, #tpu.memory_space<vmem>>, vector<128x128xf32>,
    %c0_47 = arith.constant 0 : index
    %c1_48 = arith.constant 1 : index
    %c3_49 = arith.constant 3 : index
    %c0_50 = arith.constant 0 : index
    %34 = vector.load %arg6[%c0_47, %c1_48, %c3_49, %c0_50] : memref<2x12x12x128xf32, #tpu.memory_space<vmem>>, vector<2x8x8x128xf32>
    %35 = vector.shape_cast %34 : vector<2x8x8x128xf32> to vector<128x128xf32>
    %c0_51 = arith.constant 0 : index
    %c1024 = arith.constant 1024 : index
    %36 = vector.load %arg7[%c0_51, %c1024] : memref<128x3200xf32, #tpu.memory_space<vmem>>, vector<128x128xf32>
    tpu.vector_store %arg7[%c0_51, %c1024], %35 {strides = array<i32>} : memref<128x3200xf32, #tpu.memory_space<vmem>>, vector<128x128xf32>,
    %c0_52 = arith.constant 0 : index
    %c1_53 = arith.constant 1 : index
    %c4_54 = arith.constant 4 : index
    %c0_55 = arith.constant 0 : index
    %37 = vector.load %arg6[%c0_52, %c1_53, %c4_54, %c0_55] : memref<2x12x12x128xf32, #tpu.memory_space<vmem>>, vector<2x8x8x128xf32>
    %38 = vector.shape_cast %37 : vector<2x8x8x128xf32> to vector<128x128xf32>
    %c0_56 = arith.constant 0 : index
    %c1152 = arith.constant 1152 : index
    %39 = vector.load %arg7[%c0_56, %c1152] : memref<128x3200xf32, #tpu.memory_space<vmem>>, vector<128x128xf32>
    tpu.vector_store %arg7[%c0_56, %c1152], %38 {strides = array<i32>} : memref<128x3200xf32, #tpu.memory_space<vmem>>, vector<128x128xf32>,
    %c0_57 = arith.constant 0 : index
    %c2_58 = arith.constant 2 : index
    %c0_59 = arith.constant 0 : index
    %c0_60 = arith.constant 0 : index
    %40 = vector.load %arg6[%c0_57, %c2_58, %c0_59, %c0_60] : memref<2x12x12x128xf32, #tpu.memory_space<vmem>>, vector<2x8x8x128xf32>
    %41 = vector.shape_cast %40 : vector<2x8x8x128xf32> to vector<128x128xf32>
    %c0_61 = arith.constant 0 : index
    %c1280 = arith.constant 1280 : index
    %42 = vector.load %arg7[%c0_61, %c1280] : memref<128x3200xf32, #tpu.memory_space<vmem>>, vector<128x128xf32>
    tpu.vector_store %arg7[%c0_61, %c1280], %41 {strides = array<i32>} : memref<128x3200xf32, #tpu.memory_space<vmem>>, vector<128x128xf32>,
    %c0_62 = arith.constant 0 : index
    %c2_63 = arith.constant 2 : index
    %c1_64 = arith.constant 1 : index
    %c0_65 = arith.constant 0 : index
    %43 = vector.load %arg6[%c0_62, %c2_63, %c1_64, %c0_65] : memref<2x12x12x128xf32, #tpu.memory_space<vmem>>, vector<2x8x8x128xf32>
    %44 = vector.shape_cast %43 : vector<2x8x8x128xf32> to vector<128x128xf32>
    %c0_66 = arith.constant 0 : index
    %c1408 = arith.constant 1408 : index
    %45 = vector.load %arg7[%c0_66, %c1408] : memref<128x3200xf32, #tpu.memory_space<vmem>>, vector<128x128xf32>
    tpu.vector_store %arg7[%c0_66, %c1408], %44 {strides = array<i32>} : memref<128x3200xf32, #tpu.memory_space<vmem>>, vector<128x128xf32>,
    %c0_67 = arith.constant 0 : index
    %c2_68 = arith.constant 2 : index
    %c2_69 = arith.constant 2 : index
    %c0_70 = arith.constant 0 : index
    %46 = vector.load %arg6[%c0_67, %c2_68, %c2_69, %c0_70] : memref<2x12x12x128xf32, #tpu.memory_space<vmem>>, vector<2x8x8x128xf32>
    %47 = vector.shape_cast %46 : vector<2x8x8x128xf32> to vector<128x128xf32>
    %c0_71 = arith.constant 0 : index
    %c1536 = arith.constant 1536 : index
    %48 = vector.load %arg7[%c0_71, %c1536] : memref<128x3200xf32, #tpu.memory_space<vmem>>, vector<128x128xf32>
    tpu.vector_store %arg7[%c0_71, %c1536], %47 {strides = array<i32>} : memref<128x3200xf32, #tpu.memory_space<vmem>>, vector<128x128xf32>,
    %c0_72 = arith.constant 0 : index
    %c2_73 = arith.constant 2 : index
    %c3_74 = arith.constant 3 : index
    %c0_75 = arith.constant 0 : index
    %49 = vector.load %arg6[%c0_72, %c2_73, %c3_74, %c0_75] : memref<2x12x12x128xf32, #tpu.memory_space<vmem>>, vector<2x8x8x128xf32>
    %50 = vector.shape_cast %49 : vector<2x8x8x128xf32> to vector<128x128xf32>
    %c0_76 = arith.constant 0 : index
    %c1664 = arith.constant 1664 : index
    %51 = vector.load %arg7[%c0_76, %c1664] : memref<128x3200xf32, #tpu.memory_space<vmem>>, vector<128x128xf32>
    tpu.vector_store %arg7[%c0_76, %c1664], %50 {strides = array<i32>} : memref<128x3200xf32, #tpu.memory_space<vmem>>, vector<128x128xf32>,
    %c0_77 = arith.constant 0 : index
    %c2_78 = arith.constant 2 : index
    %c4_79 = arith.constant 4 : index
    %c0_80 = arith.constant 0 : index
    %52 = vector.load %arg6[%c0_77, %c2_78, %c4_79, %c0_80] : memref<2x12x12x128xf32, #tpu.memory_space<vmem>>, vector<2x8x8x128xf32>
    %53 = vector.shape_cast %52 : vector<2x8x8x128xf32> to vector<128x128xf32>
    %c0_81 = arith.constant 0 : index
    %c1792 = arith.constant 1792 : index
    %54 = vector.load %arg7[%c0_81, %c1792] : memref<128x3200xf32, #tpu.memory_space<vmem>>, vector<128x128xf32>
    tpu.vector_store %arg7[%c0_81, %c1792], %53 {strides = array<i32>} : memref<128x3200xf32, #tpu.memory_space<vmem>>, vector<128x128xf32>,
    %c0_82 = arith.constant 0 : index
    %c3_83 = arith.constant 3 : index
    %c0_84 = arith.constant 0 : index
    %c0_85 = arith.constant 0 : index
    %55 = vector.load %arg6[%c0_82, %c3_83, %c0_84, %c0_85] : memref<2x12x12x128xf32, #tpu.memory_space<vmem>>, vector<2x8x8x128xf32>
    %56 = vector.shape_cast %55 : vector<2x8x8x128xf32> to vector<128x128xf32>
    %c0_86 = arith.constant 0 : index
    %c1920 = arith.constant 1920 : index
    %57 = vector.load %arg7[%c0_86, %c1920] : memref<128x3200xf32, #tpu.memory_space<vmem>>, vector<128x128xf32>
    tpu.vector_store %arg7[%c0_86, %c1920], %56 {strides = array<i32>} : memref<128x3200xf32, #tpu.memory_space<vmem>>, vector<128x128xf32>,
    %c0_87 = arith.constant 0 : index
    %c3_88 = arith.constant 3 : index
    %c1_89 = arith.constant 1 : index
    %c0_90 = arith.constant 0 : index
    %58 = vector.load %arg6[%c0_87, %c3_88, %c1_89, %c0_90] : memref<2x12x12x128xf32, #tpu.memory_space<vmem>>, vector<2x8x8x128xf32>
    %59 = vector.shape_cast %58 : vector<2x8x8x128xf32> to vector<128x128xf32>
    %c0_91 = arith.constant 0 : index
    %c2048 = arith.constant 2048 : index
    %60 = vector.load %arg7[%c0_91, %c2048] : memref<128x3200xf32, #tpu.memory_space<vmem>>, vector<128x128xf32>
    tpu.vector_store %arg7[%c0_91, %c2048], %59 {strides = array<i32>} : memref<128x3200xf32, #tpu.memory_space<vmem>>, vector<128x128xf32>,
    %c0_92 = arith.constant 0 : index
    %c3_93 = arith.constant 3 : index
    %c2_94 = arith.constant 2 : index
    %c0_95 = arith.constant 0 : index
    %61 = vector.load %arg6[%c0_92, %c3_93, %c2_94, %c0_95] : memref<2x12x12x128xf32, #tpu.memory_space<vmem>>, vector<2x8x8x128xf32>
    %62 = vector.shape_cast %61 : vector<2x8x8x128xf32> to vector<128x128xf32>
    %c0_96 = arith.constant 0 : index
    %c2176 = arith.constant 2176 : index
    %63 = vector.load %arg7[%c0_96, %c2176] : memref<128x3200xf32, #tpu.memory_space<vmem>>, vector<128x128xf32>
    tpu.vector_store %arg7[%c0_96, %c2176], %62 {strides = array<i32>} : memref<128x3200xf32, #tpu.memory_space<vmem>>, vector<128x128xf32>,
    %c0_97 = arith.constant 0 : index
    %c3_98 = arith.constant 3 : index
    %c3_99 = arith.constant 3 : index
    %c0_100 = arith.constant 0 : index
    %64 = vector.load %arg6[%c0_97, %c3_98, %c3_99, %c0_100] : memref<2x12x12x128xf32, #tpu.memory_space<vmem>>, vector<2x8x8x128xf32>
    %65 = vector.shape_cast %64 : vector<2x8x8x128xf32> to vector<128x128xf32>
    %c0_101 = arith.constant 0 : index
    %c2304 = arith.constant 2304 : index
    %66 = vector.load %arg7[%c0_101, %c2304] : memref<128x3200xf32, #tpu.memory_space<vmem>>, vector<128x128xf32>
    tpu.vector_store %arg7[%c0_101, %c2304], %65 {strides = array<i32>} : memref<128x3200xf32, #tpu.memory_space<vmem>>, vector<128x128xf32>,
    %c0_102 = arith.constant 0 : index
    %c3_103 = arith.constant 3 : index
    %c4_104 = arith.constant 4 : index
    %c0_105 = arith.constant 0 : index
    %67 = vector.load %arg6[%c0_102, %c3_103, %c4_104, %c0_105] : memref<2x12x12x128xf32, #tpu.memory_space<vmem>>, vector<2x8x8x128xf32>
    %68 = vector.shape_cast %67 : vector<2x8x8x128xf32> to vector<128x128xf32>
    %c0_106 = arith.constant 0 : index
    %c2432 = arith.constant 2432 : index
    %69 = vector.load %arg7[%c0_106, %c2432] : memref<128x3200xf32, #tpu.memory_space<vmem>>, vector<128x128xf32>
    tpu.vector_store %arg7[%c0_106, %c2432], %68 {strides = array<i32>} : memref<128x3200xf32, #tpu.memory_space<vmem>>, vector<128x128xf32>,
    %c0_107 = arith.constant 0 : index
    %c4_108 = arith.constant 4 : index
    %c0_109 = arith.constant 0 : index
    %c0_110 = arith.constant 0 : index
    %70 = vector.load %arg6[%c0_107, %c4_108, %c0_109, %c0_110] : memref<2x12x12x128xf32, #tpu.memory_space<vmem>>, vector<2x8x8x128xf32>
    %71 = vector.shape_cast %70 : vector<2x8x8x128xf32> to vector<128x128xf32>
    %c0_111 = arith.constant 0 : index
    %c2560 = arith.constant 2560 : index
    %72 = vector.load %arg7[%c0_111, %c2560] : memref<128x3200xf32, #tpu.memory_space<vmem>>, vector<128x128xf32>
    tpu.vector_store %arg7[%c0_111, %c2560], %71 {strides = array<i32>} : memref<128x3200xf32, #tpu.memory_space<vmem>>, vector<128x128xf32>,
    %c0_112 = arith.constant 0 : index
    %c4_113 = arith.constant 4 : index
    %c1_114 = arith.constant 1 : index
    %c0_115 = arith.constant 0 : index
    %73 = vector.load %arg6[%c0_112, %c4_113, %c1_114, %c0_115] : memref<2x12x12x128xf32, #tpu.memory_space<vmem>>, vector<2x8x8x128xf32>
    %74 = vector.shape_cast %73 : vector<2x8x8x128xf32> to vector<128x128xf32>
    %c0_116 = arith.constant 0 : index
    %c2688 = arith.constant 2688 : index
    %75 = vector.load %arg7[%c0_116, %c2688] : memref<128x3200xf32, #tpu.memory_space<vmem>>, vector<128x128xf32>
    tpu.vector_store %arg7[%c0_116, %c2688], %74 {strides = array<i32>} : memref<128x3200xf32, #tpu.memory_space<vmem>>, vector<128x128xf32>,
    %c0_117 = arith.constant 0 : index
    %c4_118 = arith.constant 4 : index
    %c2_119 = arith.constant 2 : index
    %c0_120 = arith.constant 0 : index
    %76 = vector.load %arg6[%c0_117, %c4_118, %c2_119, %c0_120] : memref<2x12x12x128xf32, #tpu.memory_space<vmem>>, vector<2x8x8x128xf32>
    %77 = vector.shape_cast %76 : vector<2x8x8x128xf32> to vector<128x128xf32>
    %c0_121 = arith.constant 0 : index
    %c2816 = arith.constant 2816 : index
    %78 = vector.load %arg7[%c0_121, %c2816] : memref<128x3200xf32, #tpu.memory_space<vmem>>, vector<128x128xf32>
    tpu.vector_store %arg7[%c0_121, %c2816], %77 {strides = array<i32>} : memref<128x3200xf32, #tpu.memory_space<vmem>>, vector<128x128xf32>,
    %c0_122 = arith.constant 0 : index
    %c4_123 = arith.constant 4 : index
    %c3_124 = arith.constant 3 : index
    %c0_125 = arith.constant 0 : index
    %79 = vector.load %arg6[%c0_122, %c4_123, %c3_124, %c0_125] : memref<2x12x12x128xf32, #tpu.memory_space<vmem>>, vector<2x8x8x128xf32>
    %80 = vector.shape_cast %79 : vector<2x8x8x128xf32> to vector<128x128xf32>
    %c0_126 = arith.constant 0 : index
    %c2944 = arith.constant 2944 : index
    %81 = vector.load %arg7[%c0_126, %c2944] : memref<128x3200xf32, #tpu.memory_space<vmem>>, vector<128x128xf32>
    tpu.vector_store %arg7[%c0_126, %c2944], %80 {strides = array<i32>} : memref<128x3200xf32, #tpu.memory_space<vmem>>, vector<128x128xf32>,
    %c0_127 = arith.constant 0 : index
    %c4_128 = arith.constant 4 : index
    %c4_129 = arith.constant 4 : index
    %c0_130 = arith.constant 0 : index
    %82 = vector.load %arg6[%c0_127, %c4_128, %c4_129, %c0_130] : memref<2x12x12x128xf32, #tpu.memory_space<vmem>>, vector<2x8x8x128xf32>
    %83 = vector.shape_cast %82 : vector<2x8x8x128xf32> to vector<128x128xf32>
    %c0_131 = arith.constant 0 : index
    %c3072 = arith.constant 3072 : index
    %84 = vector.load %arg7[%c0_131, %c3072] : memref<128x3200xf32, #tpu.memory_space<vmem>>, vector<128x128xf32>
    tpu.vector_store %arg7[%c0_131, %c3072], %83 {strides = array<i32>} : memref<128x3200xf32, #tpu.memory_space<vmem>>, vector<128x128xf32>,
    %c0_132 = arith.constant 0 : index
    %c0_133 = arith.constant 0 : index
    %85 = vector.load %arg7[%c0_132, %c0_133] : memref<128x3200xf32, #tpu.memory_space<vmem>>, vector<128x3200xf32>
    %c0_134 = arith.constant 0 : index
    %c0_135 = arith.constant 0 : index
    %86 = vector.load %arg3[%c0_134, %c0_135] : memref<3200x128xf32, #tpu.memory_space<vmem>>, vector<3200x128xf32>
    %cst_136 = arith.constant dense<0.000000e+00> : vector<128x128xf32>
    %87 = tpu.matmul %85, %86, %cst_136 {dimension_numbers = #tpu.dot_dimension_numbers<[1], [0], [0], [1], [0, 0, 1, 1], [], []>} : vector<128x3200xf32>, vector<3200x128xf32>, vector<128x128xf32> -> vector<128x128xf32>
    %c0_137 = arith.constant 0 : index
    %c0_138 = arith.constant 0 : index
    %88 = vector.load %arg4[%c0_137, %c0_138] : memref<1x128xf32, #tpu.memory_space<vmem>>, vector<1x128xf32>
    %89 = vector.broadcast %88 : vector<1x128xf32> to vector<128x128xf32>
    %90 = arith.addf %87, %89 : vector<128x128xf32>
    %cst_139 = arith.constant 0.000000e+00 : f32
    %91 = vector.broadcast %cst_139 : f32 to vector<128x128xf32>
    %92 = arith.maximumf %90, %91 : vector<128x128xf32>
    %c0_140 = arith.constant 0 : index
    %c0_141 = arith.constant 0 : index
    %93 = vector.load %arg5[%c0_140, %c0_141] : memref<128x128xf32, #tpu.memory_space<vmem>>, vector<128x128xf32>
    tpu.vector_store %arg5[%c0_140, %c0_141], %92 {strides = array<i32>} : memref<128x128xf32, #tpu.memory_space<vmem>>, vector<128x128xf32>,
    return
  }
}

</mosaic_0001>

<llo_original>
// kernel: tpu_custom_call.1
$region0: #{tpu_custom_call.1}
  #allocation0 [shape = 'u32[]', space=smem, size = 0x4, offset = 0x4, fixed_abs, tag = 'smem constant byte address 0x4 - core index']
  #allocation1 [shape = 'u32[144,128]{1,0:T(1,128)}', space=vmem, size = 0x12000, scoped, tag = 'internal scratch']
  #allocation2 [shape = 'f32[2,12,12,128]{3,2,1,0:T(8,128)}', space=vmem, size = 0x30000, scoped, tag = 'scratch operand']
  #allocation3 [shape = 'f32[128,3200]{1,0:T(8,128)}', space=vmem, size = 0x190000, scoped, tag = 'scratch operand']
  %s0 = inlined_call_operand.hbm [shape: f32[288,128], index: 0, kind: input, shape index: {}]
  %s1 = inlined_call_operand.hbm [shape: f32[128,128], index: 1, kind: input, shape index: {}]
  %s2 = inlined_call_operand.hbm [shape: f32[1,128], index: 2, kind: input, shape index: {}]
  %s3 = inlined_call_operand.hbm [shape: f32[3200,128], index: 3, kind: input, shape index: {}]
  %s4 = inlined_call_operand.hbm [shape: f32[1,128], index: 4, kind: input, shape index: {}]
  %s5 = inlined_call_operand.hbm [shape: f32[128,128], index: 5, kind: output, shape index: {}]
  %s6 = sld [smem:[#allocation0]]
  $region50: #{tpu_custom_call.1} parent=0
    _
  %s8 = ssub.s32 1, %s6
  %s9 = scalar_select 0, %s8, %s6
  $region1: #{tpu_custom_call.1} parent=0
    #allocation4 [shape = 'u8[147456]{0}', space=vmem, size = 0x24000, scoped, tag = 'input window, operand 0, single buffered']
    #allocation5 [shape = 's32[1]{0}', space=sflag, size = 0x4, scoped, tag = 'scoped memory for tpu_custom_call.1']
    #allocation6 [shape = 's32[1]{0}', space=sflag, size = 0x4, scoped, tag = 'scoped memory for tpu_custom_call.1']
    #allocation7 [shape = 'u8[65536]{0}', space=vmem, size = 0x10000, scoped, tag = 'input window, operand 1, single buffered']
    #allocation8 [shape = 's32[1]{0}', space=sflag, size = 0x4, scoped, tag = 'scoped memory for tpu_custom_call.1']
    #allocation9 [shape = 'u8[512]{0}', space=vmem, size = 0x400, scoped, tag = 'input window, operand 2, single buffered']
    #allocation10 [shape = 'u8[1638400]{0}', space=vmem, size = 0x190000, scoped, tag = 'input window, operand 3, single buffered']
    #allocation11 [shape = 's32[1]{0}', space=sflag, size = 0x4, scoped, tag = 'scoped memory for tpu_custom_call.1']
    #allocation12 [shape = 'u8[512]{0}', space=vmem, size = 0x400, scoped, tag = 'input window, operand 4, single buffered']
    #allocation13 [shape = 'u8[65536]{0}', space=vmem, size = 0x10000, scoped, tag = 'output window, operand 0, single buffered']
    %10 = vsyncpa [#allocation5], 0
    %11 = vsyncpa [#allocation8], 0
    %12 = vsyncpa [#allocation11], 0
    %13 = vsyncpa [#allocation6], 0
    // Predicated region
    $region2: #{tpu_custom_call.1} parent=1 // pred_check
      _
    $region3: #{tpu_custom_call.1} parent=1 // pred_check_branch
      %15 = sbr.rel (0) target = $region5
    $region4: #{tpu_custom_call.1} parent=1 // pred_region
      %s17 = ssub.s32 4608, 4608
      %18 = vsyncadd [#allocation5], %s17
      %s19 = sshll.u32 [#allocation4], 4
      %s20 = int_to_ptr.vmem [resolvable:$true] %s19
      %25 = dma.hbm_to_vmem [thread:$0]  %s0, 4608, %s20, [#allocation5], 128, 128, 8
    $region5: #{tpu_custom_call.1} parent=1 // pred_fallthru
      _
    // Predicated region
    $region6: #{tpu_custom_call.1} parent=1 // pred_check
      _
    $region7: #{tpu_custom_call.1} parent=1 // pred_check_branch
      %27 = sbr.rel (0) target = $region9
    $region8: #{tpu_custom_call.1} parent=1 // pred_region
      %s29 = ssub.s32 2048, 2048
      %30 = vsyncadd [#allocation8], %s29
      %s31 = sshll.u32 [#allocation7], 4
      %s32 = int_to_ptr.vmem [resolvable:$true] %s31
      %37 = dma.hbm_to_vmem [thread:$0]  %s1, 2048, %s32, [#allocation8], 128, 128, 8
    $region9: #{tpu_custom_call.1} parent=1 // pred_fallthru
      _
    // Predicated region
    $region10: #{tpu_custom_call.1} parent=1 // pred_check
      _
    $region11: #{tpu_custom_call.1} parent=1 // pred_check_branch
      %39 = sbr.rel (0) target = $region13
    $region12: #{tpu_custom_call.1} parent=1 // pred_region
      %s41 = ssub.s32 16, 16
      %42 = vsyncadd [#allocation8], %s41
      %s44 = sshll.u32 [#allocation9], 4
      %s45 = int_to_ptr.vmem [resolvable:$true] %s44
      %47 = dma.hbm_to_vmem [thread:$0]  %s2, 16, %s45, [#allocation8]
    $region13: #{tpu_custom_call.1} parent=1 // pred_fallthru
      _
    // Predicated region
    $region14: #{tpu_custom_call.1} parent=1 // pred_check
      _
    $region15: #{tpu_custom_call.1} parent=1 // pred_check_branch
      %49 = sbr.rel (0) target = $region17
    $region16: #{tpu_custom_call.1} parent=1 // pred_region
      %s51 = ssub.s32 51200, 51200
      %52 = vsyncadd [#allocation11], %s51
      %s53 = sshll.u32 [#allocation10], 4
      %s54 = int_to_ptr.vmem [resolvable:$true] %s53
      %59 = dma.hbm_to_vmem [thread:$0]  %s3, 51200, %s54, [#allocation11], 128, 128, 8
    $region17: #{tpu_custom_call.1} parent=1 // pred_fallthru
      _
    // Predicated region
    $region18: #{tpu_custom_call.1} parent=1 // pred_check
      _
    $region19: #{tpu_custom_call.1} parent=1 // pred_check_branch
      %61 = sbr.rel (0) target = $region21
    $region20: #{tpu_custom_call.1} parent=1 // pred_region
      %s63 = ssub.s32 16, 16
      %64 = vsyncadd [#allocation11], %s63
      %s66 = sshll.u32 [#allocation12], 4
      %s67 = int_to_ptr.vmem [resolvable:$true] %s66
      %69 = dma.hbm_to_vmem [thread:$0]  %s4, 16, %s67, [#allocation11]
    $region21: #{tpu_custom_call.1} parent=1 // pred_fallthru
      _
    // Predicated region
    $region22: #{tpu_custom_call.1} parent=1 // pred_check
      _
    $region23: #{tpu_custom_call.1} parent=1 // pred_check_branch
      %71 = sbr.rel (0) target = $region25
    $region24: #{tpu_custom_call.1} parent=1 // pred_region
      %72 = dma.done [#allocation5], 4608
    $region25: #{tpu_custom_call.1} parent=1 // pred_fallthru
      _
    // Predicated region
    $region26: #{tpu_custom_call.1} parent=1 // pred_check
      _
    $region27: #{tpu_custom_call.1} parent=1 // pred_check_branch
      %74 = sbr.rel (0) target = $region29
    $region28: #{tpu_custom_call.1} parent=1 // pred_region
      %75 = dma.done [#allocation8], 2048
    $region29: #{tpu_custom_call.1} parent=1 // pred_fallthru
      _
    // Predicated region
    $region30: #{tpu_custom_call.1} parent=1 // pred_check
      _
    $region31: #{tpu_custom_call.1} parent=1 // pred_check_branch
      %77 = sbr.rel (0) target = $region33
    $region32: #{tpu_custom_call.1} parent=1 // pred_region
      %78 = dma.done [#allocation8], 16
    $region33: #{tpu_custom_call.1} parent=1 // pred_fallthru
      _
    // Predicated region
    $region34: #{tpu_custom_call.1} parent=1 // pred_check
      _
    $region35: #{tpu_custom_call.1} parent=1 // pred_check_branch
      %80 = sbr.rel (0) target = $region37
    $region36: #{tpu_custom_call.1} parent=1 // pred_region
      %81 = dma.done [#allocation11], 51200
    $region37: #{tpu_custom_call.1} parent=1 // pred_fallthru
      _
    // Predicated region
    $region38: #{tpu_custom_call.1} parent=1 // pred_check
      _
    $region39: #{tpu_custom_call.1} parent=1 // pred_check_branch
      %83 = sbr.rel (0) target = $region41
    $region40: #{tpu_custom_call.1} parent=1 // pred_region
      %84 = dma.done [#allocation11], 16
    $region41: #{tpu_custom_call.1} parent=1 // pred_fallthru
      _
    %v85 = vld [vmem:[#allocation4] sm:$0xff]
    %v86 = vld [vmem:[#allocation4 + $0x8] sm:$0xff]
    %v87 = vld [vmem:[#allocation4 + $0x10] sm:$0xff]
    %v88 = vld [vmem:[#allocation4 + $0x18] sm:$0xff]
    %v89 = vld [vmem:[#allocation4 + $0x20] sm:$0xff]
    %v90 = vld [vmem:[#allocation4 + $0x28] sm:$0xff]
    %v91 = vld [vmem:[#allocation4 + $0x30] sm:$0xff]
    %v92 = vld [vmem:[#allocation4 + $0x38] sm:$0xff]
    %v93 = vld [vmem:[#allocation4 + $0x40] sm:$0xff]
    %v94 = vld [vmem:[#allocation4 + $0x48] sm:$0xff]
    %v95 = vld [vmem:[#allocation4 + $0x50] sm:$0xff]
    %v96 = vld [vmem:[#allocation4 + $0x58] sm:$0xff]
    %v97 = vld [vmem:[#allocation4 + $0x60] sm:$0xff]
    %v98 = vld [vmem:[#allocation4 + $0x68] sm:$0xff]
    %v99 = vld [vmem:[#allocation4 + $0x70] sm:$0xff]
    %v100 = vld [vmem:[#allocation4 + $0x78] sm:$0xff]
    %v101 = vld [vmem:[#allocation4 + $0x80] sm:$0xff]
    %v102 = vld [vmem:[#allocation4 + $0x88] sm:$0xff]
    %v103 = vld [vmem:[#allocation4 + $0x90] sm:$0xff]
    %v104 = vld [vmem:[#allocation4 + $0x98] sm:$0xff]
    %v105 = vld [vmem:[#allocation4 + $0xa0] sm:$0xff]
    %v106 = vld [vmem:[#allocation4 + $0xa8] sm:$0xff]
    %v107 = vld [vmem:[#allocation4 + $0xb0] sm:$0xff]
    %v108 = vld [vmem:[#allocation4 + $0xb8] sm:$0xff]
    %v109 = vld [vmem:[#allocation4 + $0xc0] sm:$0xff]
    %v110 = vld [vmem:[#allocation4 + $0xc8] sm:$0xff]
    %v111 = vld [vmem:[#allocation4 + $0xd0] sm:$0xff]
    %v112 = vld [vmem:[#allocation4 + $0xd8] sm:$0xff]
    %v113 = vld [vmem:[#allocation4 + $0xe0] sm:$0xff]
    %v114 = vld [vmem:[#allocation4 + $0xe8] sm:$0xff]
    %v115 = vld [vmem:[#allocation4 + $0xf0] sm:$0xff]
    %v116 = vld [vmem:[#allocation4 + $0xf8] sm:$0xff]
    %v117 = vld [vmem:[#allocation4 + $0x100] sm:$0xff]
    %v118 = vld [vmem:[#allocation4 + $0x108] sm:$0xff]
    %v119 = vld [vmem:[#allocation4 + $0x110] sm:$0xff]
    %v120 = vld [vmem:[#allocation4 + $0x118] sm:$0xff]
    %v121 = vld [vmem:[#allocation7] sm:$0xff]
    %v122 = vld [vmem:[#allocation7 + $0x8] sm:$0xff]
    %v123 = vld [vmem:[#allocation7 + $0x10] sm:$0xff]
    %v124 = vld [vmem:[#allocation7 + $0x18] sm:$0xff]
    %v125 = vld [vmem:[#allocation7 + $0x20] sm:$0xff]
    %v126 = vld [vmem:[#allocation7 + $0x28] sm:$0xff]
    %v127 = vld [vmem:[#allocation7 + $0x30] sm:$0xff]
    %v128 = vld [vmem:[#allocation7 + $0x38] sm:$0xff]
    %v129 = vld [vmem:[#allocation7 + $0x40] sm:$0xff]
    %v130 = vld [vmem:[#allocation7 + $0x48] sm:$0xff]
    %v131 = vld [vmem:[#allocation7 + $0x50] sm:$0xff]
    %v132 = vld [vmem:[#allocation7 + $0x58] sm:$0xff]
    %v133 = vld [vmem:[#allocation7 + $0x60] sm:$0xff]
    %v134 = vld [vmem:[#allocation7 + $0x68] sm:$0xff]
    %v135 = vld [vmem:[#allocation7 + $0x70] sm:$0xff]
    %v136 = vld [vmem:[#allocation7 + $0x78] sm:$0xff]
    %v137 = vld [vmem:[#allocation9] sm:$0x1]
    %v139 = vlaneseq
    %v140 = vshrl.u32 %v139, 7
    %v141 = vsub.s32 0, %v140
    %v142 = vrot.slane %v137, %v141
    %144 = vmatprep.subr.mxu0 0.0
    %145 = vmatpush1.msra.mxu0 %v121
    %146 = vmatprep.subr.mxu0 0.0
    %147 = vmatpush1.msra.mxu0 %v122
    %148 = vmatprep.subr.mxu0 0.0
    %149 = vmatpush1.msra.mxu0 %v123
    %150 = vmatprep.subr.mxu0 0.0
    %151 = vmatpush1.msra.mxu0 %v124
    %152 = vmatprep.subr.mxu0 0.0
    %153 = vmatpush1.msra.mxu0 %v125
    %154 = vmatprep.subr.mxu0 0.0
    %155 = vmatpush1.msra.mxu0 %v126
    %156 = vmatprep.subr.mxu0 0.0
    %157 = vmatpush1.msra.mxu0 %v127
    %158 = vmatprep.subr.mxu0 0.0
    %159 = vmatpush1.msra.mxu0 %v128
    %160 = vmatprep.subr.mxu0 0.0
    %161 = vmatpush1.msra.mxu0 %v129
    %162 = vmatprep.subr.mxu0 0.0
    %163 = vmatpush1.msra.mxu0 %v130
    %164 = vmatprep.subr.mxu0 0.0
    %165 = vmatpush1.msra.mxu0 %v131
    %166 = vmatprep.subr.mxu0 0.0
    %167 = vmatpush1.msra.mxu0 %v132
    %168 = vmatprep.subr.mxu0 0.0
    %169 = vmatpush1.msra.mxu0 %v133
    %170 = vmatprep.subr.mxu0 0.0
    %171 = vmatpush1.msra.mxu0 %v134
    %172 = vmatprep.subr.mxu0 0.0
    %173 = vmatpush1.msra.mxu0 %v135
    %174 = vmatprep.subr.mxu0 0.0
    %175 = vmatpush1.msra.mxu0 %v136
    %176 = vmatprep.subr.mxu0 0.0
    %177 = vmatpush1.msra.mxu0 0.0
    %178 = vmatprep.subr.mxu0 0.0
    %179 = vmatpush1.msra.mxu0 0.0
    %180 = vmatprep.subr.mxu0 0.0
    %181 = vmatpush1.msra.mxu0 0.0
    %182 = vmatprep.subr.mxu0 0.0
    %183 = vmatpush1.msra.mxu0 0.0
    %184 = vmatprep.subr.mxu0 0.0
    %185 = vmatpush1.msra.mxu0 0.0
    %186 = vmatprep.subr.mxu0 0.0
    %187 = vmatpush1.msra.mxu0 0.0
    %188 = vmatprep.subr.mxu0 0.0
    %189 = vmatpush1.msra.mxu0 0.0
    %190 = vmatprep.subr.mxu0 0.0
    %191 = vmatpush1.msra.mxu0 0.0
    %192 = vmatprep.subr.mxu0 0.0
    %193 = vmatpush1.msra.mxu0 0.0
    %194 = vmatprep.subr.mxu0 0.0
    %195 = vmatpush1.msra.mxu0 0.0
    %196 = vmatprep.subr.mxu0 0.0
    %197 = vmatpush1.msra.mxu0 0.0
    %198 = vmatprep.subr.mxu0 0.0
    %199 = vmatpush1.msra.mxu0 0.0
    %200 = vmatprep.subr.mxu0 0.0
    %201 = vmatpush1.msra.mxu0 0.0
    %202 = vmatprep.subr.mxu0 0.0
    %203 = vmatpush1.msra.mxu0 0.0
    %204 = vmatprep.subr.mxu0 0.0
    %205 = vmatpush1.msra.mxu0 0.0
    %206 = vmatprep.subr.mxu0 0.0
    %207 = vmatpush1.msra.mxu0 0.0
    %208 = vmatprep.mubr.f32.mxu0 0.0
    %209 = vmatmul.mubr.f32.gmra.mrb[0].mxu0 %v85
    %v210 = vpop.f32.mrb[0].mxu0
    %v211 = vadd.f32 %v142, %v210
    %v212 = vpop.f32.mrb[0].mxu0
    %213 = vmatprep.mubr.f32.mxu0 0.0
    %214 = vmatmul.mubr.f32.gmra.mrb[0].mxu0 %v86
    %v215 = vpop.f32.mrb[0].mxu0
    %v216 = vadd.f32 %v142, %v215
    %v217 = vpop.f32.mrb[0].mxu0
    %218 = vmatprep.mubr.f32.mxu0 0.0
    %219 = vmatmul.mubr.f32.gmra.mrb[0].mxu0 %v87
    %v220 = vpop.f32.mrb[0].mxu0
    %v221 = vadd.f32 %v142, %v220
    %v222 = vpop.f32.mrb[0].mxu0
    %223 = vmatprep.mubr.f32.mxu0 0.0
    %224 = vmatmul.mubr.f32.gmra.mrb[0].mxu0 %v88
    %v225 = vpop.f32.mrb[0].mxu0
    %v226 = vadd.f32 %v142, %v225
    %v227 = vpop.f32.mrb[0].mxu0
    %228 = vmatprep.mubr.f32.mxu0 0.0
    %229 = vmatmul.mubr.f32.gmra.mrb[0].mxu0 %v89
    %v230 = vpop.f32.mrb[0].mxu0
    %v231 = vadd.f32 %v142, %v230
    %v232 = vpop.f32.mrb[0].mxu0
    %233 = vmatprep.mubr.f32.mxu0 0.0
    %234 = vmatmul.mubr.f32.gmra.mrb[0].mxu0 %v90
    %v235 = vpop.f32.mrb[0].mxu0
    %v236 = vadd.f32 %v142, %v235
    %v237 = vpop.f32.mrb[0].mxu0
    %238 = vmatprep.mubr.f32.mxu0 0.0
    %239 = vmatmul.mubr.f32.gmra.mrb[0].mxu0 %v91
    %v240 = vpop.f32.mrb[0].mxu0
    %v241 = vadd.f32 %v142, %v240
    %v242 = vpop.f32.mrb[0].mxu0
    %243 = vmatprep.mubr.f32.mxu0 0.0
    %244 = vmatmul.mubr.f32.gmra.mrb[0].mxu0 %v92
    %v245 = vpop.f32.mrb[0].mxu0
    %v246 = vadd.f32 %v142, %v245
    %v247 = vpop.f32.mrb[0].mxu0
    %248 = vmatprep.mubr.f32.mxu0 0.0
    %249 = vmatmul.mubr.f32.gmra.mrb[0].mxu0 %v93
    %v250 = vpop.f32.mrb[0].mxu0
    %v251 = vadd.f32 %v142, %v250
    %v252 = vpop.f32.mrb[0].mxu0
    %253 = vmatprep.mubr.f32.mxu0 0.0
    %254 = vmatmul.mubr.f32.gmra.mrb[0].mxu0 %v94
    %v255 = vpop.f32.mrb[0].mxu0
    %v256 = vadd.f32 %v142, %v255
    %v257 = vpop.f32.mrb[0].mxu0
    %258 = vmatprep.mubr.f32.mxu0 0.0
    %259 = vmatmul.mubr.f32.gmra.mrb[0].mxu0 %v95
    %v260 = vpop.f32.mrb[0].mxu0
    %v261 = vadd.f32 %v142, %v260
    %v262 = vpop.f32.mrb[0].mxu0
    %263 = vmatprep.mubr.f32.mxu0 0.0
    %264 = vmatmul.mubr.f32.gmra.mrb[0].mxu0 %v96
    %v265 = vpop.f32.mrb[0].mxu0
    %v266 = vadd.f32 %v142, %v265
    %v267 = vpop.f32.mrb[0].mxu0
    %268 = vmatprep.mubr.f32.mxu0 0.0
    %269 = vmatmul.mubr.f32.gmra.mrb[0].mxu0 %v97
    %v270 = vpop.f32.mrb[0].mxu0
    %v271 = vadd.f32 %v142, %v270
    %v272 = vpop.f32.mrb[0].mxu0
    %273 = vmatprep.mubr.f32.mxu0 0.0
    %274 = vmatmul.mubr.f32.gmra.mrb[0].mxu0 %v98
    %v275 = vpop.f32.mrb[0].mxu0
    %v276 = vadd.f32 %v142, %v275
    %v277 = vpop.f32.mrb[0].mxu0
    %278 = vmatprep.mubr.f32.mxu0 0.0
    %279 = vmatmul.mubr.f32.gmra.mrb[0].mxu0 %v99
    %v280 = vpop.f32.mrb[0].mxu0
    %v281 = vadd.f32 %v142, %v280
    %v282 = vpop.f32.mrb[0].mxu0
    %283 = vmatprep.mubr.f32.mxu0 0.0
    %284 = vmatmul.mubr.f32.gmra.mrb[0].mxu0 %v100
    %v285 = vpop.f32.mrb[0].mxu0
    %v286 = vadd.f32 %v142, %v285
    %v287 = vpop.f32.mrb[0].mxu0
    %288 = vmatprep.mubr.f32.mxu0 0.0
    %289 = vmatmul.mubr.f32.gmra.mrb[0].mxu0 %v101
    %v290 = vpop.f32.mrb[0].mxu0
    %v291 = vadd.f32 %v142, %v290
    %v292 = vpop.f32.mrb[0].mxu0
    %293 = vmatprep.mubr.f32.mxu0 0.0
    %294 = vmatmul.mubr.f32.gmra.mrb[0].mxu0 %v102
    %v295 = vpop.f32.mrb[0].mxu0
    %v296 = vadd.f32 %v142, %v295
    %v297 = vpop.f32.mrb[0].mxu0
    %298 = vmatprep.mubr.f32.mxu0 0.0
    %299 = vmatmul.mubr.f32.gmra.mrb[0].mxu0 %v103
    %v300 = vpop.f32.mrb[0].mxu0
    %v301 = vadd.f32 %v142, %v300
    %v302 = vpop.f32.mrb[0].mxu0
    %303 = vmatprep.mubr.f32.mxu0 0.0
    %304 = vmatmul.mubr.f32.gmra.mrb[0].mxu0 %v104
    %v305 = vpop.f32.mrb[0].mxu0
    %v306 = vadd.f32 %v142, %v305
    %v307 = vpop.f32.mrb[0].mxu0
    %308 = vmatprep.mubr.f32.mxu0 0.0
    %309 = vmatmul.mubr.f32.gmra.mrb[0].mxu0 %v105
    %v310 = vpop.f32.mrb[0].mxu0
    %v311 = vadd.f32 %v142, %v310
    %v312 = vpop.f32.mrb[0].mxu0
    %313 = vmatprep.mubr.f32.mxu0 0.0
    %314 = vmatmul.mubr.f32.gmra.mrb[0].mxu0 %v106
    %v315 = vpop.f32.mrb[0].mxu0
    %v316 = vadd.f32 %v142, %v315
    %v317 = vpop.f32.mrb[0].mxu0
    %318 = vmatprep.mubr.f32.mxu0 0.0
    %319 = vmatmul.mubr.f32.gmra.mrb[0].mxu0 %v107
    %v320 = vpop.f32.mrb[0].mxu0
    %v321 = vadd.f32 %v142, %v320
    %v322 = vpop.f32.mrb[0].mxu0
    %323 = vmatprep.mubr.f32.mxu0 0.0
    %324 = vmatmul.mubr.f32.gmra.mrb[0].mxu0 %v108
    %v325 = vpop.f32.mrb[0].mxu0
    %v326 = vadd.f32 %v142, %v325
    %v327 = vpop.f32.mrb[0].mxu0
    %328 = vmatprep.mubr.f32.mxu0 0.0
    %329 = vmatmul.mubr.f32.gmra.mrb[0].mxu0 %v109
    %v330 = vpop.f32.mrb[0].mxu0
    %v331 = vadd.f32 %v142, %v330
    %v332 = vpop.f32.mrb[0].mxu0
    %333 = vmatprep.mubr.f32.mxu0 0.0
    %334 = vmatmul.mubr.f32.gmra.mrb[0].mxu0 %v110
    %v335 = vpop.f32.mrb[0].mxu0
    %v336 = vadd.f32 %v142, %v335
    %v337 = vpop.f32.mrb[0].mxu0
    %338 = vmatprep.mubr.f32.mxu0 0.0
    %339 = vmatmul.mubr.f32.gmra.mrb[0].mxu0 %v111
    %v340 = vpop.f32.mrb[0].mxu0
    %v341 = vadd.f32 %v142, %v340
    %v342 = vpop.f32.mrb[0].mxu0
    %343 = vmatprep.mubr.f32.mxu0 0.0
    %344 = vmatmul.mubr.f32.gmra.mrb[0].mxu0 %v112
    %v345 = vpop.f32.mrb[0].mxu0
    %v346 = vadd.f32 %v142, %v345
    %v347 = vpop.f32.mrb[0].mxu0
    %348 = vmatprep.mubr.f32.mxu0 0.0
    %349 = vmatmul.mubr.f32.gmra.mrb[0].mxu0 %v113
    %v350 = vpop.f32.mrb[0].mxu0
    %v351 = vadd.f32 %v142, %v350
    %v352 = vpop.f32.mrb[0].mxu0
    %353 = vmatprep.mubr.f32.mxu0 0.0
    %354 = vmatmul.mubr.f32.gmra.mrb[0].mxu0 %v114
    %v355 = vpop.f32.mrb[0].mxu0
    %v356 = vadd.f32 %v142, %v355
    %v357 = vpop.f32.mrb[0].mxu0
    %358 = vmatprep.mubr.f32.mxu0 0.0
    %359 = vmatmul.mubr.f32.gmra.mrb[0].mxu0 %v115
    %v360 = vpop.f32.mrb[0].mxu0
    %v361 = vadd.f32 %v142, %v360
    %v362 = vpop.f32.mrb[0].mxu0
    %363 = vmatprep.mubr.f32.mxu0 0.0
    %364 = vmatmul.mubr.f32.gmra.mrb[0].mxu0 %v116
    %v365 = vpop.f32.mrb[0].mxu0
    %v366 = vadd.f32 %v142, %v365
    %v367 = vpop.f32.mrb[0].mxu0
    %368 = vmatprep.mubr.f32.mxu0 0.0
    %369 = vmatmul.mubr.f32.gmra.mrb[0].mxu0 %v117
    %v370 = vpop.f32.mrb[0].mxu0
    %v371 = vadd.f32 %v142, %v370
    %v372 = vpop.f32.mrb[0].mxu0
    %373 = vmatprep.mubr.f32.mxu0 0.0
    %374 = vmatmul.mubr.f32.gmra.mrb[0].mxu0 %v118
    %v375 = vpop.f32.mrb[0].mxu0
    %v376 = vadd.f32 %v142, %v375
    %v377 = vpop.f32.mrb[0].mxu0
    %378 = vmatprep.mubr.f32.mxu0 0.0
    %379 = vmatmul.mubr.f32.gmra.mrb[0].mxu0 %v119
    %v380 = vpop.f32.mrb[0].mxu0
    %v381 = vadd.f32 %v142, %v380
    %v382 = vpop.f32.mrb[0].mxu0
    %383 = vmatprep.mubr.f32.mxu0 0.0
    %384 = vmatmul.mubr.f32.gmra.mrb[0].mxu0 %v120
    %v385 = vpop.f32.mrb[0].mxu0
    %v386 = vadd.f32 %v142, %v385
    %v387 = vpop.f32.mrb[0].mxu0
    %388 = vdwg.mxu0
    %v389 = vmax.f32 %v211, 0.0
    %v390 = vmax.f32 %v216, 0.0
    %v391 = vmax.f32 %v221, 0.0
    %v392 = vmax.f32 %v226, 0.0
    %v393 = vmax.f32 %v231, 0.0
    %v394 = vmax.f32 %v236, 0.0
    %v395 = vmax.f32 %v241, 0.0
    %v396 = vmax.f32 %v246, 0.0
    %v397 = vmax.f32 %v251, 0.0
    %v398 = vmax.f32 %v256, 0.0
    %v399 = vmax.f32 %v261, 0.0
    %v400 = vmax.f32 %v266, 0.0
    %v401 = vmax.f32 %v271, 0.0
    %v402 = vmax.f32 %v276, 0.0
    %v403 = vmax.f32 %v281, 0.0
    %v404 = vmax.f32 %v286, 0.0
    %v405 = vmax.f32 %v291, 0.0
    %v406 = vmax.f32 %v296, 0.0
    %v407 = vmax.f32 %v301, 0.0
    %v408 = vmax.f32 %v306, 0.0
    %v409 = vmax.f32 %v311, 0.0
    %v410 = vmax.f32 %v316, 0.0
    %v411 = vmax.f32 %v321, 0.0
    %v412 = vmax.f32 %v326, 0.0
    %v413 = vmax.f32 %v331, 0.0
    %v414 = vmax.f32 %v336, 0.0
    %v415 = vmax.f32 %v341, 0.0
    %v416 = vmax.f32 %v346, 0.0
    %v417 = vmax.f32 %v351, 0.0
    %v418 = vmax.f32 %v356, 0.0
    %v419 = vmax.f32 %v361, 0.0
    %v420 = vmax.f32 %v366, 0.0
    %v421 = vmax.f32 %v371, 0.0
    %v422 = vmax.f32 %v376, 0.0
    %v423 = vmax.f32 %v381, 0.0
    %v424 = vmax.f32 %v386, 0.0
    %v461 = vcombine.high %v389, %v389
    %v462 = vcombine.high %v390, %v390
    %v463 = vcombine.high %v391, %v391
    %v464 = vcombine.high %v392, %v392
    %v465 = vcombine.high %v393, %v393
    %v466 = vcombine.high %v394, %v394
    %v467 = vcombine.high %v395, %v395
    %v468 = vcombine.high %v396, %v396
    %v469 = vcombine.high %v397, %v397
    %v470 = vcombine.high %v398, %v398
    %v471 = vcombine.high %v399, %v399
    %v472 = vcombine.high %v400, %v400
    %v473 = vcombine.high %v401, %v401
    %v474 = vcombine.high %v402, %v402
    %v475 = vcombine.high %v403, %v403
    %v476 = vcombine.high %v404, %v404
    %v477 = vcombine.high %v405, %v405
    %v478 = vcombine.high %v406, %v406
    %v479 = vcombine.high %v407, %v407
    %v480 = vcombine.high %v408, %v408
    %v481 = vcombine.high %v409, %v409
    %v482 = vcombine.high %v410, %v410
    %v483 = vcombine.high %v411, %v411
    %v484 = vcombine.high %v412, %v412
    %v485 = vcombine.high %v413, %v413
    %v486 = vcombine.high %v414, %v414
    %v487 = vcombine.high %v415, %v415
    %v488 = vcombine.high %v416, %v416
    %v489 = vcombine.high %v417, %v417
    %v490 = vcombine.high %v418, %v418
    %v491 = vcombine.high %v419, %v419
    %v492 = vcombine.high %v420, %v420
    %v493 = vcombine.high %v421, %v421
    %v494 = vcombine.high %v422, %v422
    %v495 = vcombine.high %v423, %v423
    %v496 = vcombine.high %v424, %v424
    %v509 = vcombine.low %v389, %v461
    %v510 = vcombine.low %v462, %v391
    %v511 = vcombine.low %v392, %v464
    %v512 = vcombine.low %v465, %v394
    %v513 = vcombine.low %v395, %v467
    %v514 = vcombine.low %v468, %v397
    %v515 = vcombine.low %v398, %v470
    %v516 = vcombine.low %v471, %v400
    %v517 = vcombine.low %v401, %v473
    %v518 = vcombine.low %v474, %v403
    %v519 = vcombine.low %v404, %v476
    %v520 = vcombine.low %v477, %v406
    %v521 = vcombine.low %v407, %v479
    %v522 = vcombine.low %v480, %v409
    %v523 = vcombine.low %v410, %v482
    %v524 = vcombine.low %v483, %v412
    %v525 = vcombine.low %v413, %v485
    %v526 = vcombine.low %v486, %v415
    %v527 = vcombine.low %v416, %v488
    %v528 = vcombine.low %v489, %v418
    %v529 = vcombine.low %v419, %v491
    %v530 = vcombine.low %v492, %v421
    %v531 = vcombine.low %v422, %v494
    %v532 = vcombine.low %v495, %v424
    %557 = vst [vmem:[#allocation2] sm:$0xff] %v509
    %558 = vst [vmem:[#allocation2 + $0x8] sm:$0xf] %v390
    %559 = vst [vmem:[#allocation2 + $0x10] sm:$0xff] %v510
    %560 = vst [vmem:[#allocation2 + $0x18] sm:$0xf] %v463
    %561 = vst [vmem:[#allocation2 + $0x20] sm:$0xff] %v511
    %562 = vst [vmem:[#allocation2 + $0x28] sm:$0xf] %v393
    %563 = vst [vmem:[#allocation2 + $0x30] sm:$0xff] %v512
    %564 = vst [vmem:[#allocation2 + $0x38] sm:$0xf] %v466
    %565 = vst [vmem:[#allocation2 + $0x40] sm:$0xff] %v513
    %566 = vst [vmem:[#allocation2 + $0x48] sm:$0xf] %v396
    %567 = vst [vmem:[#allocation2 + $0x50] sm:$0xff] %v514
    %568 = vst [vmem:[#allocation2 + $0x58] sm:$0xf] %v469
    %569 = vst [vmem:[#allocation2 + $0x60] sm:$0xff] %v515
    %570 = vst [vmem:[#allocation2 + $0x68] sm:$0xf] %v399
    %571 = vst [vmem:[#allocation2 + $0x70] sm:$0xff] %v516
    %572 = vst [vmem:[#allocation2 + $0x78] sm:$0xf] %v472
    %573 = vst [vmem:[#allocation2 + $0x80] sm:$0xff] %v517
    %574 = vst [vmem:[#allocation2 + $0x88] sm:$0xf] %v402
    %575 = vst [vmem:[#allocation2 + $0x90] sm:$0xff] %v518
    %576 = vst [vmem:[#allocation2 + $0x98] sm:$0xf] %v475
    %577 = vst [vmem:[#allocation2 + $0xa0] sm:$0xff] %v519
    %578 = vst [vmem:[#allocation2 + $0xa8] sm:$0xf] %v405
    %579 = vst [vmem:[#allocation2 + $0xb0] sm:$0xff] %v520
    %580 = vst [vmem:[#allocation2 + $0xb8] sm:$0xf] %v478
    %581 = vst [vmem:[#allocation2 + $0xc0] sm:$0xff] %v521
    %582 = vst [vmem:[#allocation2 + $0xc8] sm:$0xf] %v408
    %583 = vst [vmem:[#allocation2 + $0xd0] sm:$0xff] %v522
    %584 = vst [vmem:[#allocation2 + $0xd8] sm:$0xf] %v481
    %585 = vst [vmem:[#allocation2 + $0xe0] sm:$0xff] %v523
    %586 = vst [vmem:[#allocation2 + $0xe8] sm:$0xf] %v411
    %587 = vst [vmem:[#allocation2 + $0xf0] sm:$0xff] %v524
    %588 = vst [vmem:[#allocation2 + $0xf8] sm:$0xf] %v484
    %589 = vst [vmem:[#allocation2 + $0x100] sm:$0xff] %v525
    %590 = vst [vmem:[#allocation2 + $0x108] sm:$0xf] %v414
    %591 = vst [vmem:[#allocation2 + $0x110] sm:$0xff] %v526
    %592 = vst [vmem:[#allocation2 + $0x118] sm:$0xf] %v487
    %593 = vst [vmem:[#allocation2 + $0x120] sm:$0xff] %v527
    %594 = vst [vmem:[#allocation2 + $0x128] sm:$0xf] %v417
    %595 = vst [vmem:[#allocation2 + $0x130] sm:$0xff] %v528
    %596 = vst [vmem:[#allocation2 + $0x138] sm:$0xf] %v490
    %597 = vst [vmem:[#allocation2 + $0x140] sm:$0xff] %v529
    %598 = vst [vmem:[#allocation2 + $0x148] sm:$0xf] %v420
    %599 = vst [vmem:[#allocation2 + $0x150] sm:$0xff] %v530
    %600 = vst [vmem:[#allocation2 + $0x158] sm:$0xf] %v493
    %601 = vst [vmem:[#allocation2 + $0x160] sm:$0xff] %v531
    %602 = vst [vmem:[#allocation2 + $0x168] sm:$0xf] %v423
    %603 = vst [vmem:[#allocation2 + $0x170] sm:$0xff] %v532
    %604 = vst [vmem:[#allocation2 + $0x178] sm:$0xf] %v496
    %v605 = vld [vmem:[#allocation2] sm:$0xff]
    %v606 = vld [vmem:[#allocation2 + $0x10] sm:$0xff]
    %v607 = vld [vmem:[#allocation2 + $0x20] sm:$0xff]
    %v608 = vld [vmem:[#allocation2 + $0x30] sm:$0xff]
    %v609 = vld [vmem:[#allocation2 + $0x40] sm:$0xff]
    %v610 = vld [vmem:[#allocation2 + $0x50] sm:$0xff]
    %v611 = vld [vmem:[#allocation2 + $0x60] sm:$0xff]
    %v612 = vld [vmem:[#allocation2 + $0x70] sm:$0xff]
    %v613 = vld [vmem:[#allocation2 + $0xc0] sm:$0xff]
    %v614 = vld [vmem:[#allocation2 + $0xd0] sm:$0xff]
    %v615 = vld [vmem:[#allocation2 + $0xe0] sm:$0xff]
    %v616 = vld [vmem:[#allocation2 + $0xf0] sm:$0xff]
    %v617 = vld [vmem:[#allocation2 + $0x100] sm:$0xff]
    %v618 = vld [vmem:[#allocation2 + $0x110] sm:$0xff]
    %v619 = vld [vmem:[#allocation2 + $0x120] sm:$0xff]
    %v620 = vld [vmem:[#allocation2 + $0x130] sm:$0xff]
    %621 = vst [vmem:[#allocation3] sm:$0xff] %v605
    %622 = vst [vmem:[#allocation3 + $0xc8] sm:$0xff] %v606
    %623 = vst [vmem:[#allocation3 + $0x190] sm:$0xff] %v607
    %624 = vst [vmem:[#allocation3 + $0x258] sm:$0xff] %v608
    %625 = vst [vmem:[#allocation3 + $0x320] sm:$0xff] %v609
    %626 = vst [vmem:[#allocation3 + $0x3e8] sm:$0xff] %v610
    %627 = vst [vmem:[#allocation3 + $0x4b0] sm:$0xff] %v611
    %628 = vst [vmem:[#allocation3 + $0x578] sm:$0xff] %v612
    %629 = vst [vmem:[#allocation3 + $0x640] sm:$0xff] %v613
    %630 = vst [vmem:[#allocation3 + $0x708] sm:$0xff] %v614
    %631 = vst [vmem:[#allocation3 + $0x7d0] sm:$0xff] %v615
    %632 = vst [vmem:[#allocation3 + $0x898] sm:$0xff] %v616
    %633 = vst [vmem:[#allocation3 + $0x960] sm:$0xff] %v617
    %634 = vst [vmem:[#allocation3 + $0xa28] sm:$0xff] %v618
    %635 = vst [vmem:[#allocation3 + $0xaf0] sm:$0xff] %v619
    %636 = vst [vmem:[#allocation3 + $0xbb8] sm:$0xff] %v620
    %v637 = vld [vmem:[#allocation2 + $0x1] sm:$0xff]
    %v638 = vld [vmem:[#allocation2 + $0x11] sm:$0xff]
    %v639 = vld [vmem:[#allocation2 + $0x21] sm:$0xff]
    %v640 = vld [vmem:[#allocation2 + $0x31] sm:$0xff]
    %v641 = vld [vmem:[#allocation2 + $0x41] sm:$0xff]
    %v642 = vld [vmem:[#allocation2 + $0x51] sm:$0xff]
    %v643 = vld [vmem:[#allocation2 + $0x61] sm:$0xff]
    %v644 = vld [vmem:[#allocation2 + $0x71] sm:$0xff]
    %v645 = vld [vmem:[#allocation2 + $0xc1] sm:$0xff]
    %v646 = vld [vmem:[#allocation2 + $0xd1] sm:$0xff]
    %v647 = vld [vmem:[#allocation2 + $0xe1] sm:$0xff]
    %v648 = vld [vmem:[#allocation2 + $0xf1] sm:$0xff]
    %v649 = vld [vmem:[#allocation2 + $0x101] sm:$0xff]
    %v650 = vld [vmem:[#allocation2 + $0x111] sm:$0xff]
    %v651 = vld [vmem:[#allocation2 + $0x121] sm:$0xff]
    %v652 = vld [vmem:[#allocation2 + $0x131] sm:$0xff]
    %653 = vst [vmem:[#allocation3 + $0x8] sm:$0xff] %v637
    %654 = vst [vmem:[#allocation3 + $0xd0] sm:$0xff] %v638
    %655 = vst [vmem:[#allocation3 + $0x198] sm:$0xff] %v639
    %656 = vst [vmem:[#allocation3 + $0x260] sm:$0xff] %v640
    %657 = vst [vmem:[#allocation3 + $0x328] sm:$0xff] %v641
    %658 = vst [vmem:[#allocation3 + $0x3f0] sm:$0xff] %v642
    %659 = vst [vmem:[#allocation3 + $0x4b8] sm:$0xff] %v643
    %660 = vst [vmem:[#allocation3 + $0x580] sm:$0xff] %v644
    %661 = vst [vmem:[#allocation3 + $0x648] sm:$0xff] %v645
    %662 = vst [vmem:[#allocation3 + $0x710] sm:$0xff] %v646
    %663 = vst [vmem:[#allocation3 + $0x7d8] sm:$0xff] %v647
    %664 = vst [vmem:[#allocation3 + $0x8a0] sm:$0xff] %v648
    %665 = vst [vmem:[#allocation3 + $0x968] sm:$0xff] %v649
    %666 = vst [vmem:[#allocation3 + $0xa30] sm:$0xff] %v650
    %667 = vst [vmem:[#allocation3 + $0xaf8] sm:$0xff] %v651
    %668 = vst [vmem:[#allocation3 + $0xbc0] sm:$0xff] %v652
    %v669 = vld [vmem:[#allocation2 + $0x2] sm:$0xff]
    %v670 = vld [vmem:[#allocation2 + $0x12] sm:$0xff]
    %v671 = vld [vmem:[#allocation2 + $0x22] sm:$0xff]
    %v672 = vld [vmem:[#allocation2 + $0x32] sm:$0xff]
    %v673 = vld [vmem:[#allocation2 + $0x42] sm:$0xff]
    %v674 = vld [vmem:[#allocation2 + $0x52] sm:$0xff]
    %v675 = vld [vmem:[#allocation2 + $0x62] sm:$0xff]
    %v676 = vld [vmem:[#allocation2 + $0x72] sm:$0xff]
    %v677 = vld [vmem:[#allocation2 + $0xc2] sm:$0xff]
    %v678 = vld [vmem:[#allocation2 + $0xd2] sm:$0xff]
    %v679 = vld [vmem:[#allocation2 + $0xe2] sm:$0xff]
    %v680 = vld [vmem:[#allocation2 + $0xf2] sm:$0xff]
    %v681 = vld [vmem:[#allocation2 + $0x102] sm:$0xff]
    %v682 = vld [vmem:[#allocation2 + $0x112] sm:$0xff]
    %v683 = vld [vmem:[#allocation2 + $0x122] sm:$0xff]
    %v684 = vld [vmem:[#allocation2 + $0x132] sm:$0xff]
    %685 = vst [vmem:[#allocation3 + $0x10] sm:$0xff] %v669
    %686 = vst [vmem:[#allocation3 + $0xd8] sm:$0xff] %v670
    %687 = vst [vmem:[#allocation3 + $0x1a0] sm:$0xff] %v671
    %688 = vst [vmem:[#allocation3 + $0x268] sm:$0xff] %v672
    %689 = vst [vmem:[#allocation3 + $0x330] sm:$0xff] %v673
    %690 = vst [vmem:[#allocation3 + $0x3f8] sm:$0xff] %v674
    %691 = vst [vmem:[#allocation3 + $0x4c0] sm:$0xff] %v675
    %692 = vst [vmem:[#allocation3 + $0x588] sm:$0xff] %v676
    %693 = vst [vmem:[#allocation3 + $0x650] sm:$0xff] %v677
    %694 = vst [vmem:[#allocation3 + $0x718] sm:$0xff] %v678
    %695 = vst [vmem:[#allocation3 + $0x7e0] sm:$0xff] %v679
    %696 = vst [vmem:[#allocation3 + $0x8a8] sm:$0xff] %v680
    %697 = vst [vmem:[#allocation3 + $0x970] sm:$0xff] %v681
    %698 = vst [vmem:[#allocation3 + $0xa38] sm:$0xff] %v682
    %699 = vst [vmem:[#allocation3 + $0xb00] sm:$0xff] %v683
    %700 = vst [vmem:[#allocation3 + $0xbc8] sm:$0xff] %v684
    %v701 = vld [vmem:[#allocation2 + $0x3] sm:$0xff]
    %v702 = vld [vmem:[#allocation2 + $0x13] sm:$0xff]
    %v703 = vld [vmem:[#allocation2 + $0x23] sm:$0xff]
    %v704 = vld [vmem:[#allocation2 + $0x33] sm:$0xff]
    %v705 = vld [vmem:[#allocation2 + $0x43] sm:$0xff]
    %v706 = vld [vmem:[#allocation2 + $0x53] sm:$0xff]
    %v707 = vld [vmem:[#allocation2 + $0x63] sm:$0xff]
    %v708 = vld [vmem:[#allocation2 + $0x73] sm:$0xff]
    %v709 = vld [vmem:[#allocation2 + $0xc3] sm:$0xff]
    %v710 = vld [vmem:[#allocation2 + $0xd3] sm:$0xff]
    %v711 = vld [vmem:[#allocation2 + $0xe3] sm:$0xff]
    %v712 = vld [vmem:[#allocation2 + $0xf3] sm:$0xff]
    %v713 = vld [vmem:[#allocation2 + $0x103] sm:$0xff]
    %v714 = vld [vmem:[#allocation2 + $0x113] sm:$0xff]
    %v715 = vld [vmem:[#allocation2 + $0x123] sm:$0xff]
    %v716 = vld [vmem:[#allocation2 + $0x133] sm:$0xff]
    %717 = vst [vmem:[#allocation3 + $0x18] sm:$0xff] %v701
    %718 = vst [vmem:[#allocation3 + $0xe0] sm:$0xff] %v702
    %719 = vst [vmem:[#allocation3 + $0x1a8] sm:$0xff] %v703
    %720 = vst [vmem:[#allocation3 + $0x270] sm:$0xff] %v704
    %721 = vst [vmem:[#allocation3 + $0x338] sm:$0xff] %v705
    %722 = vst [vmem:[#allocation3 + $0x400] sm:$0xff] %v706
    %723 = vst [vmem:[#allocation3 + $0x4c8] sm:$0xff] %v707
    %724 = vst [vmem:[#allocation3 + $0x590] sm:$0xff] %v708
    %725 = vst [vmem:[#allocation3 + $0x658] sm:$0xff] %v709
    %726 = vst [vmem:[#allocation3 + $0x720] sm:$0xff] %v710
    %727 = vst [vmem:[#allocation3 + $0x7e8] sm:$0xff] %v711
    %728 = vst [vmem:[#allocation3 + $0x8b0] sm:$0xff] %v712
    %729 = vst [vmem:[#allocation3 + $0x978] sm:$0xff] %v713
    %730 = vst [vmem:[#allocation3 + $0xa40] sm:$0xff] %v714
    %731 = vst [vmem:[#allocation3 + $0xb08] sm:$0xff] %v715
    %732 = vst [vmem:[#allocation3 + $0xbd0] sm:$0xff] %v716
    %v733 = vld [vmem:[#allocation2 + $0x4] sm:$0xff]
    %v734 = vld [vmem:[#allocation2 + $0x14] sm:$0xff]
    %v735 = vld [vmem:[#allocation2 + $0x24] sm:$0xff]
    %v736 = vld [vmem:[#allocation2 + $0x34] sm:$0xff]
    %v737 = vld [vmem:[#allocation2 + $0x44] sm:$0xff]
    %v738 = vld [vmem:[#allocation2 + $0x54] sm:$0xff]
    %v739 = vld [vmem:[#allocation2 + $0x64] sm:$0xff]
    %v740 = vld [vmem:[#allocation2 + $0x74] sm:$0xff]
    %v741 = vld [vmem:[#allocation2 + $0xc4] sm:$0xff]
    %v742 = vld [vmem:[#allocation2 + $0xd4] sm:$0xff]
    %v743 = vld [vmem:[#allocation2 + $0xe4] sm:$0xff]
    %v744 = vld [vmem:[#allocation2 + $0xf4] sm:$0xff]
    %v745 = vld [vmem:[#allocation2 + $0x104] sm:$0xff]
    %v746 = vld [vmem:[#allocation2 + $0x114] sm:$0xff]
    %v747 = vld [vmem:[#allocation2 + $0x124] sm:$0xff]
    %v748 = vld [vmem:[#allocation2 + $0x134] sm:$0xff]
    %749 = vst [vmem:[#allocation3 + $0x20] sm:$0xff] %v733
    %750 = vst [vmem:[#allocation3 + $0xe8] sm:$0xff] %v734
    %751 = vst [vmem:[#allocation3 + $0x1b0] sm:$0xff] %v735
    %752 = vst [vmem:[#allocation3 + $0x278] sm:$0xff] %v736
    %753 = vst [vmem:[#allocation3 + $0x340] sm:$0xff] %v737
    %754 = vst [vmem:[#allocation3 + $0x408] sm:$0xff] %v738
    %755 = vst [vmem:[#allocation3 + $0x4d0] sm:$0xff] %v739
    %756 = vst [vmem:[#allocation3 + $0x598] sm:$0xff] %v740
    %757 = vst [vmem:[#allocation3 + $0x660] sm:$0xff] %v741
    %758 = vst [vmem:[#allocation3 + $0x728] sm:$0xff] %v742
    %759 = vst [vmem:[#allocation3 + $0x7f0] sm:$0xff] %v743
    %760 = vst [vmem:[#allocation3 + $0x8b8] sm:$0xff] %v744
    %761 = vst [vmem:[#allocation3 + $0x980] sm:$0xff] %v745
    %762 = vst [vmem:[#allocation3 + $0xa48] sm:$0xff] %v746
    %763 = vst [vmem:[#allocation3 + $0xb10] sm:$0xff] %v747
    %764 = vst [vmem:[#allocation3 + $0xbd8] sm:$0xff] %v748
    %s765 = scalar_lea.vmem [#allocation2], 16
    %v766 = vld [vmem:[%s765] sm:$0xff]
    %v767 = vld [vmem:[%s765 + $0x10] sm:$0xff]
    %v768 = vld [vmem:[%s765 + $0x20] sm:$0xff]
    %v769 = vld [vmem:[%s765 + $0x30] sm:$0xff]
    %v770 = vld [vmem:[%s765 + $0x40] sm:$0xff]
    %v771 = vld [vmem:[%s765 + $0x50] sm:$0xff]
    %v772 = vld [vmem:[%s765 + $0x60] sm:$0xff]
    %v773 = vld [vmem:[%s765 + $0x70] sm:$0xff]
    %v774 = vld [vmem:[%s765 + $0xc0] sm:$0xff]
    %v775 = vld [vmem:[%s765 + $0xd0] sm:$0xff]
    %v776 = vld [vmem:[%s765 + $0xe0] sm:$0xff]
    %v777 = vld [vmem:[%s765 + $0xf0] sm:$0xff]
    %v778 = vld [vmem:[%s765 + $0x100] sm:$0xff]
    %v779 = vld [vmem:[%s765 + $0x110] sm:$0xff]
    %v780 = vld [vmem:[%s765 + $0x120] sm:$0xff]
    %v781 = vld [vmem:[%s765 + $0x130] sm:$0xff]
    %782 = vst [vmem:[#allocation3 + $0x28] sm:$0xff] %v766
    %783 = vst [vmem:[#allocation3 + $0xf0] sm:$0xff] %v767
    %784 = vst [vmem:[#allocation3 + $0x1b8] sm:$0xff] %v768
    %785 = vst [vmem:[#allocation3 + $0x280] sm:$0xff] %v769
    %786 = vst [vmem:[#allocation3 + $0x348] sm:$0xff] %v770
    %787 = vst [vmem:[#allocation3 + $0x410] sm:$0xff] %v771
    %788 = vst [vmem:[#allocation3 + $0x4d8] sm:$0xff] %v772
    %789 = vst [vmem:[#allocation3 + $0x5a0] sm:$0xff] %v773
    %790 = vst [vmem:[#allocation3 + $0x668] sm:$0xff] %v774
    %791 = vst [vmem:[#allocation3 + $0x730] sm:$0xff] %v775
    %792 = vst [vmem:[#allocation3 + $0x7f8] sm:$0xff] %v776
    %793 = vst [vmem:[#allocation3 + $0x8c0] sm:$0xff] %v777
    %794 = vst [vmem:[#allocation3 + $0x988] sm:$0xff] %v778
    %795 = vst [vmem:[#allocation3 + $0xa50] sm:$0xff] %v779
    %796 = vst [vmem:[#allocation3 + $0xb18] sm:$0xff] %v780
    %797 = vst [vmem:[#allocation3 + $0xbe0] sm:$0xff] %v781
    %v798 = vld [vmem:[%s765 + $0x1] sm:$0xff]
    %v799 = vld [vmem:[%s765 + $0x11] sm:$0xff]
    %v800 = vld [vmem:[%s765 + $0x21] sm:$0xff]
    %v801 = vld [vmem:[%s765 + $0x31] sm:$0xff]
    %v802 = vld [vmem:[%s765 + $0x41] sm:$0xff]
    %v803 = vld [vmem:[%s765 + $0x51] sm:$0xff]
    %v804 = vld [vmem:[%s765 + $0x61] sm:$0xff]
    %v805 = vld [vmem:[%s765 + $0x71] sm:$0xff]
    %v806 = vld [vmem:[%s765 + $0xc1] sm:$0xff]
    %v807 = vld [vmem:[%s765 + $0xd1] sm:$0xff]
    %v808 = vld [vmem:[%s765 + $0xe1] sm:$0xff]
    %v809 = vld [vmem:[%s765 + $0xf1] sm:$0xff]
    %v810 = vld [vmem:[%s765 + $0x101] sm:$0xff]
    %v811 = vld [vmem:[%s765 + $0x111] sm:$0xff]
    %v812 = vld [vmem:[%s765 + $0x121] sm:$0xff]
    %v813 = vld [vmem:[%s765 + $0x131] sm:$0xff]
    %814 = vst [vmem:[#allocation3 + $0x30] sm:$0xff] %v798
    %815 = vst [vmem:[#allocation3 + $0xf8] sm:$0xff] %v799
    %816 = vst [vmem:[#allocation3 + $0x1c0] sm:$0xff] %v800
    %817 = vst [vmem:[#allocation3 + $0x288] sm:$0xff] %v801
    %818 = vst [vmem:[#allocation3 + $0x350] sm:$0xff] %v802
    %819 = vst [vmem:[#allocation3 + $0x418] sm:$0xff] %v803
    %820 = vst [vmem:[#allocation3 + $0x4e0] sm:$0xff] %v804
    %821 = vst [vmem:[#allocation3 + $0x5a8] sm:$0xff] %v805
    %822 = vst [vmem:[#allocation3 + $0x670] sm:$0xff] %v806
    %823 = vst [vmem:[#allocation3 + $0x738] sm:$0xff] %v807
    %824 = vst [vmem:[#allocation3 + $0x800] sm:$0xff] %v808
    %825 = vst [vmem:[#allocation3 + $0x8c8] sm:$0xff] %v809
    %826 = vst [vmem:[#allocation3 + $0x990] sm:$0xff] %v810
    %827 = vst [vmem:[#allocation3 + $0xa58] sm:$0xff] %v811
    %828 = vst [vmem:[#allocation3 + $0xb20] sm:$0xff] %v812
    %829 = vst [vmem:[#allocation3 + $0xbe8] sm:$0xff] %v813
    %v830 = vld [vmem:[%s765 + $0x2] sm:$0xff]
    %v831 = vld [vmem:[%s765 + $0x12] sm:$0xff]
    %v832 = vld [vmem:[%s765 + $0x22] sm:$0xff]
    %v833 = vld [vmem:[%s765 + $0x32] sm:$0xff]
    %v834 = vld [vmem:[%s765 + $0x42] sm:$0xff]
    %v835 = vld [vmem:[%s765 + $0x52] sm:$0xff]
    %v836 = vld [vmem:[%s765 + $0x62] sm:$0xff]
    %v837 = vld [vmem:[%s765 + $0x72] sm:$0xff]
    %v838 = vld [vmem:[%s765 + $0xc2] sm:$0xff]
    %v839 = vld [vmem:[%s765 + $0xd2] sm:$0xff]
    %v840 = vld [vmem:[%s765 + $0xe2] sm:$0xff]
    %v841 = vld [vmem:[%s765 + $0xf2] sm:$0xff]
    %v842 = vld [vmem:[%s765 + $0x102] sm:$0xff]
    %v843 = vld [vmem:[%s765 + $0x112] sm:$0xff]
    %v844 = vld [vmem:[%s765 + $0x122] sm:$0xff]
    %v845 = vld [vmem:[%s765 + $0x132] sm:$0xff]
    %846 = vst [vmem:[#allocation3 + $0x38] sm:$0xff] %v830
    %847 = vst [vmem:[#allocation3 + $0x100] sm:$0xff] %v831
    %848 = vst [vmem:[#allocation3 + $0x1c8] sm:$0xff] %v832
    %849 = vst [vmem:[#allocation3 + $0x290] sm:$0xff] %v833
    %850 = vst [vmem:[#allocation3 + $0x358] sm:$0xff] %v834
    %851 = vst [vmem:[#allocation3 + $0x420] sm:$0xff] %v835
    %852 = vst [vmem:[#allocation3 + $0x4e8] sm:$0xff] %v836
    %853 = vst [vmem:[#allocation3 + $0x5b0] sm:$0xff] %v837
    %854 = vst [vmem:[#allocation3 + $0x678] sm:$0xff] %v838
    %855 = vst [vmem:[#allocation3 + $0x740] sm:$0xff] %v839
    %856 = vst [vmem:[#allocation3 + $0x808] sm:$0xff] %v840
    %857 = vst [vmem:[#allocation3 + $0x8d0] sm:$0xff] %v841
    %858 = vst [vmem:[#allocation3 + $0x998] sm:$0xff] %v842
    %859 = vst [vmem:[#allocation3 + $0xa60] sm:$0xff] %v843
    %860 = vst [vmem:[#allocation3 + $0xb28] sm:$0xff] %v844
    %861 = vst [vmem:[#allocation3 + $0xbf0] sm:$0xff] %v845
    %v862 = vld [vmem:[%s765 + $0x3] sm:$0xff]
    %v863 = vld [vmem:[%s765 + $0x13] sm:$0xff]
    %v864 = vld [vmem:[%s765 + $0x23] sm:$0xff]
    %v865 = vld [vmem:[%s765 + $0x33] sm:$0xff]
    %v866 = vld [vmem:[%s765 + $0x43] sm:$0xff]
    %v867 = vld [vmem:[%s765 + $0x53] sm:$0xff]
    %v868 = vld [vmem:[%s765 + $0x63] sm:$0xff]
    %v869 = vld [vmem:[%s765 + $0x73] sm:$0xff]
    %v870 = vld [vmem:[%s765 + $0xc3] sm:$0xff]
    %v871 = vld [vmem:[%s765 + $0xd3] sm:$0xff]
    %v872 = vld [vmem:[%s765 + $0xe3] sm:$0xff]
    %v873 = vld [vmem:[%s765 + $0xf3] sm:$0xff]
    %v874 = vld [vmem:[%s765 + $0x103] sm:$0xff]
    %v875 = vld [vmem:[%s765 + $0x113] sm:$0xff]
    %v876 = vld [vmem:[%s765 + $0x123] sm:$0xff]
    %v877 = vld [vmem:[%s765 + $0x133] sm:$0xff]
    %878 = vst [vmem:[#allocation3 + $0x40] sm:$0xff] %v862
    %879 = vst [vmem:[#allocation3 + $0x108] sm:$0xff] %v863
    %880 = vst [vmem:[#allocation3 + $0x1d0] sm:$0xff] %v864
    %881 = vst [vmem:[#allocation3 + $0x298] sm:$0xff] %v865
    %882 = vst [vmem:[#allocation3 + $0x360] sm:$0xff] %v866
    %883 = vst [vmem:[#allocation3 + $0x428] sm:$0xff] %v867
    %884 = vst [vmem:[#allocation3 + $0x4f0] sm:$0xff] %v868
    %885 = vst [vmem:[#allocation3 + $0x5b8] sm:$0xff] %v869
    %886 = vst [vmem:[#allocation3 + $0x680] sm:$0xff] %v870
    %887 = vst [vmem:[#allocation3 + $0x748] sm:$0xff] %v871
    %888 = vst [vmem:[#allocation3 + $0x810] sm:$0xff] %v872
    %889 = vst [vmem:[#allocation3 + $0x8d8] sm:$0xff] %v873
    %890 = vst [vmem:[#allocation3 + $0x9a0] sm:$0xff] %v874
    %891 = vst [vmem:[#allocation3 + $0xa68] sm:$0xff] %v875
    %892 = vst [vmem:[#allocation3 + $0xb30] sm:$0xff] %v876
    %893 = vst [vmem:[#allocation3 + $0xbf8] sm:$0xff] %v877
    %v894 = vld [vmem:[%s765 + $0x4] sm:$0xff]
    %v895 = vld [vmem:[%s765 + $0x14] sm:$0xff]
    %v896 = vld [vmem:[%s765 + $0x24] sm:$0xff]
    %v897 = vld [vmem:[%s765 + $0x34] sm:$0xff]
    %v898 = vld [vmem:[%s765 + $0x44] sm:$0xff]
    %v899 = vld [vmem:[%s765 + $0x54] sm:$0xff]
    %v900 = vld [vmem:[%s765 + $0x64] sm:$0xff]
    %v901 = vld [vmem:[%s765 + $0x74] sm:$0xff]
    %v902 = vld [vmem:[%s765 + $0xc4] sm:$0xff]
    %v903 = vld [vmem:[%s765 + $0xd4] sm:$0xff]
    %v904 = vld [vmem:[%s765 + $0xe4] sm:$0xff]
    %v905 = vld [vmem:[%s765 + $0xf4] sm:$0xff]
    %v906 = vld [vmem:[%s765 + $0x104] sm:$0xff]
    %v907 = vld [vmem:[%s765 + $0x114] sm:$0xff]
    %v908 = vld [vmem:[%s765 + $0x124] sm:$0xff]
    %v909 = vld [vmem:[%s765 + $0x134] sm:$0xff]
    %910 = vst [vmem:[#allocation3 + $0x48] sm:$0xff] %v894
    %911 = vst [vmem:[#allocation3 + $0x110] sm:$0xff] %v895
    %912 = vst [vmem:[#allocation3 + $0x1d8] sm:$0xff] %v896
    %913 = vst [vmem:[#allocation3 + $0x2a0] sm:$0xff] %v897
    %914 = vst [vmem:[#allocation3 + $0x368] sm:$0xff] %v898
    %915 = vst [vmem:[#allocation3 + $0x430] sm:$0xff] %v899
    %916 = vst [vmem:[#allocation3 + $0x4f8] sm:$0xff] %v900
    %917 = vst [vmem:[#allocation3 + $0x5c0] sm:$0xff] %v901
    %918 = vst [vmem:[#allocation3 + $0x688] sm:$0xff] %v902
    %919 = vst [vmem:[#allocation3 + $0x750] sm:$0xff] %v903
    %920 = vst [vmem:[#allocation3 + $0x818] sm:$0xff] %v904
    %921 = vst [vmem:[#allocation3 + $0x8e0] sm:$0xff] %v905
    %922 = vst [vmem:[#allocation3 + $0x9a8] sm:$0xff] %v906
    %923 = vst [vmem:[#allocation3 + $0xa70] sm:$0xff] %v907
    %924 = vst [vmem:[#allocation3 + $0xb38] sm:$0xff] %v908
    %925 = vst [vmem:[#allocation3 + $0xc00] sm:$0xff] %v909
    %s926 = scalar_lea.vmem [#allocation2], 32
    %v927 = vld [vmem:[%s926] sm:$0xff]
    %v928 = vld [vmem:[%s926 + $0x10] sm:$0xff]
    %v929 = vld [vmem:[%s926 + $0x20] sm:$0xff]
    %v930 = vld [vmem:[%s926 + $0x30] sm:$0xff]
    %v931 = vld [vmem:[%s926 + $0x40] sm:$0xff]
    %v932 = vld [vmem:[%s926 + $0x50] sm:$0xff]
    %v933 = vld [vmem:[%s926 + $0x60] sm:$0xff]
    %v934 = vld [vmem:[%s926 + $0x70] sm:$0xff]
    %v935 = vld [vmem:[%s926 + $0xc0] sm:$0xff]
    %v936 = vld [vmem:[%s926 + $0xd0] sm:$0xff]
    %v937 = vld [vmem:[%s926 + $0xe0] sm:$0xff]
    %v938 = vld [vmem:[%s926 + $0xf0] sm:$0xff]
    %v939 = vld [vmem:[%s926 + $0x100] sm:$0xff]
    %v940 = vld [vmem:[%s926 + $0x110] sm:$0xff]
    %v941 = vld [vmem:[%s926 + $0x120] sm:$0xff]
    %v942 = vld [vmem:[%s926 + $0x130] sm:$0xff]
    %943 = vst [vmem:[#allocation3 + $0x50] sm:$0xff] %v927
    %944 = vst [vmem:[#allocation3 + $0x118] sm:$0xff] %v928
    %945 = vst [vmem:[#allocation3 + $0x1e0] sm:$0xff] %v929
    %946 = vst [vmem:[#allocation3 + $0x2a8] sm:$0xff] %v930
    %947 = vst [vmem:[#allocation3 + $0x370] sm:$0xff] %v931
    %948 = vst [vmem:[#allocation3 + $0x438] sm:$0xff] %v932
    %949 = vst [vmem:[#allocation3 + $0x500] sm:$0xff] %v933
    %950 = vst [vmem:[#allocation3 + $0x5c8] sm:$0xff] %v934
    %951 = vst [vmem:[#allocation3 + $0x690] sm:$0xff] %v935
    %952 = vst [vmem:[#allocation3 + $0x758] sm:$0xff] %v936
    %953 = vst [vmem:[#allocation3 + $0x820] sm:$0xff] %v937
    %954 = vst [vmem:[#allocation3 + $0x8e8] sm:$0xff] %v938
    %955 = vst [vmem:[#allocation3 + $0x9b0] sm:$0xff] %v939
    %956 = vst [vmem:[#allocation3 + $0xa78] sm:$0xff] %v940
    %957 = vst [vmem:[#allocation3 + $0xb40] sm:$0xff] %v941
    %958 = vst [vmem:[#allocation3 + $0xc08] sm:$0xff] %v942
    %v959 = vld [vmem:[%s926 + $0x1] sm:$0xff]
    %v960 = vld [vmem:[%s926 + $0x11] sm:$0xff]
    %v961 = vld [vmem:[%s926 + $0x21] sm:$0xff]
    %v962 = vld [vmem:[%s926 + $0x31] sm:$0xff]
    %v963 = vld [vmem:[%s926 + $0x41] sm:$0xff]
    %v964 = vld [vmem:[%s926 + $0x51] sm:$0xff]
    %v965 = vld [vmem:[%s926 + $0x61] sm:$0xff]
    %v966 = vld [vmem:[%s926 + $0x71] sm:$0xff]
    %v967 = vld [vmem:[%s926 + $0xc1] sm:$0xff]
    %v968 = vld [vmem:[%s926 + $0xd1] sm:$0xff]
    %v969 = vld [vmem:[%s926 + $0xe1] sm:$0xff]
    %v970 = vld [vmem:[%s926 + $0xf1] sm:$0xff]
    %v971 = vld [vmem:[%s926 + $0x101] sm:$0xff]
    %v972 = vld [vmem:[%s926 + $0x111] sm:$0xff]
    %v973 = vld [vmem:[%s926 + $0x121] sm:$0xff]
    %v974 = vld [vmem:[%s926 + $0x131] sm:$0xff]
    %975 = vst [vmem:[#allocation3 + $0x58] sm:$0xff] %v959
    %976 = vst [vmem:[#allocation3 + $0x120] sm:$0xff] %v960
    %977 = vst [vmem:[#allocation3 + $0x1e8] sm:$0xff] %v961
    %978 = vst [vmem:[#allocation3 + $0x2b0] sm:$0xff] %v962
    %979 = vst [vmem:[#allocation3 + $0x378] sm:$0xff] %v963
    %980 = vst [vmem:[#allocation3 + $0x440] sm:$0xff] %v964
    %981 = vst [vmem:[#allocation3 + $0x508] sm:$0xff] %v965
    %982 = vst [vmem:[#allocation3 + $0x5d0] sm:$0xff] %v966
    %983 = vst [vmem:[#allocation3 + $0x698] sm:$0xff] %v967
    %984 = vst [vmem:[#allocation3 + $0x760] sm:$0xff] %v968
    %985 = vst [vmem:[#allocation3 + $0x828] sm:$0xff] %v969
    %986 = vst [vmem:[#allocation3 + $0x8f0] sm:$0xff] %v970
    %987 = vst [vmem:[#allocation3 + $0x9b8] sm:$0xff] %v971
    %988 = vst [vmem:[#allocation3 + $0xa80] sm:$0xff] %v972
    %989 = vst [vmem:[#allocation3 + $0xb48] sm:$0xff] %v973
    %990 = vst [vmem:[#allocation3 + $0xc10] sm:$0xff] %v974
    %v991 = vld [vmem:[%s926 + $0x2] sm:$0xff]
    %v992 = vld [vmem:[%s926 + $0x12] sm:$0xff]
    %v993 = vld [vmem:[%s926 + $0x22] sm:$0xff]
    %v994 = vld [vmem:[%s926 + $0x32] sm:$0xff]
    %v995 = vld [vmem:[%s926 + $0x42] sm:$0xff]
    %v996 = vld [vmem:[%s926 + $0x52] sm:$0xff]
    %v997 = vld [vmem:[%s926 + $0x62] sm:$0xff]
    %v998 = vld [vmem:[%s926 + $0x72] sm:$0xff]
    %v999 = vld [vmem:[%s926 + $0xc2] sm:$0xff]
    %v1000 = vld [vmem:[%s926 + $0xd2] sm:$0xff]
    %v1001 = vld [vmem:[%s926 + $0xe2] sm:$0xff]
    %v1002 = vld [vmem:[%s926 + $0xf2] sm:$0xff]
    %v1003 = vld [vmem:[%s926 + $0x102] sm:$0xff]
    %v1004 = vld [vmem:[%s926 + $0x112] sm:$0xff]
    %v1005 = vld [vmem:[%s926 + $0x122] sm:$0xff]
    %v1006 = vld [vmem:[%s926 + $0x132] sm:$0xff]
    %1007 = vst [vmem:[#allocation3 + $0x60] sm:$0xff] %v991
    %1008 = vst [vmem:[#allocation3 + $0x128] sm:$0xff] %v992
    %1009 = vst [vmem:[#allocation3 + $0x1f0] sm:$0xff] %v993
    %1010 = vst [vmem:[#allocation3 + $0x2b8] sm:$0xff] %v994
    %1011 = vst [vmem:[#allocation3 + $0x380] sm:$0xff] %v995
    %1012 = vst [vmem:[#allocation3 + $0x448] sm:$0xff] %v996
    %1013 = vst [vmem:[#allocation3 + $0x510] sm:$0xff] %v997
    %1014 = vst [vmem:[#allocation3 + $0x5d8] sm:$0xff] %v998
    %1015 = vst [vmem:[#allocation3 + $0x6a0] sm:$0xff] %v999
    %1016 = vst [vmem:[#allocation3 + $0x768] sm:$0xff] %v1000
    %1017 = vst [vmem:[#allocation3 + $0x830] sm:$0xff] %v1001
    %1018 = vst [vmem:[#allocation3 + $0x8f8] sm:$0xff] %v1002
    %1019 = vst [vmem:[#allocation3 + $0x9c0] sm:$0xff] %v1003
    %1020 = vst [vmem:[#allocation3 + $0xa88] sm:$0xff] %v1004
    %1021 = vst [vmem:[#allocation3 + $0xb50] sm:$0xff] %v1005
    %1022 = vst [vmem:[#allocation3 + $0xc18] sm:$0xff] %v1006
    %v1023 = vld [vmem:[%s926 + $0x3] sm:$0xff]
    %v1024 = vld [vmem:[%s926 + $0x13] sm:$0xff]
    %v1025 = vld [vmem:[%s926 + $0x23] sm:$0xff]
    %v1026 = vld [vmem:[%s926 + $0x33] sm:$0xff]
    %v1027 = vld [vmem:[%s926 + $0x43] sm:$0xff]
    %v1028 = vld [vmem:[%s926 + $0x53] sm:$0xff]
    %v1029 = vld [vmem:[%s926 + $0x63] sm:$0xff]
    %v1030 = vld [vmem:[%s926 + $0x73] sm:$0xff]
    %v1031 = vld [vmem:[%s926 + $0xc3] sm:$0xff]
    %v1032 = vld [vmem:[%s926 + $0xd3] sm:$0xff]
    %v1033 = vld [vmem:[%s926 + $0xe3] sm:$0xff]
    %v1034 = vld [vmem:[%s926 + $0xf3] sm:$0xff]
    %v1035 = vld [vmem:[%s926 + $0x103] sm:$0xff]
    %v1036 = vld [vmem:[%s926 + $0x113] sm:$0xff]
    %v1037 = vld [vmem:[%s926 + $0x123] sm:$0xff]
    %v1038 = vld [vmem:[%s926 + $0x133] sm:$0xff]
    %1039 = vst [vmem:[#allocation3 + $0x68] sm:$0xff] %v1023
    %1040 = vst [vmem:[#allocation3 + $0x130] sm:$0xff] %v1024
    %1041 = vst [vmem:[#allocation3 + $0x1f8] sm:$0xff] %v1025
    %1042 = vst [vmem:[#allocation3 + $0x2c0] sm:$0xff] %v1026
    %1043 = vst [vmem:[#allocation3 + $0x388] sm:$0xff] %v1027
    %1044 = vst [vmem:[#allocation3 + $0x450] sm:$0xff] %v1028
    %1045 = vst [vmem:[#allocation3 + $0x518] sm:$0xff] %v1029
    %1046 = vst [vmem:[#allocation3 + $0x5e0] sm:$0xff] %v1030
    %1047 = vst [vmem:[#allocation3 + $0x6a8] sm:$0xff] %v1031
    %1048 = vst [vmem:[#allocation3 + $0x770] sm:$0xff] %v1032
    %1049 = vst [vmem:[#allocation3 + $0x838] sm:$0xff] %v1033
    %1050 = vst [vmem:[#allocation3 + $0x900] sm:$0xff] %v1034
    %1051 = vst [vmem:[#allocation3 + $0x9c8] sm:$0xff] %v1035
    %1052 = vst [vmem:[#allocation3 + $0xa90] sm:$0xff] %v1036
    %1053 = vst [vmem:[#allocation3 + $0xb58] sm:$0xff] %v1037
    %1054 = vst [vmem:[#allocation3 + $0xc20] sm:$0xff] %v1038
    %v1055 = vld [vmem:[%s926 + $0x4] sm:$0xff]
    %v1056 = vld [vmem:[%s926 + $0x14] sm:$0xff]
    %v1057 = vld [vmem:[%s926 + $0x24] sm:$0xff]
    %v1058 = vld [vmem:[%s926 + $0x34] sm:$0xff]
    %v1059 = vld [vmem:[%s926 + $0x44] sm:$0xff]
    %v1060 = vld [vmem:[%s926 + $0x54] sm:$0xff]
    %v1061 = vld [vmem:[%s926 + $0x64] sm:$0xff]
    %v1062 = vld [vmem:[%s926 + $0x74] sm:$0xff]
    %v1063 = vld [vmem:[%s926 + $0xc4] sm:$0xff]
    %v1064 = vld [vmem:[%s926 + $0xd4] sm:$0xff]
    %v1065 = vld [vmem:[%s926 + $0xe4] sm:$0xff]
    %v1066 = vld [vmem:[%s926 + $0xf4] sm:$0xff]
    %v1067 = vld [vmem:[%s926 + $0x104] sm:$0xff]
    %v1068 = vld [vmem:[%s926 + $0x114] sm:$0xff]
    %v1069 = vld [vmem:[%s926 + $0x124] sm:$0xff]
    %v1070 = vld [vmem:[%s926 + $0x134] sm:$0xff]
    %1071 = vst [vmem:[#allocation3 + $0x70] sm:$0xff] %v1055
    %1072 = vst [vmem:[#allocation3 + $0x138] sm:$0xff] %v1056
    %1073 = vst [vmem:[#allocation3 + $0x200] sm:$0xff] %v1057
    %1074 = vst [vmem:[#allocation3 + $0x2c8] sm:$0xff] %v1058
    %1075 = vst [vmem:[#allocation3 + $0x390] sm:$0xff] %v1059
    %1076 = vst [vmem:[#allocation3 + $0x458] sm:$0xff] %v1060
    %1077 = vst [vmem:[#allocation3 + $0x520] sm:$0xff] %v1061
    %1078 = vst [vmem:[#allocation3 + $0x5e8] sm:$0xff] %v1062
    %1079 = vst [vmem:[#allocation3 + $0x6b0] sm:$0xff] %v1063
    %1080 = vst [vmem:[#allocation3 + $0x778] sm:$0xff] %v1064
    %1081 = vst [vmem:[#allocation3 + $0x840] sm:$0xff] %v1065
    %1082 = vst [vmem:[#allocation3 + $0x908] sm:$0xff] %v1066
    %1083 = vst [vmem:[#allocation3 + $0x9d0] sm:$0xff] %v1067
    %1084 = vst [vmem:[#allocation3 + $0xa98] sm:$0xff] %v1068
    %1085 = vst [vmem:[#allocation3 + $0xb60] sm:$0xff] %v1069
    %1086 = vst [vmem:[#allocation3 + $0xc28] sm:$0xff] %v1070
    %s1087 = scalar_lea.vmem [#allocation2], 48
    %v1088 = vld [vmem:[%s1087] sm:$0xff]
    %v1089 = vld [vmem:[%s1087 + $0x10] sm:$0xff]
    %v1090 = vld [vmem:[%s1087 + $0x20] sm:$0xff]
    %v1091 = vld [vmem:[%s1087 + $0x30] sm:$0xff]
    %v1092 = vld [vmem:[%s1087 + $0x40] sm:$0xff]
    %v1093 = vld [vmem:[%s1087 + $0x50] sm:$0xff]
    %v1094 = vld [vmem:[%s1087 + $0x60] sm:$0xff]
    %v1095 = vld [vmem:[%s1087 + $0x70] sm:$0xff]
    %v1096 = vld [vmem:[%s1087 + $0xc0] sm:$0xff]
    %v1097 = vld [vmem:[%s1087 + $0xd0] sm:$0xff]
    %v1098 = vld [vmem:[%s1087 + $0xe0] sm:$0xff]
    %v1099 = vld [vmem:[%s1087 + $0xf0] sm:$0xff]
    %v1100 = vld [vmem:[%s1087 + $0x100] sm:$0xff]
    %v1101 = vld [vmem:[%s1087 + $0x110] sm:$0xff]
    %v1102 = vld [vmem:[%s1087 + $0x120] sm:$0xff]
    %v1103 = vld [vmem:[%s1087 + $0x130] sm:$0xff]
    %1104 = vst [vmem:[#allocation3 + $0x78] sm:$0xff] %v1088
    %1105 = vst [vmem:[#allocation3 + $0x140] sm:$0xff] %v1089
    %1106 = vst [vmem:[#allocation3 + $0x208] sm:$0xff] %v1090
    %1107 = vst [vmem:[#allocation3 + $0x2d0] sm:$0xff] %v1091
    %1108 = vst [vmem:[#allocation3 + $0x398] sm:$0xff] %v1092
    %1109 = vst [vmem:[#allocation3 + $0x460] sm:$0xff] %v1093
    %1110 = vst [vmem:[#allocation3 + $0x528] sm:$0xff] %v1094
    %1111 = vst [vmem:[#allocation3 + $0x5f0] sm:$0xff] %v1095
    %1112 = vst [vmem:[#allocation3 + $0x6b8] sm:$0xff] %v1096
    %1113 = vst [vmem:[#allocation3 + $0x780] sm:$0xff] %v1097
    %1114 = vst [vmem:[#allocation3 + $0x848] sm:$0xff] %v1098
    %1115 = vst [vmem:[#allocation3 + $0x910] sm:$0xff] %v1099
    %1116 = vst [vmem:[#allocation3 + $0x9d8] sm:$0xff] %v1100
    %1117 = vst [vmem:[#allocation3 + $0xaa0] sm:$0xff] %v1101
    %1118 = vst [vmem:[#allocation3 + $0xb68] sm:$0xff] %v1102
    %1119 = vst [vmem:[#allocation3 + $0xc30] sm:$0xff] %v1103
    %v1120 = vld [vmem:[%s1087 + $0x1] sm:$0xff]
    %v1121 = vld [vmem:[%s1087 + $0x11] sm:$0xff]
    %v1122 = vld [vmem:[%s1087 + $0x21] sm:$0xff]
    %v1123 = vld [vmem:[%s1087 + $0x31] sm:$0xff]
    %v1124 = vld [vmem:[%s1087 + $0x41] sm:$0xff]
    %v1125 = vld [vmem:[%s1087 + $0x51] sm:$0xff]
    %v1126 = vld [vmem:[%s1087 + $0x61] sm:$0xff]
    %v1127 = vld [vmem:[%s1087 + $0x71] sm:$0xff]
    %v1128 = vld [vmem:[%s1087 + $0xc1] sm:$0xff]
    %v1129 = vld [vmem:[%s1087 + $0xd1] sm:$0xff]
    %v1130 = vld [vmem:[%s1087 + $0xe1] sm:$0xff]
    %v1131 = vld [vmem:[%s1087 + $0xf1] sm:$0xff]
    %v1132 = vld [vmem:[%s1087 + $0x101] sm:$0xff]
    %v1133 = vld [vmem:[%s1087 + $0x111] sm:$0xff]
    %v1134 = vld [vmem:[%s1087 + $0x121] sm:$0xff]
    %v1135 = vld [vmem:[%s1087 + $0x131] sm:$0xff]
    %1136 = vst [vmem:[#allocation3 + $0x80] sm:$0xff] %v1120
    %1137 = vst [vmem:[#allocation3 + $0x148] sm:$0xff] %v1121
    %1138 = vst [vmem:[#allocation3 + $0x210] sm:$0xff] %v1122
    %1139 = vst [vmem:[#allocation3 + $0x2d8] sm:$0xff] %v1123
    %1140 = vst [vmem:[#allocation3 + $0x3a0] sm:$0xff] %v1124
    %1141 = vst [vmem:[#allocation3 + $0x468] sm:$0xff] %v1125
    %1142 = vst [vmem:[#allocation3 + $0x530] sm:$0xff] %v1126
    %1143 = vst [vmem:[#allocation3 + $0x5f8] sm:$0xff] %v1127
    %1144 = vst [vmem:[#allocation3 + $0x6c0] sm:$0xff] %v1128
    %1145 = vst [vmem:[#allocation3 + $0x788] sm:$0xff] %v1129
    %1146 = vst [vmem:[#allocation3 + $0x850] sm:$0xff] %v1130
    %1147 = vst [vmem:[#allocation3 + $0x918] sm:$0xff] %v1131
    %1148 = vst [vmem:[#allocation3 + $0x9e0] sm:$0xff] %v1132
    %1149 = vst [vmem:[#allocation3 + $0xaa8] sm:$0xff] %v1133
    %1150 = vst [vmem:[#allocation3 + $0xb70] sm:$0xff] %v1134
    %1151 = vst [vmem:[#allocation3 + $0xc38] sm:$0xff] %v1135
    %v1152 = vld [vmem:[%s1087 + $0x2] sm:$0xff]
    %v1153 = vld [vmem:[%s1087 + $0x12] sm:$0xff]
    %v1154 = vld [vmem:[%s1087 + $0x22] sm:$0xff]
    %v1155 = vld [vmem:[%s1087 + $0x32] sm:$0xff]
    %v1156 = vld [vmem:[%s1087 + $0x42] sm:$0xff]
    %v1157 = vld [vmem:[%s1087 + $0x52] sm:$0xff]
    %v1158 = vld [vmem:[%s1087 + $0x62] sm:$0xff]
    %v1159 = vld [vmem:[%s1087 + $0x72] sm:$0xff]
    %v1160 = vld [vmem:[%s1087 + $0xc2] sm:$0xff]
    %v1161 = vld [vmem:[%s1087 + $0xd2] sm:$0xff]
    %v1162 = vld [vmem:[%s1087 + $0xe2] sm:$0xff]
    %v1163 = vld [vmem:[%s1087 + $0xf2] sm:$0xff]
    %v1164 = vld [vmem:[%s1087 + $0x102] sm:$0xff]
    %v1165 = vld [vmem:[%s1087 + $0x112] sm:$0xff]
    %v1166 = vld [vmem:[%s1087 + $0x122] sm:$0xff]
    %v1167 = vld [vmem:[%s1087 + $0x132] sm:$0xff]
    %1168 = vst [vmem:[#allocation3 + $0x88] sm:$0xff] %v1152
    %1169 = vst [vmem:[#allocation3 + $0x150] sm:$0xff] %v1153
    %1170 = vst [vmem:[#allocation3 + $0x218] sm:$0xff] %v1154
    %1171 = vst [vmem:[#allocation3 + $0x2e0] sm:$0xff] %v1155
    %1172 = vst [vmem:[#allocation3 + $0x3a8] sm:$0xff] %v1156
    %1173 = vst [vmem:[#allocation3 + $0x470] sm:$0xff] %v1157
    %1174 = vst [vmem:[#allocation3 + $0x538] sm:$0xff] %v1158
    %1175 = vst [vmem:[#allocation3 + $0x600] sm:$0xff] %v1159
    %1176 = vst [vmem:[#allocation3 + $0x6c8] sm:$0xff] %v1160
    %1177 = vst [vmem:[#allocation3 + $0x790] sm:$0xff] %v1161
    %1178 = vst [vmem:[#allocation3 + $0x858] sm:$0xff] %v1162
    %1179 = vst [vmem:[#allocation3 + $0x920] sm:$0xff] %v1163
    %1180 = vst [vmem:[#allocation3 + $0x9e8] sm:$0xff] %v1164
    %1181 = vst [vmem:[#allocation3 + $0xab0] sm:$0xff] %v1165
    %1182 = vst [vmem:[#allocation3 + $0xb78] sm:$0xff] %v1166
    %1183 = vst [vmem:[#allocation3 + $0xc40] sm:$0xff] %v1167
    %v1184 = vld [vmem:[%s1087 + $0x3] sm:$0xff]
    %v1185 = vld [vmem:[%s1087 + $0x13] sm:$0xff]
    %v1186 = vld [vmem:[%s1087 + $0x23] sm:$0xff]
    %v1187 = vld [vmem:[%s1087 + $0x33] sm:$0xff]
    %v1188 = vld [vmem:[%s1087 + $0x43] sm:$0xff]
    %v1189 = vld [vmem:[%s1087 + $0x53] sm:$0xff]
    %v1190 = vld [vmem:[%s1087 + $0x63] sm:$0xff]
    %v1191 = vld [vmem:[%s1087 + $0x73] sm:$0xff]
    %v1192 = vld [vmem:[%s1087 + $0xc3] sm:$0xff]
    %v1193 = vld [vmem:[%s1087 + $0xd3] sm:$0xff]
    %v1194 = vld [vmem:[%s1087 + $0xe3] sm:$0xff]
    %v1195 = vld [vmem:[%s1087 + $0xf3] sm:$0xff]
    %v1196 = vld [vmem:[%s1087 + $0x103] sm:$0xff]
    %v1197 = vld [vmem:[%s1087 + $0x113] sm:$0xff]
    %v1198 = vld [vmem:[%s1087 + $0x123] sm:$0xff]
    %v1199 = vld [vmem:[%s1087 + $0x133] sm:$0xff]
    %1200 = vst [vmem:[#allocation3 + $0x90] sm:$0xff] %v1184
    %1201 = vst [vmem:[#allocation3 + $0x158] sm:$0xff] %v1185
    %1202 = vst [vmem:[#allocation3 + $0x220] sm:$0xff] %v1186
    %1203 = vst [vmem:[#allocation3 + $0x2e8] sm:$0xff] %v1187
    %1204 = vst [vmem:[#allocation3 + $0x3b0] sm:$0xff] %v1188
    %1205 = vst [vmem:[#allocation3 + $0x478] sm:$0xff] %v1189
    %1206 = vst [vmem:[#allocation3 + $0x540] sm:$0xff] %v1190
    %1207 = vst [vmem:[#allocation3 + $0x608] sm:$0xff] %v1191
    %1208 = vst [vmem:[#allocation3 + $0x6d0] sm:$0xff] %v1192
    %1209 = vst [vmem:[#allocation3 + $0x798] sm:$0xff] %v1193
    %1210 = vst [vmem:[#allocation3 + $0x860] sm:$0xff] %v1194
    %1211 = vst [vmem:[#allocation3 + $0x928] sm:$0xff] %v1195
    %1212 = vst [vmem:[#allocation3 + $0x9f0] sm:$0xff] %v1196
    %1213 = vst [vmem:[#allocation3 + $0xab8] sm:$0xff] %v1197
    %1214 = vst [vmem:[#allocation3 + $0xb80] sm:$0xff] %v1198
    %1215 = vst [vmem:[#allocation3 + $0xc48] sm:$0xff] %v1199
    %v1216 = vld [vmem:[%s1087 + $0x4] sm:$0xff]
    %v1217 = vld [vmem:[%s1087 + $0x14] sm:$0xff]
    %v1218 = vld [vmem:[%s1087 + $0x24] sm:$0xff]
    %v1219 = vld [vmem:[%s1087 + $0x34] sm:$0xff]
    %v1220 = vld [vmem:[%s1087 + $0x44] sm:$0xff]
    %v1221 = vld [vmem:[%s1087 + $0x54] sm:$0xff]
    %v1222 = vld [vmem:[%s1087 + $0x64] sm:$0xff]
    %v1223 = vld [vmem:[%s1087 + $0x74] sm:$0xff]
    %v1224 = vld [vmem:[%s1087 + $0xc4] sm:$0xff]
    %v1225 = vld [vmem:[%s1087 + $0xd4] sm:$0xff]
    %v1226 = vld [vmem:[%s1087 + $0xe4] sm:$0xff]
    %v1227 = vld [vmem:[%s1087 + $0xf4] sm:$0xff]
    %v1228 = vld [vmem:[%s1087 + $0x104] sm:$0xff]
    %v1229 = vld [vmem:[%s1087 + $0x114] sm:$0xff]
    %v1230 = vld [vmem:[%s1087 + $0x124] sm:$0xff]
    %v1231 = vld [vmem:[%s1087 + $0x134] sm:$0xff]
    %1232 = vst [vmem:[#allocation3 + $0x98] sm:$0xff] %v1216
    %1233 = vst [vmem:[#allocation3 + $0x160] sm:$0xff] %v1217
    %1234 = vst [vmem:[#allocation3 + $0x228] sm:$0xff] %v1218
    %1235 = vst [vmem:[#allocation3 + $0x2f0] sm:$0xff] %v1219
    %1236 = vst [vmem:[#allocation3 + $0x3b8] sm:$0xff] %v1220
    %1237 = vst [vmem:[#allocation3 + $0x480] sm:$0xff] %v1221
    %1238 = vst [vmem:[#allocation3 + $0x548] sm:$0xff] %v1222
    %1239 = vst [vmem:[#allocation3 + $0x610] sm:$0xff] %v1223
    %1240 = vst [vmem:[#allocation3 + $0x6d8] sm:$0xff] %v1224
    %1241 = vst [vmem:[#allocation3 + $0x7a0] sm:$0xff] %v1225
    %1242 = vst [vmem:[#allocation3 + $0x868] sm:$0xff] %v1226
    %1243 = vst [vmem:[#allocation3 + $0x930] sm:$0xff] %v1227
    %1244 = vst [vmem:[#allocation3 + $0x9f8] sm:$0xff] %v1228
    %1245 = vst [vmem:[#allocation3 + $0xac0] sm:$0xff] %v1229
    %1246 = vst [vmem:[#allocation3 + $0xb88] sm:$0xff] %v1230
    %1247 = vst [vmem:[#allocation3 + $0xc50] sm:$0xff] %v1231
    %s1248 = scalar_lea.vmem [#allocation2], 64
    %v1249 = vld [vmem:[%s1248] sm:$0xff]
    %v1250 = vld [vmem:[%s1248 + $0x10] sm:$0xff]
    %v1251 = vld [vmem:[%s1248 + $0x20] sm:$0xff]
    %v1252 = vld [vmem:[%s1248 + $0x30] sm:$0xff]
    %v1253 = vld [vmem:[%s1248 + $0x40] sm:$0xff]
    %v1254 = vld [vmem:[%s1248 + $0x50] sm:$0xff]
    %v1255 = vld [vmem:[%s1248 + $0x60] sm:$0xff]
    %v1256 = vld [vmem:[%s1248 + $0x70] sm:$0xff]
    %v1257 = vld [vmem:[%s1248 + $0xc0] sm:$0xff]
    %v1258 = vld [vmem:[%s1248 + $0xd0] sm:$0xff]
    %v1259 = vld [vmem:[%s1248 + $0xe0] sm:$0xff]
    %v1260 = vld [vmem:[%s1248 + $0xf0] sm:$0xff]
    %v1261 = vld [vmem:[%s1248 + $0x100] sm:$0xff]
    %v1262 = vld [vmem:[%s1248 + $0x110] sm:$0xff]
    %v1263 = vld [vmem:[%s1248 + $0x120] sm:$0xff]
    %v1264 = vld [vmem:[%s1248 + $0x130] sm:$0xff]
    %1265 = vst [vmem:[#allocation3 + $0xa0] sm:$0xff] %v1249
    %1266 = vst [vmem:[#allocation3 + $0x168] sm:$0xff] %v1250
    %1267 = vst [vmem:[#allocation3 + $0x230] sm:$0xff] %v1251
    %1268 = vst [vmem:[#allocation3 + $0x2f8] sm:$0xff] %v1252
    %1269 = vst [vmem:[#allocation3 + $0x3c0] sm:$0xff] %v1253
    %1270 = vst [vmem:[#allocation3 + $0x488] sm:$0xff] %v1254
    %1271 = vst [vmem:[#allocation3 + $0x550] sm:$0xff] %v1255
    %1272 = vst [vmem:[#allocation3 + $0x618] sm:$0xff] %v1256
    %1273 = vst [vmem:[#allocation3 + $0x6e0] sm:$0xff] %v1257
    %1274 = vst [vmem:[#allocation3 + $0x7a8] sm:$0xff] %v1258
    %1275 = vst [vmem:[#allocation3 + $0x870] sm:$0xff] %v1259
    %1276 = vst [vmem:[#allocation3 + $0x938] sm:$0xff] %v1260
    %1277 = vst [vmem:[#allocation3 + $0xa00] sm:$0xff] %v1261
    %1278 = vst [vmem:[#allocation3 + $0xac8] sm:$0xff] %v1262
    %1279 = vst [vmem:[#allocation3 + $0xb90] sm:$0xff] %v1263
    %1280 = vst [vmem:[#allocation3 + $0xc58] sm:$0xff] %v1264
    %v1281 = vld [vmem:[%s1248 + $0x1] sm:$0xff]
    %v1282 = vld [vmem:[%s1248 + $0x11] sm:$0xff]
    %v1283 = vld [vmem:[%s1248 + $0x21] sm:$0xff]
    %v1284 = vld [vmem:[%s1248 + $0x31] sm:$0xff]
    %v1285 = vld [vmem:[%s1248 + $0x41] sm:$0xff]
    %v1286 = vld [vmem:[%s1248 + $0x51] sm:$0xff]
    %v1287 = vld [vmem:[%s1248 + $0x61] sm:$0xff]
    %v1288 = vld [vmem:[%s1248 + $0x71] sm:$0xff]
    %v1289 = vld [vmem:[%s1248 + $0xc1] sm:$0xff]
    %v1290 = vld [vmem:[%s1248 + $0xd1] sm:$0xff]
    %v1291 = vld [vmem:[%s1248 + $0xe1] sm:$0xff]
    %v1292 = vld [vmem:[%s1248 + $0xf1] sm:$0xff]
    %v1293 = vld [vmem:[%s1248 + $0x101] sm:$0xff]
    %v1294 = vld [vmem:[%s1248 + $0x111] sm:$0xff]
    %v1295 = vld [vmem:[%s1248 + $0x121] sm:$0xff]
    %v1296 = vld [vmem:[%s1248 + $0x131] sm:$0xff]
    %1297 = vst [vmem:[#allocation3 + $0xa8] sm:$0xff] %v1281
    %1298 = vst [vmem:[#allocation3 + $0x170] sm:$0xff] %v1282
    %1299 = vst [vmem:[#allocation3 + $0x238] sm:$0xff] %v1283
    %1300 = vst [vmem:[#allocation3 + $0x300] sm:$0xff] %v1284
    %1301 = vst [vmem:[#allocation3 + $0x3c8] sm:$0xff] %v1285
    %1302 = vst [vmem:[#allocation3 + $0x490] sm:$0xff] %v1286
    %1303 = vst [vmem:[#allocation3 + $0x558] sm:$0xff] %v1287
    %1304 = vst [vmem:[#allocation3 + $0x620] sm:$0xff] %v1288
    %1305 = vst [vmem:[#allocation3 + $0x6e8] sm:$0xff] %v1289
    %1306 = vst [vmem:[#allocation3 + $0x7b0] sm:$0xff] %v1290
    %1307 = vst [vmem:[#allocation3 + $0x878] sm:$0xff] %v1291
    %1308 = vst [vmem:[#allocation3 + $0x940] sm:$0xff] %v1292
    %1309 = vst [vmem:[#allocation3 + $0xa08] sm:$0xff] %v1293
    %1310 = vst [vmem:[#allocation3 + $0xad0] sm:$0xff] %v1294
    %1311 = vst [vmem:[#allocation3 + $0xb98] sm:$0xff] %v1295
    %1312 = vst [vmem:[#allocation3 + $0xc60] sm:$0xff] %v1296
    %v1313 = vld [vmem:[%s1248 + $0x2] sm:$0xff]
    %v1314 = vld [vmem:[%s1248 + $0x12] sm:$0xff]
    %v1315 = vld [vmem:[%s1248 + $0x22] sm:$0xff]
    %v1316 = vld [vmem:[%s1248 + $0x32] sm:$0xff]
    %v1317 = vld [vmem:[%s1248 + $0x42] sm:$0xff]
    %v1318 = vld [vmem:[%s1248 + $0x52] sm:$0xff]
    %v1319 = vld [vmem:[%s1248 + $0x62] sm:$0xff]
    %v1320 = vld [vmem:[%s1248 + $0x72] sm:$0xff]
    %v1321 = vld [vmem:[%s1248 + $0xc2] sm:$0xff]
    %v1322 = vld [vmem:[%s1248 + $0xd2] sm:$0xff]
    %v1323 = vld [vmem:[%s1248 + $0xe2] sm:$0xff]
    %v1324 = vld [vmem:[%s1248 + $0xf2] sm:$0xff]
    %v1325 = vld [vmem:[%s1248 + $0x102] sm:$0xff]
    %v1326 = vld [vmem:[%s1248 + $0x112] sm:$0xff]
    %v1327 = vld [vmem:[%s1248 + $0x122] sm:$0xff]
    %v1328 = vld [vmem:[%s1248 + $0x132] sm:$0xff]
    %1329 = vst [vmem:[#allocation3 + $0xb0] sm:$0xff] %v1313
    %1330 = vst [vmem:[#allocation3 + $0x178] sm:$0xff] %v1314
    %1331 = vst [vmem:[#allocation3 + $0x240] sm:$0xff] %v1315
    %1332 = vst [vmem:[#allocation3 + $0x308] sm:$0xff] %v1316
    %1333 = vst [vmem:[#allocation3 + $0x3d0] sm:$0xff] %v1317
    %1334 = vst [vmem:[#allocation3 + $0x498] sm:$0xff] %v1318
    %1335 = vst [vmem:[#allocation3 + $0x560] sm:$0xff] %v1319
    %1336 = vst [vmem:[#allocation3 + $0x628] sm:$0xff] %v1320
    %1337 = vst [vmem:[#allocation3 + $0x6f0] sm:$0xff] %v1321
    %1338 = vst [vmem:[#allocation3 + $0x7b8] sm:$0xff] %v1322
    %1339 = vst [vmem:[#allocation3 + $0x880] sm:$0xff] %v1323
    %1340 = vst [vmem:[#allocation3 + $0x948] sm:$0xff] %v1324
    %1341 = vst [vmem:[#allocation3 + $0xa10] sm:$0xff] %v1325
    %1342 = vst [vmem:[#allocation3 + $0xad8] sm:$0xff] %v1326
    %1343 = vst [vmem:[#allocation3 + $0xba0] sm:$0xff] %v1327
    %1344 = vst [vmem:[#allocation3 + $0xc68] sm:$0xff] %v1328
    %v1345 = vld [vmem:[%s1248 + $0x3] sm:$0xff]
    %v1346 = vld [vmem:[%s1248 + $0x13] sm:$0xff]
    %v1347 = vld [vmem:[%s1248 + $0x23] sm:$0xff]
    %v1348 = vld [vmem:[%s1248 + $0x33] sm:$0xff]
    %v1349 = vld [vmem:[%s1248 + $0x43] sm:$0xff]
    %v1350 = vld [vmem:[%s1248 + $0x53] sm:$0xff]
    %v1351 = vld [vmem:[%s1248 + $0x63] sm:$0xff]
    %v1352 = vld [vmem:[%s1248 + $0x73] sm:$0xff]
    %v1353 = vld [vmem:[%s1248 + $0xc3] sm:$0xff]
    %v1354 = vld [vmem:[%s1248 + $0xd3] sm:$0xff]
    %v1355 = vld [vmem:[%s1248 + $0xe3] sm:$0xff]
    %v1356 = vld [vmem:[%s1248 + $0xf3] sm:$0xff]
    %v1357 = vld [vmem:[%s1248 + $0x103] sm:$0xff]
    %v1358 = vld [vmem:[%s1248 + $0x113] sm:$0xff]
    %v1359 = vld [vmem:[%s1248 + $0x123] sm:$0xff]
    %v1360 = vld [vmem:[%s1248 + $0x133] sm:$0xff]
    %1361 = vst [vmem:[#allocation3 + $0xb8] sm:$0xff] %v1345
    %1362 = vst [vmem:[#allocation3 + $0x180] sm:$0xff] %v1346
    %1363 = vst [vmem:[#allocation3 + $0x248] sm:$0xff] %v1347
    %1364 = vst [vmem:[#allocation3 + $0x310] sm:$0xff] %v1348
    %1365 = vst [vmem:[#allocation3 + $0x3d8] sm:$0xff] %v1349
    %1366 = vst [vmem:[#allocation3 + $0x4a0] sm:$0xff] %v1350
    %1367 = vst [vmem:[#allocation3 + $0x568] sm:$0xff] %v1351
    %1368 = vst [vmem:[#allocation3 + $0x630] sm:$0xff] %v1352
    %1369 = vst [vmem:[#allocation3 + $0x6f8] sm:$0xff] %v1353
    %1370 = vst [vmem:[#allocation3 + $0x7c0] sm:$0xff] %v1354
    %1371 = vst [vmem:[#allocation3 + $0x888] sm:$0xff] %v1355
    %1372 = vst [vmem:[#allocation3 + $0x950] sm:$0xff] %v1356
    %1373 = vst [vmem:[#allocation3 + $0xa18] sm:$0xff] %v1357
    %1374 = vst [vmem:[#allocation3 + $0xae0] sm:$0xff] %v1358
    %1375 = vst [vmem:[#allocation3 + $0xba8] sm:$0xff] %v1359
    %1376 = vst [vmem:[#allocation3 + $0xc70] sm:$0xff] %v1360
    %v1377 = vld [vmem:[%s1248 + $0x4] sm:$0xff]
    %v1378 = vld [vmem:[%s1248 + $0x14] sm:$0xff]
    %v1379 = vld [vmem:[%s1248 + $0x24] sm:$0xff]
    %v1380 = vld [vmem:[%s1248 + $0x34] sm:$0xff]
    %v1381 = vld [vmem:[%s1248 + $0x44] sm:$0xff]
    %v1382 = vld [vmem:[%s1248 + $0x54] sm:$0xff]
    %v1383 = vld [vmem:[%s1248 + $0x64] sm:$0xff]
    %v1384 = vld [vmem:[%s1248 + $0x74] sm:$0xff]
    %v1385 = vld [vmem:[%s1248 + $0xc4] sm:$0xff]
    %v1386 = vld [vmem:[%s1248 + $0xd4] sm:$0xff]
    %v1387 = vld [vmem:[%s1248 + $0xe4] sm:$0xff]
    %v1388 = vld [vmem:[%s1248 + $0xf4] sm:$0xff]
    %v1389 = vld [vmem:[%s1248 + $0x104] sm:$0xff]
    %v1390 = vld [vmem:[%s1248 + $0x114] sm:$0xff]
    %v1391 = vld [vmem:[%s1248 + $0x124] sm:$0xff]
    %v1392 = vld [vmem:[%s1248 + $0x134] sm:$0xff]
    %1393 = vst [vmem:[#allocation3 + $0xc0] sm:$0xff] %v1377
    %1394 = vst [vmem:[#allocation3 + $0x188] sm:$0xff] %v1378
    %1395 = vst [vmem:[#allocation3 + $0x250] sm:$0xff] %v1379
    %1396 = vst [vmem:[#allocation3 + $0x318] sm:$0xff] %v1380
    %1397 = vst [vmem:[#allocation3 + $0x3e0] sm:$0xff] %v1381
    %1398 = vst [vmem:[#allocation3 + $0x4a8] sm:$0xff] %v1382
    %1399 = vst [vmem:[#allocation3 + $0x570] sm:$0xff] %v1383
    %1400 = vst [vmem:[#allocation3 + $0x638] sm:$0xff] %v1384
    %1401 = vst [vmem:[#allocation3 + $0x700] sm:$0xff] %v1385
    %1402 = vst [vmem:[#allocation3 + $0x7c8] sm:$0xff] %v1386
    %1403 = vst [vmem:[#allocation3 + $0x890] sm:$0xff] %v1387
    %1404 = vst [vmem:[#allocation3 + $0x958] sm:$0xff] %v1388
    %1405 = vst [vmem:[#allocation3 + $0xa20] sm:$0xff] %v1389
    %1406 = vst [vmem:[#allocation3 + $0xae8] sm:$0xff] %v1390
    %1407 = vst [vmem:[#allocation3 + $0xbb0] sm:$0xff] %v1391
    %1408 = vst [vmem:[#allocation3 + $0xc78] sm:$0xff] %v1392
    %v1409 = vld [vmem:[#allocation3] sm:$0xff]
    %v1410 = vld [vmem:[#allocation3 + $0x8] sm:$0xff]
    %v1411 = vld [vmem:[#allocation3 + $0x10] sm:$0xff]
    %v1412 = vld [vmem:[#allocation3 + $0x18] sm:$0xff]
    %v1413 = vld [vmem:[#allocation3 + $0x20] sm:$0xff]
    %v1414 = vld [vmem:[#allocation3 + $0x28] sm:$0xff]
    %v1415 = vld [vmem:[#allocation3 + $0x30] sm:$0xff]
    %v1416 = vld [vmem:[#allocation3 + $0x38] sm:$0xff]
    %v1417 = vld [vmem:[#allocation3 + $0x40] sm:$0xff]
    %v1418 = vld [vmem:[#allocation3 + $0x48] sm:$0xff]
    %v1419 = vld [vmem:[#allocation3 + $0x50] sm:$0xff]
    %v1420 = vld [vmem:[#allocation3 + $0x58] sm:$0xff]
    %v1421 = vld [vmem:[#allocation3 + $0x60] sm:$0xff]
    %v1422 = vld [vmem:[#allocation3 + $0x68] sm:$0xff]
    %v1423 = vld [vmem:[#allocation3 + $0x70] sm:$0xff]
    %v1424 = vld [vmem:[#allocation3 + $0x78] sm:$0xff]
    %v1425 = vld [vmem:[#allocation3 + $0x80] sm:$0xff]
    %v1426 = vld [vmem:[#allocation3 + $0x88] sm:$0xff]
    %v1427 = vld [vmem:[#allocation3 + $0x90] sm:$0xff]
    %v1428 = vld [vmem:[#allocation3 + $0x98] sm:$0xff]
    %v1429 = vld [vmem:[#allocation3 + $0xa0] sm:$0xff]
    %v1430 = vld [vmem:[#allocation3 + $0xa8] sm:$0xff]
    %v1431 = vld [vmem:[#allocation3 + $0xb0] sm:$0xff]
    %v1432 = vld [vmem:[#allocation3 + $0xb8] sm:$0xff]
    %v1433 = vld [vmem:[#allocation3 + $0xc0] sm:$0xff]
    %v1434 = vld [vmem:[#allocation3 + $0xc8] sm:$0xff]
    %v1435 = vld [vmem:[#allocation3 + $0xd0] sm:$0xff]
    %v1436 = vld [vmem:[#allocation3 + $0xd8] sm:$0xff]
    %v1437 = vld [vmem:[#allocation3 + $0xe0] sm:$0xff]
    %v1438 = vld [vmem:[#allocation3 + $0xe8] sm:$0xff]
    %v1439 = vld [vmem:[#allocation3 + $0xf0] sm:$0xff]
    %v1440 = vld [vmem:[#allocation3 + $0xf8] sm:$0xff]
    %v1441 = vld [vmem:[#allocation3 + $0x100] sm:$0xff]
    %v1442 = vld [vmem:[#allocation3 + $0x108] sm:$0xff]
    %v1443 = vld [vmem:[#allocation3 + $0x110] sm:$0xff]
    %v1444 = vld [vmem:[#allocation3 + $0x118] sm:$0xff]
    %v1445 = vld [vmem:[#allocation3 + $0x120] sm:$0xff]
    %v1446 = vld [vmem:[#allocation3 + $0x128] sm:$0xff]
    %v1447 = vld [vmem:[#allocation3 + $0x130] sm:$0xff]
    %v1448 = vld [vmem:[#allocation3 + $0x138] sm:$0xff]
    %v1449 = vld [vmem:[#allocation3 + $0x140] sm:$0xff]
    %v1450 = vld [vmem:[#allocation3 + $0x148] sm:$0xff]
    %v1451 = vld [vmem:[#allocation3 + $0x150] sm:$0xff]
    %v1452 = vld [vmem:[#allocation3 + $0x158] sm:$0xff]
    %v1453 = vld [vmem:[#allocation3 + $0x160] sm:$0xff]
    %v1454 = vld [vmem:[#allocation3 + $0x168] sm:$0xff]
    %v1455 = vld [vmem:[#allocation3 + $0x170] sm:$0xff]
    %v1456 = vld [vmem:[#allocation3 + $0x178] sm:$0xff]
    %v1457 = vld [vmem:[#allocation3 + $0x180] sm:$0xff]
    %v1458 = vld [vmem:[#allocation3 + $0x188] sm:$0xff]
    %v1459 = vld [vmem:[#allocation3 + $0x190] sm:$0xff]
    %v1460 = vld [vmem:[#allocation3 + $0x198] sm:$0xff]
    %v1461 = vld [vmem:[#allocation3 + $0x1a0] sm:$0xff]
    %v1462 = vld [vmem:[#allocation3 + $0x1a8] sm:$0xff]
    %v1463 = vld [vmem:[#allocation3 + $0x1b0] sm:$0xff]
    %v1464 = vld [vmem:[#allocation3 + $0x1b8] sm:$0xff]
    %v1465 = vld [vmem:[#allocation3 + $0x1c0] sm:$0xff]
    %v1466 = vld [vmem:[#allocation3 + $0x1c8] sm:$0xff]
    %v1467 = vld [vmem:[#allocation3 + $0x1d0] sm:$0xff]
    %v1468 = vld [vmem:[#allocation3 + $0x1d8] sm:$0xff]
    %v1469 = vld [vmem:[#allocation3 + $0x1e0] sm:$0xff]
    %v1470 = vld [vmem:[#allocation3 + $0x1e8] sm:$0xff]
    %v1471 = vld [vmem:[#allocation3 + $0x1f0] sm:$0xff]
    %v1472 = vld [vmem:[#allocation3 + $0x1f8] sm:$0xff]
    %v1473 = vld [vmem:[#allocation3 + $0x200] sm:$0xff]
    %v1474 = vld [vmem:[#allocation3 + $0x208] sm:$0xff]
    %v1475 = vld [vmem:[#allocation3 + $0x210] sm:$0xff]
    %v1476 = vld [vmem:[#allocation3 + $0x218] sm:$0xff]
    %v1477 = vld [vmem:[#allocation3 + $0x220] sm:$0xff]
    %v1478 = vld [vmem:[#allocation3 + $0x228] sm:$0xff]
    %v1479 = vld [vmem:[#allocation3 + $0x230] sm:$0xff]
    %v1480 = vld [vmem:[#allocation3 + $0x238] sm:$0xff]
    %v1481 = vld [vmem:[#allocation3 + $0x240] sm:$0xff]
    %v1482 = vld [vmem:[#allocation3 + $0x248] sm:$0xff]
    %v1483 = vld [vmem:[#allocation3 + $0x250] sm:$0xff]
    %v1484 = vld [vmem:[#allocation3 + $0x258] sm:$0xff]
    %v1485 = vld [vmem:[#allocation3 + $0x260] sm:$0xff]
    %v1486 = vld [vmem:[#allocation3 + $0x268] sm:$0xff]
    %v1487 = vld [vmem:[#allocation3 + $0x270] sm:$0xff]
    %v1488 = vld [vmem:[#allocation3 + $0x278] sm:$0xff]
    %v1489 = vld [vmem:[#allocation3 + $0x280] sm:$0xff]
    %v1490 = vld [vmem:[#allocation3 + $0x288] sm:$0xff]
    %v1491 = vld [vmem:[#allocation3 + $0x290] sm:$0xff]
    %v1492 = vld [vmem:[#allocation3 + $0x298] sm:$0xff]
    %v1493 = vld [vmem:[#allocation3 + $0x2a0] sm:$0xff]
    %v1494 = vld [vmem:[#allocation3 + $0x2a8] sm:$0xff]
    %v1495 = vld [vmem:[#allocation3 + $0x2b0] sm:$0xff]
    %v1496 = vld [vmem:[#allocation3 + $0x2b8] sm:$0xff]
    %v1497 = vld [vmem:[#allocation3 + $0x2c0] sm:$0xff]
    %v1498 = vld [vmem:[#allocation3 + $0x2c8] sm:$0xff]
    %v1499 = vld [vmem:[#allocation3 + $0x2d0] sm:$0xff]
    %v1500 = vld [vmem:[#allocation3 + $0x2d8] sm:$0xff]
    %v1501 = vld [vmem:[#allocation3 + $0x2e0] sm:$0xff]
    %v1502 = vld [vmem:[#allocation3 + $0x2e8] sm:$0xff]
    %v1503 = vld [vmem:[#allocation3 + $0x2f0] sm:$0xff]
    %v1504 = vld [vmem:[#allocation3 + $0x2f8] sm:$0xff]
    %v1505 = vld [vmem:[#allocation3 + $0x300] sm:$0xff]
    %v1506 = vld [vmem:[#allocation3 + $0x308] sm:$0xff]
    %v1507 = vld [vmem:[#allocation3 + $0x310] sm:$0xff]
    %v1508 = vld [vmem:[#allocation3 + $0x318] sm:$0xff]
    %v1509 = vld [vmem:[#allocation3 + $0x320] sm:$0xff]
    %v1510 = vld [vmem:[#allocation3 + $0x328] sm:$0xff]
    %v1511 = vld [vmem:[#allocation3 + $0x330] sm:$0xff]
    %v1512 = vld [vmem:[#allocation3 + $0x338] sm:$0xff]
    %v1513 = vld [vmem:[#allocation3 + $0x340] sm:$0xff]
    %v1514 = vld [vmem:[#allocation3 + $0x348] sm:$0xff]
    %v1515 = vld [vmem:[#allocation3 + $0x350] sm:$0xff]
    %v1516 = vld [vmem:[#allocation3 + $0x358] sm:$0xff]
    %v1517 = vld [vmem:[#allocation3 + $0x360] sm:$0xff]
    %v1518 = vld [vmem:[#allocation3 + $0x368] sm:$0xff]
    %v1519 = vld [vmem:[#allocation3 + $0x370] sm:$0xff]
    %v1520 = vld [vmem:[#allocation3 + $0x378] sm:$0xff]
    %v1521 = vld [vmem:[#allocation3 + $0x380] sm:$0xff]
    %v1522 = vld [vmem:[#allocation3 + $0x388] sm:$0xff]
    %v1523 = vld [vmem:[#allocation3 + $0x390] sm:$0xff]
    %v1524 = vld [vmem:[#allocation3 + $0x398] sm:$0xff]
    %v1525 = vld [vmem:[#allocation3 + $0x3a0] sm:$0xff]
    %v1526 = vld [vmem:[#allocation3 + $0x3a8] sm:$0xff]
    %v1527 = vld [vmem:[#allocation3 + $0x3b0] sm:$0xff]
    %v1528 = vld [vmem:[#allocation3 + $0x3b8] sm:$0xff]
    %v1529 = vld [vmem:[#allocation3 + $0x3c0] sm:$0xff]
    %v1530 = vld [vmem:[#allocation3 + $0x3c8] sm:$0xff]
    %v1531 = vld [vmem:[#allocation3 + $0x3d0] sm:$0xff]
    %v1532 = vld [vmem:[#allocation3 + $0x3d8] sm:$0xff]
    %v1533 = vld [vmem:[#allocation3 + $0x3e0] sm:$0xff]
    %v1534 = vld [vmem:[#allocation3 + $0x3e8] sm:$0xff]
    %v1535 = vld [vmem:[#allocation3 + $0x3f0] sm:$0xff]
    %v1536 = vld [vmem:[#allocation3 + $0x3f8] sm:$0xff]
    %v1537 = vld [vmem:[#allocation3 + $0x400] sm:$0xff]
    %v1538 = vld [vmem:[#allocation3 + $0x408] sm:$0xff]
    %v1539 = vld [vmem:[#allocation3 + $0x410] sm:$0xff]
    %v1540 = vld [vmem:[#allocation3 + $0x418] sm:$0xff]
    %v1541 = vld [vmem:[#allocation3 + $0x420] sm:$0xff]
    %v1542 = vld [vmem:[#allocation3 + $0x428] sm:$0xff]
    %v1543 = vld [vmem:[#allocation3 + $0x430] sm:$0xff]
    %v1544 = vld [vmem:[#allocation3 + $0x438] sm:$0xff]
    %v1545 = vld [vmem:[#allocation3 + $0x440] sm:$0xff]
    %v1546 = vld [vmem:[#allocation3 + $0x448] sm:$0xff]
    %v1547 = vld [vmem:[#allocation3 + $0x450] sm:$0xff]
    %v1548 = vld [vmem:[#allocation3 + $0x458] sm:$0xff]
    %v1549 = vld [vmem:[#allocation3 + $0x460] sm:$0xff]
    %v1550 = vld [vmem:[#allocation3 + $0x468] sm:$0xff]
    %v1551 = vld [vmem:[#allocation3 + $0x470] sm:$0xff]
    %v1552 = vld [vmem:[#allocation3 + $0x478] sm:$0xff]
    %v1553 = vld [vmem:[#allocation3 + $0x480] sm:$0xff]
    %v1554 = vld [vmem:[#allocation3 + $0x488] sm:$0xff]
    %v1555 = vld [vmem:[#allocation3 + $0x490] sm:$0xff]
    %v1556 = vld [vmem:[#allocation3 + $0x498] sm:$0xff]
    %v1557 = vld [vmem:[#allocation3 + $0x4a0] sm:$0xff]
    %v1558 = vld [vmem:[#allocation3 + $0x4a8] sm:$0xff]
    %v1559 = vld [vmem:[#allocation3 + $0x4b0] sm:$0xff]
    %v1560 = vld [vmem:[#allocation3 + $0x4b8] sm:$0xff]
    %v1561 = vld [vmem:[#allocation3 + $0x4c0] sm:$0xff]
    %v1562 = vld [vmem:[#allocation3 + $0x4c8] sm:$0xff]
    %v1563 = vld [vmem:[#allocation3 + $0x4d0] sm:$0xff]
    %v1564 = vld [vmem:[#allocation3 + $0x4d8] sm:$0xff]
    %v1565 = vld [vmem:[#allocation3 + $0x4e0] sm:$0xff]
    %v1566 = vld [vmem:[#allocation3 + $0x4e8] sm:$0xff]
    %v1567 = vld [vmem:[#allocation3 + $0x4f0] sm:$0xff]
    %v1568 = vld [vmem:[#allocation3 + $0x4f8] sm:$0xff]
    %v1569 = vld [vmem:[#allocation3 + $0x500] sm:$0xff]
    %v1570 = vld [vmem:[#allocation3 + $0x508] sm:$0xff]
    %v1571 = vld [vmem:[#allocation3 + $0x510] sm:$0xff]
    %v1572 = vld [vmem:[#allocation3 + $0x518] sm:$0xff]
    %v1573 = vld [vmem:[#allocation3 + $0x520] sm:$0xff]
    %v1574 = vld [vmem:[#allocation3 + $0x528] sm:$0xff]
    %v1575 = vld [vmem:[#allocation3 + $0x530] sm:$0xff]
    %v1576 = vld [vmem:[#allocation3 + $0x538] sm:$0xff]
    %v1577 = vld [vmem:[#allocation3 + $0x540] sm:$0xff]
    %v1578 = vld [vmem:[#allocation3 + $0x548] sm:$0xff]
    %v1579 = vld [vmem:[#allocation3 + $0x550] sm:$0xff]
    %v1580 = vld [vmem:[#allocation3 + $0x558] sm:$0xff]
    %v1581 = vld [vmem:[#allocation3 + $0x560] sm:$0xff]
    %v1582 = vld [vmem:[#allocation3 + $0x568] sm:$0xff]
    %v1583 = vld [vmem:[#allocation3 + $0x570] sm:$0xff]
    %v1584 = vld [vmem:[#allocation3 + $0x578] sm:$0xff]
    %v1585 = vld [vmem:[#allocation3 + $0x580] sm:$0xff]
    %v1586 = vld [vmem:[#allocation3 + $0x588] sm:$0xff]
    %v1587 = vld [vmem:[#allocation3 + $0x590] sm:$0xff]
    %v1588 = vld [vmem:[#allocation3 + $0x598] sm:$0xff]
    %v1589 = vld [vmem:[#allocation3 + $0x5a0] sm:$0xff]
    %v1590 = vld [vmem:[#allocation3 + $0x5a8] sm:$0xff]
    %v1591 = vld [vmem:[#allocation3 + $0x5b0] sm:$0xff]
    %v1592 = vld [vmem:[#allocation3 + $0x5b8] sm:$0xff]
    %v1593 = vld [vmem:[#allocation3 + $0x5c0] sm:$0xff]
    %v1594 = vld [vmem:[#allocation3 + $0x5c8] sm:$0xff]
    %v1595 = vld [vmem:[#allocation3 + $0x5d0] sm:$0xff]
    %v1596 = vld [vmem:[#allocation3 + $0x5d8] sm:$0xff]
    %v1597 = vld [vmem:[#allocation3 + $0x5e0] sm:$0xff]
    %v1598 = vld [vmem:[#allocation3 + $0x5e8] sm:$0xff]
    %v1599 = vld [vmem:[#allocation3 + $0x5f0] sm:$0xff]
    %v1600 = vld [vmem:[#allocation3 + $0x5f8] sm:$0xff]
    %v1601 = vld [vmem:[#allocation3 + $0x600] sm:$0xff]
    %v1602 = vld [vmem:[#allocation3 + $0x608] sm:$0xff]
    %v1603 = vld [vmem:[#allocation3 + $0x610] sm:$0xff]
    %v1604 = vld [vmem:[#allocation3 + $0x618] sm:$0xff]
    %v1605 = vld [vmem:[#allocation3 + $0x620] sm:$0xff]
    %v1606 = vld [vmem:[#allocation3 + $0x628] sm:$0xff]
    %v1607 = vld [vmem:[#allocation3 + $0x630] sm:$0xff]
    %v1608 = vld [vmem:[#allocation3 + $0x638] sm:$0xff]
    %v1609 = vld [vmem:[#allocation3 + $0x640] sm:$0xff]
    %v1610 = vld [vmem:[#allocation3 + $0x648] sm:$0xff]
    %v1611 = vld [vmem:[#allocation3 + $0x650] sm:$0xff]
    %v1612 = vld [vmem:[#allocation3 + $0x658] sm:$0xff]
    %v1613 = vld [vmem:[#allocation3 + $0x660] sm:$0xff]
    %v1614 = vld [vmem:[#allocation3 + $0x668] sm:$0xff]
    %v1615 = vld [vmem:[#allocation3 + $0x670] sm:$0xff]
    %v1616 = vld [vmem:[#allocation3 + $0x678] sm:$0xff]
    %v1617 = vld [vmem:[#allocation3 + $0x680] sm:$0xff]
    %v1618 = vld [vmem:[#allocation3 + $0x688] sm:$0xff]
    %v1619 = vld [vmem:[#allocation3 + $0x690] sm:$0xff]
    %v1620 = vld [vmem:[#allocation3 + $0x698] sm:$0xff]
    %v1621 = vld [vmem:[#allocation3 + $0x6a0] sm:$0xff]
    %v1622 = vld [vmem:[#allocation3 + $0x6a8] sm:$0xff]
    %v1623 = vld [vmem:[#allocation3 + $0x6b0] sm:$0xff]
    %v1624 = vld [vmem:[#allocation3 + $0x6b8] sm:$0xff]
    %v1625 = vld [vmem:[#allocation3 + $0x6c0] sm:$0xff]
    %v1626 = vld [vmem:[#allocation3 + $0x6c8] sm:$0xff]
    %v1627 = vld [vmem:[#allocation3 + $0x6d0] sm:$0xff]
    %v1628 = vld [vmem:[#allocation3 + $0x6d8] sm:$0xff]
    %v1629 = vld [vmem:[#allocation3 + $0x6e0] sm:$0xff]
    %v1630 = vld [vmem:[#allocation3 + $0x6e8] sm:$0xff]
    %v1631 = vld [vmem:[#allocation3 + $0x6f0] sm:$0xff]
    %v1632 = vld [vmem:[#allocation3 + $0x6f8] sm:$0xff]
    %v1633 = vld [vmem:[#allocation3 + $0x700] sm:$0xff]
    %v1634 = vld [vmem:[#allocation3 + $0x708] sm:$0xff]
    %v1635 = vld [vmem:[#allocation3 + $0x710] sm:$0xff]
    %v1636 = vld [vmem:[#allocation3 + $0x718] sm:$0xff]
    %v1637 = vld [vmem:[#allocation3 + $0x720] sm:$0xff]
    %v1638 = vld [vmem:[#allocation3 + $0x728] sm:$0xff]
    %v1639 = vld [vmem:[#allocation3 + $0x730] sm:$0xff]
    %v1640 = vld [vmem:[#allocation3 + $0x738] sm:$0xff]
    %v1641 = vld [vmem:[#allocation3 + $0x740] sm:$0xff]
    %v1642 = vld [vmem:[#allocation3 + $0x748] sm:$0xff]
    %v1643 = vld [vmem:[#allocation3 + $0x750] sm:$0xff]
    %v1644 = vld [vmem:[#allocation3 + $0x758] sm:$0xff]
    %v1645 = vld [vmem:[#allocation3 + $0x760] sm:$0xff]
    %v1646 = vld [vmem:[#allocation3 + $0x768] sm:$0xff]
    %v1647 = vld [vmem:[#allocation3 + $0x770] sm:$0xff]
    %v1648 = vld [vmem:[#allocation3 + $0x778] sm:$0xff]
    %v1649 = vld [vmem:[#allocation3 + $0x780] sm:$0xff]
    %v1650 = vld [vmem:[#allocation3 + $0x788] sm:$0xff]
    %v1651 = vld [vmem:[#allocation3 + $0x790] sm:$0xff]
    %v1652 = vld [vmem:[#allocation3 + $0x798] sm:$0xff]
    %v1653 = vld [vmem:[#allocation3 + $0x7a0] sm:$0xff]
    %v1654 = vld [vmem:[#allocation3 + $0x7a8] sm:$0xff]
    %v1655 = vld [vmem:[#allocation3 + $0x7b0] sm:$0xff]
    %v1656 = vld [vmem:[#allocation3 + $0x7b8] sm:$0xff]
    %v1657 = vld [vmem:[#allocation3 + $0x7c0] sm:$0xff]
    %v1658 = vld [vmem:[#allocation3 + $0x7c8] sm:$0xff]
    %v1659 = vld [vmem:[#allocation3 + $0x7d0] sm:$0xff]
    %v1660 = vld [vmem:[#allocation3 + $0x7d8] sm:$0xff]
    %v1661 = vld [vmem:[#allocation3 + $0x7e0] sm:$0xff]
    %v1662 = vld [vmem:[#allocation3 + $0x7e8] sm:$0xff]
    %v1663 = vld [vmem:[#allocation3 + $0x7f0] sm:$0xff]
    %v1664 = vld [vmem:[#allocation3 + $0x7f8] sm:$0xff]
    %v1665 = vld [vmem:[#allocation3 + $0x800] sm:$0xff]
    %v1666 = vld [vmem:[#allocation3 + $0x808] sm:$0xff]
    %v1667 = vld [vmem:[#allocation3 + $0x810] sm:$0xff]
    %v1668 = vld [vmem:[#allocation3 + $0x818] sm:$0xff]
    %v1669 = vld [vmem:[#allocation3 + $0x820] sm:$0xff]
    %v1670 = vld [vmem:[#allocation3 + $0x828] sm:$0xff]
    %v1671 = vld [vmem:[#allocation3 + $0x830] sm:$0xff]
    %v1672 = vld [vmem:[#allocation3 + $0x838] sm:$0xff]
    %v1673 = vld [vmem:[#allocation3 + $0x840] sm:$0xff]
    %v1674 = vld [vmem:[#allocation3 + $0x848] sm:$0xff]
    %v1675 = vld [vmem:[#allocation3 + $0x850] sm:$0xff]
    %v1676 = vld [vmem:[#allocation3 + $0x858] sm:$0xff]
    %v1677 = vld [vmem:[#allocation3 + $0x860] sm:$0xff]
    %v1678 = vld [vmem:[#allocation3 + $0x868] sm:$0xff]
    %v1679 = vld [vmem:[#allocation3 + $0x870] sm:$0xff]
    %v1680 = vld [vmem:[#allocation3 + $0x878] sm:$0xff]
    %v1681 = vld [vmem:[#allocation3 + $0x880] sm:$0xff]
    %v1682 = vld [vmem:[#allocation3 + $0x888] sm:$0xff]
    %v1683 = vld [vmem:[#allocation3 + $0x890] sm:$0xff]
    %v1684 = vld [vmem:[#allocation3 + $0x898] sm:$0xff]
    %v1685 = vld [vmem:[#allocation3 + $0x8a0] sm:$0xff]
    %v1686 = vld [vmem:[#allocation3 + $0x8a8] sm:$0xff]
    %v1687 = vld [vmem:[#allocation3 + $0x8b0] sm:$0xff]
    %v1688 = vld [vmem:[#allocation3 + $0x8b8] sm:$0xff]
    %v1689 = vld [vmem:[#allocation3 + $0x8c0] sm:$0xff]
    %v1690 = vld [vmem:[#allocation3 + $0x8c8] sm:$0xff]
    %v1691 = vld [vmem:[#allocation3 + $0x8d0] sm:$0xff]
    %v1692 = vld [vmem:[#allocation3 + $0x8d8] sm:$0xff]
    %v1693 = vld [vmem:[#allocation3 + $0x8e0] sm:$0xff]
    %v1694 = vld [vmem:[#allocation3 + $0x8e8] sm:$0xff]
    %v1695 = vld [vmem:[#allocation3 + $0x8f0] sm:$0xff]
    %v1696 = vld [vmem:[#allocation3 + $0x8f8] sm:$0xff]
    %v1697 = vld [vmem:[#allocation3 + $0x900] sm:$0xff]
    %v1698 = vld [vmem:[#allocation3 + $0x908] sm:$0xff]
    %v1699 = vld [vmem:[#allocation3 + $0x910] sm:$0xff]
    %v1700 = vld [vmem:[#allocation3 + $0x918] sm:$0xff]
    %v1701 = vld [vmem:[#allocation3 + $0x920] sm:$0xff]
    %v1702 = vld [vmem:[#allocation3 + $0x928] sm:$0xff]
    %v1703 = vld [vmem:[#allocation3 + $0x930] sm:$0xff]
    %v1704 = vld [vmem:[#allocation3 + $0x938] sm:$0xff]
    %v1705 = vld [vmem:[#allocation3 + $0x940] sm:$0xff]
    %v1706 = vld [vmem:[#allocation3 + $0x948] sm:$0xff]
    %v1707 = vld [vmem:[#allocation3 + $0x950] sm:$0xff]
    %v1708 = vld [vmem:[#allocation3 + $0x958] sm:$0xff]
    %v1709 = vld [vmem:[#allocation3 + $0x960] sm:$0xff]
    %v1710 = vld [vmem:[#allocation3 + $0x968] sm:$0xff]
    %v1711 = vld [vmem:[#allocation3 + $0x970] sm:$0xff]
    %v1712 = vld [vmem:[#allocation3 + $0x978] sm:$0xff]
    %v1713 = vld [vmem:[#allocation3 + $0x980] sm:$0xff]
    %v1714 = vld [vmem:[#allocation3 + $0x988] sm:$0xff]
    %v1715 = vld [vmem:[#allocation3 + $0x990] sm:$0xff]
    %v1716 = vld [vmem:[#allocation3 + $0x998] sm:$0xff]
    %v1717 = vld [vmem:[#allocation3 + $0x9a0] sm:$0xff]
    %v1718 = vld [vmem:[#allocation3 + $0x9a8] sm:$0xff]
    %v1719 = vld [vmem:[#allocation3 + $0x9b0] sm:$0xff]
    %v1720 = vld [vmem:[#allocation3 + $0x9b8] sm:$0xff]
    %v1721 = vld [vmem:[#allocation3 + $0x9c0] sm:$0xff]
    %v1722 = vld [vmem:[#allocation3 + $0x9c8] sm:$0xff]
    %v1723 = vld [vmem:[#allocation3 + $0x9d0] sm:$0xff]
    %v1724 = vld [vmem:[#allocation3 + $0x9d8] sm:$0xff]
    %v1725 = vld [vmem:[#allocation3 + $0x9e0] sm:$0xff]
    %v1726 = vld [vmem:[#allocation3 + $0x9e8] sm:$0xff]
    %v1727 = vld [vmem:[#allocation3 + $0x9f0] sm:$0xff]
    %v1728 = vld [vmem:[#allocation3 + $0x9f8] sm:$0xff]
    %v1729 = vld [vmem:[#allocation3 + $0xa00] sm:$0xff]
    %v1730 = vld [vmem:[#allocation3 + $0xa08] sm:$0xff]
    %v1731 = vld [vmem:[#allocation3 + $0xa10] sm:$0xff]
    %v1732 = vld [vmem:[#allocation3 + $0xa18] sm:$0xff]
    %v1733 = vld [vmem:[#allocation3 + $0xa20] sm:$0xff]
    %v1734 = vld [vmem:[#allocation3 + $0xa28] sm:$0xff]
    %v1735 = vld [vmem:[#allocation3 + $0xa30] sm:$0xff]
    %v1736 = vld [vmem:[#allocation3 + $0xa38] sm:$0xff]
    %v1737 = vld [vmem:[#allocation3 + $0xa40] sm:$0xff]
    %v1738 = vld [vmem:[#allocation3 + $0xa48] sm:$0xff]
    %v1739 = vld [vmem:[#allocation3 + $0xa50] sm:$0xff]
    %v1740 = vld [vmem:[#allocation3 + $0xa58] sm:$0xff]
    %v1741 = vld [vmem:[#allocation3 + $0xa60] sm:$0xff]
    %v1742 = vld [vmem:[#allocation3 + $0xa68] sm:$0xff]
    %v1743 = vld [vmem:[#allocation3 + $0xa70] sm:$0xff]
    %v1744 = vld [vmem:[#allocation3 + $0xa78] sm:$0xff]
    %v1745 = vld [vmem:[#allocation3 + $0xa80] sm:$0xff]
    %v1746 = vld [vmem:[#allocation3 + $0xa88] sm:$0xff]
    %v1747 = vld [vmem:[#allocation3 + $0xa90] sm:$0xff]
    %v1748 = vld [vmem:[#allocation3 + $0xa98] sm:$0xff]
    %v1749 = vld [vmem:[#allocation3 + $0xaa0] sm:$0xff]
    %v1750 = vld [vmem:[#allocation3 + $0xaa8] sm:$0xff]
    %v1751 = vld [vmem:[#allocation3 + $0xab0] sm:$0xff]
    %v1752 = vld [vmem:[#allocation3 + $0xab8] sm:$0xff]
    %v1753 = vld [vmem:[#allocation3 + $0xac0] sm:$0xff]
    %v1754 = vld [vmem:[#allocation3 + $0xac8] sm:$0xff]
    %v1755 = vld [vmem:[#allocation3 + $0xad0] sm:$0xff]
    %v1756 = vld [vmem:[#allocation3 + $0xad8] sm:$0xff]
    %v1757 = vld [vmem:[#allocation3 + $0xae0] sm:$0xff]
    %v1758 = vld [vmem:[#allocation3 + $0xae8] sm:$0xff]
    %v1759 = vld [vmem:[#allocation3 + $0xaf0] sm:$0xff]
    %v1760 = vld [vmem:[#allocation3 + $0xaf8] sm:$0xff]
    %v1761 = vld [vmem:[#allocation3 + $0xb00] sm:$0xff]
    %v1762 = vld [vmem:[#allocation3 + $0xb08] sm:$0xff]
    %v1763 = vld [vmem:[#allocation3 + $0xb10] sm:$0xff]
    %v1764 = vld [vmem:[#allocation3 + $0xb18] sm:$0xff]
    %v1765 = vld [vmem:[#allocation3 + $0xb20] sm:$0xff]
    %v1766 = vld [vmem:[#allocation3 + $0xb28] sm:$0xff]
    %v1767 = vld [vmem:[#allocation3 + $0xb30] sm:$0xff]
    %v1768 = vld [vmem:[#allocation3 + $0xb38] sm:$0xff]
    %v1769 = vld [vmem:[#allocation3 + $0xb40] sm:$0xff]
    %v1770 = vld [vmem:[#allocation3 + $0xb48] sm:$0xff]
    %v1771 = vld [vmem:[#allocation3 + $0xb50] sm:$0xff]
    %v1772 = vld [vmem:[#allocation3 + $0xb58] sm:$0xff]
    %v1773 = vld [vmem:[#allocation3 + $0xb60] sm:$0xff]
    %v1774 = vld [vmem:[#allocation3 + $0xb68] sm:$0xff]
    %v1775 = vld [vmem:[#allocation3 + $0xb70] sm:$0xff]
    %v1776 = vld [vmem:[#allocation3 + $0xb78] sm:$0xff]
    %v1777 = vld [vmem:[#allocation3 + $0xb80] sm:$0xff]
    %v1778 = vld [vmem:[#allocation3 + $0xb88] sm:$0xff]
    %v1779 = vld [vmem:[#allocation3 + $0xb90] sm:$0xff]
    %v1780 = vld [vmem:[#allocation3 + $0xb98] sm:$0xff]
    %v1781 = vld [vmem:[#allocation3 + $0xba0] sm:$0xff]
    %v1782 = vld [vmem:[#allocation3 + $0xba8] sm:$0xff]
    %v1783 = vld [vmem:[#allocation3 + $0xbb0] sm:$0xff]
    %v1784 = vld [vmem:[#allocation3 + $0xbb8] sm:$0xff]
    %v1785 = vld [vmem:[#allocation3 + $0xbc0] sm:$0xff]
    %v1786 = vld [vmem:[#allocation3 + $0xbc8] sm:$0xff]
    %v1787 = vld [vmem:[#allocation3 + $0xbd0] sm:$0xff]
    %v1788 = vld [vmem:[#allocation3 + $0xbd8] sm:$0xff]
    %v1789 = vld [vmem:[#allocation3 + $0xbe0] sm:$0xff]
    %v1790 = vld [vmem:[#allocation3 + $0xbe8] sm:$0xff]
    %v1791 = vld [vmem:[#allocation3 + $0xbf0] sm:$0xff]
    %v1792 = vld [vmem:[#allocation3 + $0xbf8] sm:$0xff]
    %v1793 = vld [vmem:[#allocation3 + $0xc00] sm:$0xff]
    %v1794 = vld [vmem:[#allocation3 + $0xc08] sm:$0xff]
    %v1795 = vld [vmem:[#allocation3 + $0xc10] sm:$0xff]
    %v1796 = vld [vmem:[#allocation3 + $0xc18] sm:$0xff]
    %v1797 = vld [vmem:[#allocation3 + $0xc20] sm:$0xff]
    %v1798 = vld [vmem:[#allocation3 + $0xc28] sm:$0xff]
    %v1799 = vld [vmem:[#allocation3 + $0xc30] sm:$0xff]
    %v1800 = vld [vmem:[#allocation3 + $0xc38] sm:$0xff]
    %v1801 = vld [vmem:[#allocation3 + $0xc40] sm:$0xff]
    %v1802 = vld [vmem:[#allocation3 + $0xc48] sm:$0xff]
    %v1803 = vld [vmem:[#allocation3 + $0xc50] sm:$0xff]
    %v1804 = vld [vmem:[#allocation3 + $0xc58] sm:$0xff]
    %v1805 = vld [vmem:[#allocation3 + $0xc60] sm:$0xff]
    %v1806 = vld [vmem:[#allocation3 + $0xc68] sm:$0xff]
    %v1807 = vld [vmem:[#allocation3 + $0xc70] sm:$0xff]
    %v1808 = vld [vmem:[#allocation3 + $0xc78] sm:$0xff]
    %v1809 = vld [vmem:[#allocation10] sm:$0xff]
    %v1810 = vld [vmem:[#allocation10 + $0x8] sm:$0xff]
    %v1811 = vld [vmem:[#allocation10 + $0x10] sm:$0xff]
    %v1812 = vld [vmem:[#allocation10 + $0x18] sm:$0xff]
    %v1813 = vld [vmem:[#allocation10 + $0x20] sm:$0xff]
    %v1814 = vld [vmem:[#allocation10 + $0x28] sm:$0xff]
    %v1815 = vld [vmem:[#allocation10 + $0x30] sm:$0xff]
    %v1816 = vld [vmem:[#allocation10 + $0x38] sm:$0xff]
    %v1817 = vld [vmem:[#allocation10 + $0x40] sm:$0xff]
    %v1818 = vld [vmem:[#allocation10 + $0x48] sm:$0xff]
    %v1819 = vld [vmem:[#allocation10 + $0x50] sm:$0xff]
    %v1820 = vld [vmem:[#allocation10 + $0x58] sm:$0xff]
    %v1821 = vld [vmem:[#allocation10 + $0x60] sm:$0xff]
    %v1822 = vld [vmem:[#allocation10 + $0x68] sm:$0xff]
    %v1823 = vld [vmem:[#allocation10 + $0x70] sm:$0xff]
    %v1824 = vld [vmem:[#allocation10 + $0x78] sm:$0xff]
    %v1825 = vld [vmem:[#allocation10 + $0x80] sm:$0xff]
    %v1826 = vld [vmem:[#allocation10 + $0x88] sm:$0xff]
    %v1827 = vld [vmem:[#allocation10 + $0x90] sm:$0xff]
    %v1828 = vld [vmem:[#allocation10 + $0x98] sm:$0xff]
    %v1829 = vld [vmem:[#allocation10 + $0xa0] sm:$0xff]
    %v1830 = vld [vmem:[#allocation10 + $0xa8] sm:$0xff]
    %v1831 = vld [vmem:[#allocation10 + $0xb0] sm:$0xff]
    %v1832 = vld [vmem:[#allocation10 + $0xb8] sm:$0xff]
    %v1833 = vld [vmem:[#allocation10 + $0xc0] sm:$0xff]
    %v1834 = vld [vmem:[#allocation10 + $0xc8] sm:$0xff]
    %v1835 = vld [vmem:[#allocation10 + $0xd0] sm:$0xff]
    %v1836 = vld [vmem:[#allocation10 + $0xd8] sm:$0xff]
    %v1837 = vld [vmem:[#allocation10 + $0xe0] sm:$0xff]
    %v1838 = vld [vmem:[#allocation10 + $0xe8] sm:$0xff]
    %v1839 = vld [vmem:[#allocation10 + $0xf0] sm:$0xff]
    %v1840 = vld [vmem:[#allocation10 + $0xf8] sm:$0xff]
    %v1841 = vld [vmem:[#allocation10 + $0x100] sm:$0xff]
    %v1842 = vld [vmem:[#allocation10 + $0x108] sm:$0xff]
    %v1843 = vld [vmem:[#allocation10 + $0x110] sm:$0xff]
    %v1844 = vld [vmem:[#allocation10 + $0x118] sm:$0xff]
    %v1845 = vld [vmem:[#allocation10 + $0x120] sm:$0xff]
    %v1846 = vld [vmem:[#allocation10 + $0x128] sm:$0xff]
    %v1847 = vld [vmem:[#allocation10 + $0x130] sm:$0xff]
    %v1848 = vld [vmem:[#allocation10 + $0x138] sm:$0xff]
    %v1849 = vld [vmem:[#allocation10 + $0x140] sm:$0xff]
    %v1850 = vld [vmem:[#allocation10 + $0x148] sm:$0xff]
    %v1851 = vld [vmem:[#allocation10 + $0x150] sm:$0xff]
    %v1852 = vld [vmem:[#allocation10 + $0x158] sm:$0xff]
    %v1853 = vld [vmem:[#allocation10 + $0x160] sm:$0xff]
    %v1854 = vld [vmem:[#allocation10 + $0x168] sm:$0xff]
    %v1855 = vld [vmem:[#allocation10 + $0x170] sm:$0xff]
    %v1856 = vld [vmem:[#allocation10 + $0x178] sm:$0xff]
    %v1857 = vld [vmem:[#allocation10 + $0x180] sm:$0xff]
    %v1858 = vld [vmem:[#allocation10 + $0x188] sm:$0xff]
    %v1859 = vld [vmem:[#allocation10 + $0x190] sm:$0xff]
    %v1860 = vld [vmem:[#allocation10 + $0x198] sm:$0xff]
    %v1861 = vld [vmem:[#allocation10 + $0x1a0] sm:$0xff]
    %v1862 = vld [vmem:[#allocation10 + $0x1a8] sm:$0xff]
    %v1863 = vld [vmem:[#allocation10 + $0x1b0] sm:$0xff]
    %v1864 = vld [vmem:[#allocation10 + $0x1b8] sm:$0xff]
    %v1865 = vld [vmem:[#allocation10 + $0x1c0] sm:$0xff]
    %v1866 = vld [vmem:[#allocation10 + $0x1c8] sm:$0xff]
    %v1867 = vld [vmem:[#allocation10 + $0x1d0] sm:$0xff]
    %v1868 = vld [vmem:[#allocation10 + $0x1d8] sm:$0xff]
    %v1869 = vld [vmem:[#allocation10 + $0x1e0] sm:$0xff]
    %v1870 = vld [vmem:[#allocation10 + $0x1e8] sm:$0xff]
    %v1871 = vld [vmem:[#allocation10 + $0x1f0] sm:$0xff]
    %v1872 = vld [vmem:[#allocation10 + $0x1f8] sm:$0xff]
    %v1873 = vld [vmem:[#allocation10 + $0x200] sm:$0xff]
    %v1874 = vld [vmem:[#allocation10 + $0x208] sm:$0xff]
    %v1875 = vld [vmem:[#allocation10 + $0x210] sm:$0xff]
    %v1876 = vld [vmem:[#allocation10 + $0x218] sm:$0xff]
    %v1877 = vld [vmem:[#allocation10 + $0x220] sm:$0xff]
    %v1878 = vld [vmem:[#allocation10 + $0x228] sm:$0xff]
    %v1879 = vld [vmem:[#allocation10 + $0x230] sm:$0xff]
    %v1880 = vld [vmem:[#allocation10 + $0x238] sm:$0xff]
    %v1881 = vld [vmem:[#allocation10 + $0x240] sm:$0xff]
    %v1882 = vld [vmem:[#allocation10 + $0x248] sm:$0xff]
    %v1883 = vld [vmem:[#allocation10 + $0x250] sm:$0xff]
    %v1884 = vld [vmem:[#allocation10 + $0x258] sm:$0xff]
    %v1885 = vld [vmem:[#allocation10 + $0x260] sm:$0xff]
    %v1886 = vld [vmem:[#allocation10 + $0x268] sm:$0xff]
    %v1887 = vld [vmem:[#allocation10 + $0x270] sm:$0xff]
    %v1888 = vld [vmem:[#allocation10 + $0x278] sm:$0xff]
    %v1889 = vld [vmem:[#allocation10 + $0x280] sm:$0xff]
    %v1890 = vld [vmem:[#allocation10 + $0x288] sm:$0xff]
    %v1891 = vld [vmem:[#allocation10 + $0x290] sm:$0xff]
    %v1892 = vld [vmem:[#allocation10 + $0x298] sm:$0xff]
    %v1893 = vld [vmem:[#allocation10 + $0x2a0] sm:$0xff]
    %v1894 = vld [vmem:[#allocation10 + $0x2a8] sm:$0xff]
    %v1895 = vld [vmem:[#allocation10 + $0x2b0] sm:$0xff]
    %v1896 = vld [vmem:[#allocation10 + $0x2b8] sm:$0xff]
    %v1897 = vld [vmem:[#allocation10 + $0x2c0] sm:$0xff]
    %v1898 = vld [vmem:[#allocation10 + $0x2c8] sm:$0xff]
    %v1899 = vld [vmem:[#allocation10 + $0x2d0] sm:$0xff]
    %v1900 = vld [vmem:[#allocation10 + $0x2d8] sm:$0xff]
    %v1901 = vld [vmem:[#allocation10 + $0x2e0] sm:$0xff]
    %v1902 = vld [vmem:[#allocation10 + $0x2e8] sm:$0xff]
    %v1903 = vld [vmem:[#allocation10 + $0x2f0] sm:$0xff]
    %v1904 = vld [vmem:[#allocation10 + $0x2f8] sm:$0xff]
    %v1905 = vld [vmem:[#allocation10 + $0x300] sm:$0xff]
    %v1906 = vld [vmem:[#allocation10 + $0x308] sm:$0xff]
    %v1907 = vld [vmem:[#allocation10 + $0x310] sm:$0xff]
    %v1908 = vld [vmem:[#allocation10 + $0x318] sm:$0xff]
    %v1909 = vld [vmem:[#allocation10 + $0x320] sm:$0xff]
    %v1910 = vld [vmem:[#allocation10 + $0x328] sm:$0xff]
    %v1911 = vld [vmem:[#allocation10 + $0x330] sm:$0xff]
    %v1912 = vld [vmem:[#allocation10 + $0x338] sm:$0xff]
    %v1913 = vld [vmem:[#allocation10 + $0x340] sm:$0xff]
    %v1914 = vld [vmem:[#allocation10 + $0x348] sm:$0xff]
    %v1915 = vld [vmem:[#allocation10 + $0x350] sm:$0xff]
    %v1916 = vld [vmem:[#allocation10 + $0x358] sm:$0xff]
    %v1917 = vld [vmem:[#allocation10 + $0x360] sm:$0xff]
    %v1918 = vld [vmem:[#allocation10 + $0x368] sm:$0xff]
    %v1919 = vld [vmem:[#allocation10 + $0x370] sm:$0xff]
    %v1920 = vld [vmem:[#allocation10 + $0x378] sm:$0xff]
    %v1921 = vld [vmem:[#allocation10 + $0x380] sm:$0xff]
    %v1922 = vld [vmem:[#allocation10 + $0x388] sm:$0xff]
    %v1923 = vld [vmem:[#allocation10 + $0x390] sm:$0xff]
    %v1924 = vld [vmem:[#allocation10 + $0x398] sm:$0xff]
    %v1925 = vld [vmem:[#allocation10 + $0x3a0] sm:$0xff]
    %v1926 = vld [vmem:[#allocation10 + $0x3a8] sm:$0xff]
    %v1927 = vld [vmem:[#allocation10 + $0x3b0] sm:$0xff]
    %v1928 = vld [vmem:[#allocation10 + $0x3b8] sm:$0xff]
    %v1929 = vld [vmem:[#allocation10 + $0x3c0] sm:$0xff]
    %v1930 = vld [vmem:[#allocation10 + $0x3c8] sm:$0xff]
    %v1931 = vld [vmem:[#allocation10 + $0x3d0] sm:$0xff]
    %v1932 = vld [vmem:[#allocation10 + $0x3d8] sm:$0xff]
    %v1933 = vld [vmem:[#allocation10 + $0x3e0] sm:$0xff]
    %v1934 = vld [vmem:[#allocation10 + $0x3e8] sm:$0xff]
    %v1935 = vld [vmem:[#allocation10 + $0x3f0] sm:$0xff]
    %v1936 = vld [vmem:[#allocation10 + $0x3f8] sm:$0xff]
    %v1937 = vld [vmem:[#allocation10 + $0x400] sm:$0xff]
    %v1938 = vld [vmem:[#allocation10 + $0x408] sm:$0xff]
    %v1939 = vld [vmem:[#allocation10 + $0x410] sm:$0xff]
    %v1940 = vld [vmem:[#allocation10 + $0x418] sm:$0xff]
    %v1941 = vld [vmem:[#allocation10 + $0x420] sm:$0xff]
    %v1942 = vld [vmem:[#allocation10 + $0x428] sm:$0xff]
    %v1943 = vld [vmem:[#allocation10 + $0x430] sm:$0xff]
    %v1944 = vld [vmem:[#allocation10 + $0x438] sm:$0xff]
    %v1945 = vld [vmem:[#allocation10 + $0x440] sm:$0xff]
    %v1946 = vld [vmem:[#allocation10 + $0x448] sm:$0xff]
    %v1947 = vld [vmem:[#allocation10 + $0x450] sm:$0xff]
    %v1948 = vld [vmem:[#allocation10 + $0x458] sm:$0xff]
    %v1949 = vld [vmem:[#allocation10 + $0x460] sm:$0xff]
    %v1950 = vld [vmem:[#allocation10 + $0x468] sm:$0xff]
    %v1951 = vld [vmem:[#allocation10 + $0x470] sm:$0xff]
    %v1952 = vld [vmem:[#allocation10 + $0x478] sm:$0xff]
    %v1953 = vld [vmem:[#allocation10 + $0x480] sm:$0xff]
    %v1954 = vld [vmem:[#allocation10 + $0x488] sm:$0xff]
    %v1955 = vld [vmem:[#allocation10 + $0x490] sm:$0xff]
    %v1956 = vld [vmem:[#allocation10 + $0x498] sm:$0xff]
    %v1957 = vld [vmem:[#allocation10 + $0x4a0] sm:$0xff]
    %v1958 = vld [vmem:[#allocation10 + $0x4a8] sm:$0xff]
    %v1959 = vld [vmem:[#allocation10 + $0x4b0] sm:$0xff]
    %v1960 = vld [vmem:[#allocation10 + $0x4b8] sm:$0xff]
    %v1961 = vld [vmem:[#allocation10 + $0x4c0] sm:$0xff]
    %v1962 = vld [vmem:[#allocation10 + $0x4c8] sm:$0xff]
    %v1963 = vld [vmem:[#allocation10 + $0x4d0] sm:$0xff]
    %v1964 = vld [vmem:[#allocation10 + $0x4d8] sm:$0xff]
    %v1965 = vld [vmem:[#allocation10 + $0x4e0] sm:$0xff]
    %v1966 = vld [vmem:[#allocation10 + $0x4e8] sm:$0xff]
    %v1967 = vld [vmem:[#allocation10 + $0x4f0] sm:$0xff]
    %v1968 = vld [vmem:[#allocation10 + $0x4f8] sm:$0xff]
    %v1969 = vld [vmem:[#allocation10 + $0x500] sm:$0xff]
    %v1970 = vld [vmem:[#allocation10 + $0x508] sm:$0xff]
    %v1971 = vld [vmem:[#allocation10 + $0x510] sm:$0xff]
    %v1972 = vld [vmem:[#allocation10 + $0x518] sm:$0xff]
    %v1973 = vld [vmem:[#allocation10 + $0x520] sm:$0xff]
    %v1974 = vld [vmem:[#allocation10 + $0x528] sm:$0xff]
    %v1975 = vld [vmem:[#allocation10 + $0x530] sm:$0xff]
    %v1976 = vld [vmem:[#allocation10 + $0x538] sm:$0xff]
    %v1977 = vld [vmem:[#allocation10 + $0x540] sm:$0xff]
    %v1978 = vld [vmem:[#allocation10 + $0x548] sm:$0xff]
    %v1979 = vld [vmem:[#allocation10 + $0x550] sm:$0xff]
    %v1980 = vld [vmem:[#allocation10 + $0x558] sm:$0xff]
    %v1981 = vld [vmem:[#allocation10 + $0x560] sm:$0xff]
    %v1982 = vld [vmem:[#allocation10 + $0x568] sm:$0xff]
    %v1983 = vld [vmem:[#allocation10 + $0x570] sm:$0xff]
    %v1984 = vld [vmem:[#allocation10 + $0x578] sm:$0xff]
    %v1985 = vld [vmem:[#allocation10 + $0x580] sm:$0xff]
    %v1986 = vld [vmem:[#allocation10 + $0x588] sm:$0xff]
    %v1987 = vld [vmem:[#allocation10 + $0x590] sm:$0xff]
    %v1988 = vld [vmem:[#allocation10 + $0x598] sm:$0xff]
    %v1989 = vld [vmem:[#allocation10 + $0x5a0] sm:$0xff]
    %v1990 = vld [vmem:[#allocation10 + $0x5a8] sm:$0xff]
    %v1991 = vld [vmem:[#allocation10 + $0x5b0] sm:$0xff]
    %v1992 = vld [vmem:[#allocation10 + $0x5b8] sm:$0xff]
    %v1993 = vld [vmem:[#allocation10 + $0x5c0] sm:$0xff]
    %v1994 = vld [vmem:[#allocation10 + $0x5c8] sm:$0xff]
    %v1995 = vld [vmem:[#allocation10 + $0x5d0] sm:$0xff]
    %v1996 = vld [vmem:[#allocation10 + $0x5d8] sm:$0xff]
    %v1997 = vld [vmem:[#allocation10 + $0x5e0] sm:$0xff]
    %v1998 = vld [vmem:[#allocation10 + $0x5e8] sm:$0xff]
    %v1999 = vld [vmem:[#allocation10 + $0x5f0] sm:$0xff]
    %v2000 = vld [vmem:[#allocation10 + $0x5f8] sm:$0xff]
    %v2001 = vld [vmem:[#allocation10 + $0x600] sm:$0xff]
    %v2002 = vld [vmem:[#allocation10 + $0x608] sm:$0xff]
    %v2003 = vld [vmem:[#allocation10 + $0x610] sm:$0xff]
    %v2004 = vld [vmem:[#allocation10 + $0x618] sm:$0xff]
    %v2005 = vld [vmem:[#allocation10 + $0x620] sm:$0xff]
    %v2006 = vld [vmem:[#allocation10 + $0x628] sm:$0xff]
    %v2007 = vld [vmem:[#allocation10 + $0x630] sm:$0xff]
    %v2008 = vld [vmem:[#allocation10 + $0x638] sm:$0xff]
    %v2009 = vld [vmem:[#allocation10 + $0x640] sm:$0xff]
    %v2010 = vld [vmem:[#allocation10 + $0x648] sm:$0xff]
    %v2011 = vld [vmem:[#allocation10 + $0x650] sm:$0xff]
    %v2012 = vld [vmem:[#allocation10 + $0x658] sm:$0xff]
    %v2013 = vld [vmem:[#allocation10 + $0x660] sm:$0xff]
    %v2014 = vld [vmem:[#allocation10 + $0x668] sm:$0xff]
    %v2015 = vld [vmem:[#allocation10 + $0x670] sm:$0xff]
    %v2016 = vld [vmem:[#allocation10 + $0x678] sm:$0xff]
    %v2017 = vld [vmem:[#allocation10 + $0x680] sm:$0xff]
    %v2018 = vld [vmem:[#allocation10 + $0x688] sm:$0xff]
    %v2019 = vld [vmem:[#allocation10 + $0x690] sm:$0xff]
    %v2020 = vld [vmem:[#allocation10 + $0x698] sm:$0xff]
    %v2021 = vld [vmem:[#allocation10 + $0x6a0] sm:$0xff]
    %v2022 = vld [vmem:[#allocation10 + $0x6a8] sm:$0xff]
    %v2023 = vld [vmem:[#allocation10 + $0x6b0] sm:$0xff]
    %v2024 = vld [vmem:[#allocation10 + $0x6b8] sm:$0xff]
    %v2025 = vld [vmem:[#allocation10 + $0x6c0] sm:$0xff]
    %v2026 = vld [vmem:[#allocation10 + $0x6c8] sm:$0xff]
    %v2027 = vld [vmem:[#allocation10 + $0x6d0] sm:$0xff]
    %v2028 = vld [vmem:[#allocation10 + $0x6d8] sm:$0xff]
    %v2029 = vld [vmem:[#allocation10 + $0x6e0] sm:$0xff]
    %v2030 = vld [vmem:[#allocation10 + $0x6e8] sm:$0xff]
    %v2031 = vld [vmem:[#allocation10 + $0x6f0] sm:$0xff]
    %v2032 = vld [vmem:[#allocation10 + $0x6f8] sm:$0xff]
    %v2033 = vld [vmem:[#allocation10 + $0x700] sm:$0xff]
    %v2034 = vld [vmem:[#allocation10 + $0x708] sm:$0xff]
    %v2035 = vld [vmem:[#allocation10 + $0x710] sm:$0xff]
    %v2036 = vld [vmem:[#allocation10 + $0x718] sm:$0xff]
    %v2037 = vld [vmem:[#allocation10 + $0x720] sm:$0xff]
    %v2038 = vld [vmem:[#allocation10 + $0x728] sm:$0xff]
    %v2039 = vld [vmem:[#allocation10 + $0x730] sm:$0xff]
    %v2040 = vld [vmem:[#allocation10 + $0x738] sm:$0xff]
    %v2041 = vld [vmem:[#allocation10 + $0x740] sm:$0xff]
    %v2042 = vld [vmem:[#allocation10 + $0x748] sm:$0xff]
    %v2043 = vld [vmem:[#allocation10 + $0x750] sm:$0xff]
    %v2044 = vld [vmem:[#allocation10 + $0x758] sm:$0xff]
    %v2045 = vld [vmem:[#allocation10 + $0x760] sm:$0xff]
    %v2046 = vld [vmem:[#allocation10 + $0x768] sm:$0xff]
    %v2047 = vld [vmem:[#allocation10 + $0x770] sm:$0xff]
    %v2048 = vld [vmem:[#allocation10 + $0x778] sm:$0xff]
    %v2049 = vld [vmem:[#allocation10 + $0x780] sm:$0xff]
    %v2050 = vld [vmem:[#allocation10 + $0x788] sm:$0xff]
    %v2051 = vld [vmem:[#allocation10 + $0x790] sm:$0xff]
    %v2052 = vld [vmem:[#allocation10 + $0x798] sm:$0xff]
    %v2053 = vld [vmem:[#allocation10 + $0x7a0] sm:$0xff]
    %v2054 = vld [vmem:[#allocation10 + $0x7a8] sm:$0xff]
    %v2055 = vld [vmem:[#allocation10 + $0x7b0] sm:$0xff]
    %v2056 = vld [vmem:[#allocation10 + $0x7b8] sm:$0xff]
    %v2057 = vld [vmem:[#allocation10 + $0x7c0] sm:$0xff]
    %v2058 = vld [vmem:[#allocation10 + $0x7c8] sm:$0xff]
    %v2059 = vld [vmem:[#allocation10 + $0x7d0] sm:$0xff]
    %v2060 = vld [vmem:[#allocation10 + $0x7d8] sm:$0xff]
    %v2061 = vld [vmem:[#allocation10 + $0x7e0] sm:$0xff]
    %v2062 = vld [vmem:[#allocation10 + $0x7e8] sm:$0xff]
    %v2063 = vld [vmem:[#allocation10 + $0x7f0] sm:$0xff]
    %v2064 = vld [vmem:[#allocation10 + $0x7f8] sm:$0xff]
    %v2065 = vld [vmem:[#allocation10 + $0x800] sm:$0xff]
    %v2066 = vld [vmem:[#allocation10 + $0x808] sm:$0xff]
    %v2067 = vld [vmem:[#allocation10 + $0x810] sm:$0xff]
    %v2068 = vld [vmem:[#allocation10 + $0x818] sm:$0xff]
    %v2069 = vld [vmem:[#allocation10 + $0x820] sm:$0xff]
    %v2070 = vld [vmem:[#allocation10 + $0x828] sm:$0xff]
    %v2071 = vld [vmem:[#allocation10 + $0x830] sm:$0xff]
    %v2072 = vld [vmem:[#allocation10 + $0x838] sm:$0xff]
    %v2073 = vld [vmem:[#allocation10 + $0x840] sm:$0xff]
    %v2074 = vld [vmem:[#allocation10 + $0x848] sm:$0xff]
    %v2075 = vld [vmem:[#allocation10 + $0x850] sm:$0xff]
    %v2076 = vld [vmem:[#allocation10 + $0x858] sm:$0xff]
    %v2077 = vld [vmem:[#allocation10 + $0x860] sm:$0xff]
    %v2078 = vld [vmem:[#allocation10 + $0x868] sm:$0xff]
    %v2079 = vld [vmem:[#allocation10 + $0x870] sm:$0xff]
    %v2080 = vld [vmem:[#allocation10 + $0x878] sm:$0xff]
    %v2081 = vld [vmem:[#allocation10 + $0x880] sm:$0xff]
    %v2082 = vld [vmem:[#allocation10 + $0x888] sm:$0xff]
    %v2083 = vld [vmem:[#allocation10 + $0x890] sm:$0xff]
    %v2084 = vld [vmem:[#allocation10 + $0x898] sm:$0xff]
    %v2085 = vld [vmem:[#allocation10 + $0x8a0] sm:$0xff]
    %v2086 = vld [vmem:[#allocation10 + $0x8a8] sm:$0xff]
    %v2087 = vld [vmem:[#allocation10 + $0x8b0] sm:$0xff]
    %v2088 = vld [vmem:[#allocation10 + $0x8b8] sm:$0xff]
    %v2089 = vld [vmem:[#allocation10 + $0x8c0] sm:$0xff]
    %v2090 = vld [vmem:[#allocation10 + $0x8c8] sm:$0xff]
    %v2091 = vld [vmem:[#allocation10 + $0x8d0] sm:$0xff]
    %v2092 = vld [vmem:[#allocation10 + $0x8d8] sm:$0xff]
    %v2093 = vld [vmem:[#allocation10 + $0x8e0] sm:$0xff]
    %v2094 = vld [vmem:[#allocation10 + $0x8e8] sm:$0xff]
    %v2095 = vld [vmem:[#allocation10 + $0x8f0] sm:$0xff]
    %v2096 = vld [vmem:[#allocation10 + $0x8f8] sm:$0xff]
    %v2097 = vld [vmem:[#allocation10 + $0x900] sm:$0xff]
    %v2098 = vld [vmem:[#allocation10 + $0x908] sm:$0xff]
    %v2099 = vld [vmem:[#allocation10 + $0x910] sm:$0xff]
    %v2100 = vld [vmem:[#allocation10 + $0x918] sm:$0xff]
    %v2101 = vld [vmem:[#allocation10 + $0x920] sm:$0xff]
    %v2102 = vld [vmem:[#allocation10 + $0x928] sm:$0xff]
    %v2103 = vld [vmem:[#allocation10 + $0x930] sm:$0xff]
    %v2104 = vld [vmem:[#allocation10 + $0x938] sm:$0xff]
    %v2105 = vld [vmem:[#allocation10 + $0x940] sm:$0xff]
    %v2106 = vld [vmem:[#allocation10 + $0x948] sm:$0xff]
    %v2107 = vld [vmem:[#allocation10 + $0x950] sm:$0xff]
    %v2108 = vld [vmem:[#allocation10 + $0x958] sm:$0xff]
    %v2109 = vld [vmem:[#allocation10 + $0x960] sm:$0xff]
    %v2110 = vld [vmem:[#allocation10 + $0x968] sm:$0xff]
    %v2111 = vld [vmem:[#allocation10 + $0x970] sm:$0xff]
    %v2112 = vld [vmem:[#allocation10 + $0x978] sm:$0xff]
    %v2113 = vld [vmem:[#allocation10 + $0x980] sm:$0xff]
    %v2114 = vld [vmem:[#allocation10 + $0x988] sm:$0xff]
    %v2115 = vld [vmem:[#allocation10 + $0x990] sm:$0xff]
    %v2116 = vld [vmem:[#allocation10 + $0x998] sm:$0xff]
    %v2117 = vld [vmem:[#allocation10 + $0x9a0] sm:$0xff]
    %v2118 = vld [vmem:[#allocation10 + $0x9a8] sm:$0xff]
    %v2119 = vld [vmem:[#allocation10 + $0x9b0] sm:$0xff]
    %v2120 = vld [vmem:[#allocation10 + $0x9b8] sm:$0xff]
    %v2121 = vld [vmem:[#allocation10 + $0x9c0] sm:$0xff]
    %v2122 = vld [vmem:[#allocation10 + $0x9c8] sm:$0xff]
    %v2123 = vld [vmem:[#allocation10 + $0x9d0] sm:$0xff]
    %v2124 = vld [vmem:[#allocation10 + $0x9d8] sm:$0xff]
    %v2125 = vld [vmem:[#allocation10 + $0x9e0] sm:$0xff]
    %v2126 = vld [vmem:[#allocation10 + $0x9e8] sm:$0xff]
    %v2127 = vld [vmem:[#allocation10 + $0x9f0] sm:$0xff]
    %v2128 = vld [vmem:[#allocation10 + $0x9f8] sm:$0xff]
    %v2129 = vld [vmem:[#allocation10 + $0xa00] sm:$0xff]
    %v2130 = vld [vmem:[#allocation10 + $0xa08] sm:$0xff]
    %v2131 = vld [vmem:[#allocation10 + $0xa10] sm:$0xff]
    %v2132 = vld [vmem:[#allocation10 + $0xa18] sm:$0xff]
    %v2133 = vld [vmem:[#allocation10 + $0xa20] sm:$0xff]
    %v2134 = vld [vmem:[#allocation10 + $0xa28] sm:$0xff]
    %v2135 = vld [vmem:[#allocation10 + $0xa30] sm:$0xff]
    %v2136 = vld [vmem:[#allocation10 + $0xa38] sm:$0xff]
    %v2137 = vld [vmem:[#allocation10 + $0xa40] sm:$0xff]
    %v2138 = vld [vmem:[#allocation10 + $0xa48] sm:$0xff]
    %v2139 = vld [vmem:[#allocation10 + $0xa50] sm:$0xff]
    %v2140 = vld [vmem:[#allocation10 + $0xa58] sm:$0xff]
    %v2141 = vld [vmem:[#allocation10 + $0xa60] sm:$0xff]
    %v2142 = vld [vmem:[#allocation10 + $0xa68] sm:$0xff]
    %v2143 = vld [vmem:[#allocation10 + $0xa70] sm:$0xff]
    %v2144 = vld [vmem:[#allocation10 + $0xa78] sm:$0xff]
    %v2145 = vld [vmem:[#allocation10 + $0xa80] sm:$0xff]
    %v2146 = vld [vmem:[#allocation10 + $0xa88] sm:$0xff]
    %v2147 = vld [vmem:[#allocation10 + $0xa90] sm:$0xff]
    %v2148 = vld [vmem:[#allocation10 + $0xa98] sm:$0xff]
    %v2149 = vld [vmem:[#allocation10 + $0xaa0] sm:$0xff]
    %v2150 = vld [vmem:[#allocation10 + $0xaa8] sm:$0xff]
    %v2151 = vld [vmem:[#allocation10 + $0xab0] sm:$0xff]
    %v2152 = vld [vmem:[#allocation10 + $0xab8] sm:$0xff]
    %v2153 = vld [vmem:[#allocation10 + $0xac0] sm:$0xff]
    %v2154 = vld [vmem:[#allocation10 + $0xac8] sm:$0xff]
    %v2155 = vld [vmem:[#allocation10 + $0xad0] sm:$0xff]
    %v2156 = vld [vmem:[#allocation10 + $0xad8] sm:$0xff]
    %v2157 = vld [vmem:[#allocation10 + $0xae0] sm:$0xff]
    %v2158 = vld [vmem:[#allocation10 + $0xae8] sm:$0xff]
    %v2159 = vld [vmem:[#allocation10 + $0xaf0] sm:$0xff]
    %v2160 = vld [vmem:[#allocation10 + $0xaf8] sm:$0xff]
    %v2161 = vld [vmem:[#allocation10 + $0xb00] sm:$0xff]
    %v2162 = vld [vmem:[#allocation10 + $0xb08] sm:$0xff]
    %v2163 = vld [vmem:[#allocation10 + $0xb10] sm:$0xff]
    %v2164 = vld [vmem:[#allocation10 + $0xb18] sm:$0xff]
    %v2165 = vld [vmem:[#allocation10 + $0xb20] sm:$0xff]
    %v2166 = vld [vmem:[#allocation10 + $0xb28] sm:$0xff]
    %v2167 = vld [vmem:[#allocation10 + $0xb30] sm:$0xff]
    %v2168 = vld [vmem:[#allocation10 + $0xb38] sm:$0xff]
    %v2169 = vld [vmem:[#allocation10 + $0xb40] sm:$0xff]
    %v2170 = vld [vmem:[#allocation10 + $0xb48] sm:$0xff]
    %v2171 = vld [vmem:[#allocation10 + $0xb50] sm:$0xff]
    %v2172 = vld [vmem:[#allocation10 + $0xb58] sm:$0xff]
    %v2173 = vld [vmem:[#allocation10 + $0xb60] sm:$0xff]
    %v2174 = vld [vmem:[#allocation10 + $0xb68] sm:$0xff]
    %v2175 = vld [vmem:[#allocation10 + $0xb70] sm:$0xff]
    %v2176 = vld [vmem:[#allocation10 + $0xb78] sm:$0xff]
    %v2177 = vld [vmem:[#allocation10 + $0xb80] sm:$0xff]
    %v2178 = vld [vmem:[#allocation10 + $0xb88] sm:$0xff]
    %v2179 = vld [vmem:[#allocation10 + $0xb90] sm:$0xff]
    %v2180 = vld [vmem:[#allocation10 + $0xb98] sm:$0xff]
    %v2181 = vld [vmem:[#allocation10 + $0xba0] sm:$0xff]
    %v2182 = vld [vmem:[#allocation10 + $0xba8] sm:$0xff]
    %v2183 = vld [vmem:[#allocation10 + $0xbb0] sm:$0xff]
    %v2184 = vld [vmem:[#allocation10 + $0xbb8] sm:$0xff]
    %v2185 = vld [vmem:[#allocation10 + $0xbc0] sm:$0xff]
    %v2186 = vld [vmem:[#allocation10 + $0xbc8] sm:$0xff]
    %v2187 = vld [vmem:[#allocation10 + $0xbd0] sm:$0xff]
    %v2188 = vld [vmem:[#allocation10 + $0xbd8] sm:$0xff]
    %v2189 = vld [vmem:[#allocation10 + $0xbe0] sm:$0xff]
    %v2190 = vld [vmem:[#allocation10 + $0xbe8] sm:$0xff]
    %v2191 = vld [vmem:[#allocation10 + $0xbf0] sm:$0xff]
    %v2192 = vld [vmem:[#allocation10 + $0xbf8] sm:$0xff]
    %v2193 = vld [vmem:[#allocation10 + $0xc00] sm:$0xff]
    %v2194 = vld [vmem:[#allocation10 + $0xc08] sm:$0xff]
    %v2195 = vld [vmem:[#allocation10 + $0xc10] sm:$0xff]
    %v2196 = vld [vmem:[#allocation10 + $0xc18] sm:$0xff]
    %v2197 = vld [vmem:[#allocation10 + $0xc20] sm:$0xff]
    %v2198 = vld [vmem:[#allocation10 + $0xc28] sm:$0xff]
    %v2199 = vld [vmem:[#allocation10 + $0xc30] sm:$0xff]
    %v2200 = vld [vmem:[#allocation10 + $0xc38] sm:$0xff]
    %v2201 = vld [vmem:[#allocation10 + $0xc40] sm:$0xff]
    %v2202 = vld [vmem:[#allocation10 + $0xc48] sm:$0xff]
    %v2203 = vld [vmem:[#allocation10 + $0xc50] sm:$0xff]
    %v2204 = vld [vmem:[#allocation10 + $0xc58] sm:$0xff]
    %v2205 = vld [vmem:[#allocation10 + $0xc60] sm:$0xff]
    %v2206 = vld [vmem:[#allocation10 + $0xc68] sm:$0xff]
    %v2207 = vld [vmem:[#allocation10 + $0xc70] sm:$0xff]
    %v2208 = vld [vmem:[#allocation10 + $0xc78] sm:$0xff]
    %v2209 = vld [vmem:[#allocation12] sm:$0x1]
    %v2211 = vlaneseq
    %v2212 = vshrl.u32 %v2211, 7
    %v2213 = vsub.s32 0, %v2212
    %v2214 = vrot.slane %v2209, %v2213
    %2216 = vmatprep.subr.mxu0 0.0
    %2217 = vmatpush1.msra.mxu0 %v1809
    %2218 = vmatprep.subr.mxu0 0.0
    %2219 = vmatpush1.msra.mxu0 %v1810
    %2220 = vmatprep.subr.mxu0 0.0
    %2221 = vmatpush1.msra.mxu0 %v1811
    %2222 = vmatprep.subr.mxu0 0.0
    %2223 = vmatpush1.msra.mxu0 %v1812
    %2224 = vmatprep.subr.mxu0 0.0
    %2225 = vmatpush1.msra.mxu0 %v1813
    %2226 = vmatprep.subr.mxu0 0.0
    %2227 = vmatpush1.msra.mxu0 %v1814
    %2228 = vmatprep.subr.mxu0 0.0
    %2229 = vmatpush1.msra.mxu0 %v1815
    %2230 = vmatprep.subr.mxu0 0.0
    %2231 = vmatpush1.msra.mxu0 %v1816
    %2232 = vmatprep.subr.mxu0 0.0
    %2233 = vmatpush1.msra.mxu0 %v1817
    %2234 = vmatprep.subr.mxu0 0.0
    %2235 = vmatpush1.msra.mxu0 %v1818
    %2236 = vmatprep.subr.mxu0 0.0
    %2237 = vmatpush1.msra.mxu0 %v1819
    %2238 = vmatprep.subr.mxu0 0.0
    %2239 = vmatpush1.msra.mxu0 %v1820
    %2240 = vmatprep.subr.mxu0 0.0
    %2241 = vmatpush1.msra.mxu0 %v1821
    %2242 = vmatprep.subr.mxu0 0.0
    %2243 = vmatpush1.msra.mxu0 %v1822
    %2244 = vmatprep.subr.mxu0 0.0
    %2245 = vmatpush1.msra.mxu0 %v1823
    %2246 = vmatprep.subr.mxu0 0.0
    %2247 = vmatpush1.msra.mxu0 %v1824
    %2248 = vmatprep.subr.mxu0 0.0
    %2249 = vmatpush1.msra.mxu0 %v1825
    %2250 = vmatprep.subr.mxu0 0.0
    %2251 = vmatpush1.msra.mxu0 %v1826
    %2252 = vmatprep.subr.mxu0 0.0
    %2253 = vmatpush1.msra.mxu0 %v1827
    %2254 = vmatprep.subr.mxu0 0.0
    %2255 = vmatpush1.msra.mxu0 %v1828
    %2256 = vmatprep.subr.mxu0 0.0
    %2257 = vmatpush1.msra.mxu0 %v1829
    %2258 = vmatprep.subr.mxu0 0.0
    %2259 = vmatpush1.msra.mxu0 %v1830
    %2260 = vmatprep.subr.mxu0 0.0
    %2261 = vmatpush1.msra.mxu0 %v1831
    %2262 = vmatprep.subr.mxu0 0.0
    %2263 = vmatpush1.msra.mxu0 %v1832
    %2264 = vmatprep.subr.mxu0 0.0
    %2265 = vmatpush1.msra.mxu0 %v1833
    %2266 = vmatprep.subr.mxu0 0.0
    %2267 = vmatpush1.msra.mxu0 %v1834
    %2268 = vmatprep.subr.mxu0 0.0
    %2269 = vmatpush1.msra.mxu0 %v1835
    %2270 = vmatprep.subr.mxu0 0.0
    %2271 = vmatpush1.msra.mxu0 %v1836
    %2272 = vmatprep.subr.mxu0 0.0
    %2273 = vmatpush1.msra.mxu0 %v1837
    %2274 = vmatprep.subr.mxu0 0.0
    %2275 = vmatpush1.msra.mxu0 %v1838
    %2276 = vmatprep.subr.mxu0 0.0
    %2277 = vmatpush1.msra.mxu0 %v1839
    %2278 = vmatprep.subr.mxu0 0.0
    %2279 = vmatpush1.msra.mxu0 %v1840
    %2280 = vmatprep.mubr.f32.mxu0 %v1410
    %2281 = vmatmul.mubr.f32.gmra.mrb[0].mxu0 %v1409
    %v2282 = vpop.f32.mrb[0].mxu0
    %v2283 = vadd.f32 %v2214, %v2282
    %v2284 = vpop.f32.mrb[0].mxu0
    %2285 = vmatprep.mubr.f32.mxu0 %v1435
    %2286 = vmatmul.mubr.f32.gmra.mrb[0].mxu0 %v1434
    %v2287 = vpop.f32.mrb[0].mxu0
    %v2288 = vadd.f32 %v2214, %v2287
    %v2289 = vpop.f32.mrb[0].mxu0
    %2290 = vmatprep.mubr.f32.mxu0 %v1460
    %2291 = vmatmul.mubr.f32.gmra.mrb[0].mxu0 %v1459
    %v2292 = vpop.f32.mrb[0].mxu0
    %v2293 = vadd.f32 %v2214, %v2292
    %v2294 = vpop.f32.mrb[0].mxu0
    %2295 = vmatprep.mubr.f32.mxu0 %v1485
    %2296 = vmatmul.mubr.f32.gmra.mrb[0].mxu0 %v1484
    %v2297 = vpop.f32.mrb[0].mxu0
    %v2298 = vadd.f32 %v2214, %v2297
    %v2299 = vpop.f32.mrb[0].mxu0
    %2300 = vmatprep.mubr.f32.mxu0 %v1510
    %2301 = vmatmul.mubr.f32.gmra.mrb[0].mxu0 %v1509
    %v2302 = vpop.f32.mrb[0].mxu0
    %v2303 = vadd.f32 %v2214, %v2302
    %v2304 = vpop.f32.mrb[0].mxu0
    %2305 = vmatprep.mubr.f32.mxu0 %v1535
    %2306 = vmatmul.mubr.f32.gmra.mrb[0].mxu0 %v1534
    %v2307 = vpop.f32.mrb[0].mxu0
    %v2308 = vadd.f32 %v2214, %v2307
    %v2309 = vpop.f32.mrb[0].mxu0
    %2310 = vmatprep.mubr.f32.mxu0 %v1560
    %2311 = vmatmul.mubr.f32.gmra.mrb[0].mxu0 %v1559
    %v2312 = vpop.f32.mrb[0].mxu0
    %v2313 = vadd.f32 %v2214, %v2312
    %v2314 = vpop.f32.mrb[0].mxu0
    %2315 = vmatprep.mubr.f32.mxu0 %v1585
    %2316 = vmatmul.mubr.f32.gmra.mrb[0].mxu0 %v1584
    %v2317 = vpop.f32.mrb[0].mxu0
    %v2318 = vadd.f32 %v2214, %v2317
    %v2319 = vpop.f32.mrb[0].mxu0
    %2320 = vmatprep.mubr.f32.mxu0 %v1610
    %2321 = vmatmul.mubr.f32.gmra.mrb[0].mxu0 %v1609
    %v2322 = vpop.f32.mrb[0].mxu0
    %v2323 = vadd.f32 %v2214, %v2322
    %v2324 = vpop.f32.mrb[0].mxu0
    %2325 = vmatprep.mubr.f32.mxu0 %v1635
    %2326 = vmatmul.mubr.f32.gmra.mrb[0].mxu0 %v1634
    %v2327 = vpop.f32.mrb[0].mxu0
    %v2328 = vadd.f32 %v2214, %v2327
    %v2329 = vpop.f32.mrb[0].mxu0
    %2330 = vmatprep.mubr.f32.mxu0 %v1660
    %2331 = vmatmul.mubr.f32.gmra.mrb[0].mxu0 %v1659
    %v2332 = vpop.f32.mrb[0].mxu0
    %v2333 = vadd.f32 %v2214, %v2332
    %v2334 = vpop.f32.mrb[0].mxu0
    %2335 = vmatprep.mubr.f32.mxu0 %v1685
    %2336 = vmatmul.mubr.f32.gmra.mrb[0].mxu0 %v1684
    %v2337 = vpop.f32.mrb[0].mxu0
    %v2338 = vadd.f32 %v2214, %v2337
    %v2339 = vpop.f32.mrb[0].mxu0
    %2340 = vmatprep.mubr.f32.mxu0 %v1710
    %2341 = vmatmul.mubr.f32.gmra.mrb[0].mxu0 %v1709
    %v2342 = vpop.f32.mrb[0].mxu0
    %v2343 = vadd.f32 %v2214, %v2342
    %v2344 = vpop.f32.mrb[0].mxu0
    %2345 = vmatprep.mubr.f32.mxu0 %v1735
    %2346 = vmatmul.mubr.f32.gmra.mrb[0].mxu0 %v1734
    %v2347 = vpop.f32.mrb[0].mxu0
    %v2348 = vadd.f32 %v2214, %v2347
    %v2349 = vpop.f32.mrb[0].mxu0
    %2350 = vmatprep.mubr.f32.mxu0 %v1760
    %2351 = vmatmul.mubr.f32.gmra.mrb[0].mxu0 %v1759
    %v2352 = vpop.f32.mrb[0].mxu0
    %v2353 = vadd.f32 %v2214, %v2352
    %v2354 = vpop.f32.mrb[0].mxu0
    %2355 = vmatprep.mubr.f32.mxu0 %v1785
    %2356 = vmatmul.mubr.f32.gmra.mrb[0].mxu0 %v1784
    %v2357 = vpop.f32.mrb[0].mxu0
    %v2358 = vadd.f32 %v2214, %v2357
    %v2359 = vpop.f32.mrb[0].mxu0
    %2360 = vdwg.mxu0
    %2361 = vmatprep.subr.mxu0 0.0
    %2362 = vmatpush1.msra.mxu0 %v1841
    %2363 = vmatprep.subr.mxu0 0.0
    %2364 = vmatpush1.msra.mxu0 %v1842
    %2365 = vmatprep.subr.mxu0 0.0
    %2366 = vmatpush1.msra.mxu0 %v1843
    %2367 = vmatprep.subr.mxu0 0.0
    %2368 = vmatpush1.msra.mxu0 %v1844
    %2369 = vmatprep.subr.mxu0 0.0
    %2370 = vmatpush1.msra.mxu0 %v1845
    %2371 = vmatprep.subr.mxu0 0.0
    %2372 = vmatpush1.msra.mxu0 %v1846
    %2373 = vmatprep.subr.mxu0 0.0
    %2374 = vmatpush1.msra.mxu0 %v1847
    %2375 = vmatprep.subr.mxu0 0.0
    %2376 = vmatpush1.msra.mxu0 %v1848
    %2377 = vmatprep.subr.mxu0 0.0
    %2378 = vmatpush1.msra.mxu0 %v1849
    %2379 = vmatprep.subr.mxu0 0.0
    %2380 = vmatpush1.msra.mxu0 %v1850
    %2381 = vmatprep.subr.mxu0 0.0
    %2382 = vmatpush1.msra.mxu0 %v1851
    %2383 = vmatprep.subr.mxu0 0.0
    %2384 = vmatpush1.msra.mxu0 %v1852
    %2385 = vmatprep.subr.mxu0 0.0
    %2386 = vmatpush1.msra.mxu0 %v1853
    %2387 = vmatprep.subr.mxu0 0.0
    %2388 = vmatpush1.msra.mxu0 %v1854
    %2389 = vmatprep.subr.mxu0 0.0
    %2390 = vmatpush1.msra.mxu0 %v1855
    %2391 = vmatprep.subr.mxu0 0.0
    %2392 = vmatpush1.msra.mxu0 %v1856
    %2393 = vmatprep.subr.mxu0 0.0
    %2394 = vmatpush1.msra.mxu0 %v1857
    %2395 = vmatprep.subr.mxu0 0.0
    %2396 = vmatpush1.msra.mxu0 %v1858
    %2397 = vmatprep.subr.mxu0 0.0
    %2398 = vmatpush1.msra.mxu0 %v1859
    %2399 = vmatprep.subr.mxu0 0.0
    %2400 = vmatpush1.msra.mxu0 %v1860
    %2401 = vmatprep.subr.mxu0 0.0
    %2402 = vmatpush1.msra.mxu0 %v1861
    %2403 = vmatprep.subr.mxu0 0.0
    %2404 = vmatpush1.msra.mxu0 %v1862
    %2405 = vmatprep.subr.mxu0 0.0
    %2406 = vmatpush1.msra.mxu0 %v1863
    %2407 = vmatprep.subr.mxu0 0.0
    %2408 = vmatpush1.msra.mxu0 %v1864
    %2409 = vmatprep.subr.mxu0 0.0
    %2410 = vmatpush1.msra.mxu0 %v1865
    %2411 = vmatprep.subr.mxu0 0.0
    %2412 = vmatpush1.msra.mxu0 %v1866
    %2413 = vmatprep.subr.mxu0 0.0
    %2414 = vmatpush1.msra.mxu0 %v1867
    %2415 = vmatprep.subr.mxu0 0.0
    %2416 = vmatpush1.msra.mxu0 %v1868
    %2417 = vmatprep.subr.mxu0 0.0
    %2418 = vmatpush1.msra.mxu0 %v1869
    %2419 = vmatprep.subr.mxu0 0.0
    %2420 = vmatpush1.msra.mxu0 %v1870
    %2421 = vmatprep.subr.mxu0 0.0
    %2422 = vmatpush1.msra.mxu0 %v1871
    %2423 = vmatprep.subr.mxu0 0.0
    %2424 = vmatpush1.msra.mxu0 %v1872
    %2425 = vmatprep.mubr.f32.mxu0 %v1412
    %2426 = vmatmul.mubr.f32.gmra.mrb[0].mxu0 %v1411
    %v2427 = vpop.f32.mrb[0].mxu0
    %v2428 = vadd.f32 %v2283, %v2427
    %v2429 = vpop.f32.mrb[0].mxu0
    %2430 = vmatprep.mubr.f32.mxu0 %v1437
    %2431 = vmatmul.mubr.f32.gmra.mrb[0].mxu0 %v1436
    %v2432 = vpop.f32.mrb[0].mxu0
    %v2433 = vadd.f32 %v2288, %v2432
    %v2434 = vpop.f32.mrb[0].mxu0
    %2435 = vmatprep.mubr.f32.mxu0 %v1462
    %2436 = vmatmul.mubr.f32.gmra.mrb[0].mxu0 %v1461
    %v2437 = vpop.f32.mrb[0].mxu0
    %v2438 = vadd.f32 %v2293, %v2437
    %v2439 = vpop.f32.mrb[0].mxu0
    %2440 = vmatprep.mubr.f32.mxu0 %v1487
    %2441 = vmatmul.mubr.f32.gmra.mrb[0].mxu0 %v1486
    %v2442 = vpop.f32.mrb[0].mxu0
    %v2443 = vadd.f32 %v2298, %v2442
    %v2444 = vpop.f32.mrb[0].mxu0
    %2445 = vmatprep.mubr.f32.mxu0 %v1512
    %2446 = vmatmul.mubr.f32.gmra.mrb[0].mxu0 %v1511
    %v2447 = vpop.f32.mrb[0].mxu0
    %v2448 = vadd.f32 %v2303, %v2447
    %v2449 = vpop.f32.mrb[0].mxu0
    %2450 = vmatprep.mubr.f32.mxu0 %v1537
    %2451 = vmatmul.mubr.f32.gmra.mrb[0].mxu0 %v1536
    %v2452 = vpop.f32.mrb[0].mxu0
    %v2453 = vadd.f32 %v2308, %v2452
    %v2454 = vpop.f32.mrb[0].mxu0
    %2455 = vmatprep.mubr.f32.mxu0 %v1562
    %2456 = vmatmul.mubr.f32.gmra.mrb[0].mxu0 %v1561
    %v2457 = vpop.f32.mrb[0].mxu0
    %v2458 = vadd.f32 %v2313, %v2457
    %v2459 = vpop.f32.mrb[0].mxu0
    %2460 = vmatprep.mubr.f32.mxu0 %v1587
    %2461 = vmatmul.mubr.f32.gmra.mrb[0].mxu0 %v1586
    %v2462 = vpop.f32.mrb[0].mxu0
    %v2463 = vadd.f32 %v2318, %v2462
    %v2464 = vpop.f32.mrb[0].mxu0
    %2465 = vmatprep.mubr.f32.mxu0 %v1612
    %2466 = vmatmul.mubr.f32.gmra.mrb[0].mxu0 %v1611
    %v2467 = vpop.f32.mrb[0].mxu0
    %v2468 = vadd.f32 %v2323, %v2467
    %v2469 = vpop.f32.mrb[0].mxu0
    %2470 = vmatprep.mubr.f32.mxu0 %v1637
    %2471 = vmatmul.mubr.f32.gmra.mrb[0].mxu0 %v1636
    %v2472 = vpop.f32.mrb[0].mxu0
    %v2473 = vadd.f32 %v2328, %v2472
    %v2474 = vpop.f32.mrb[0].mxu0
    %2475 = vmatprep.mubr.f32.mxu0 %v1662
    %2476 = vmatmul.mubr.f32.gmra.mrb[0].mxu0 %v1661
    %v2477 = vpop.f32.mrb[0].mxu0
    %v2478 = vadd.f32 %v2333, %v2477
    %v2479 = vpop.f32.mrb[0].mxu0
    %2480 = vmatprep.mubr.f32.mxu0 %v1687
    %2481 = vmatmul.mubr.f32.gmra.mrb[0].mxu0 %v1686
    %v2482 = vpop.f32.mrb[0].mxu0
    %v2483 = vadd.f32 %v2338, %v2482
    %v2484 = vpop.f32.mrb[0].mxu0
    %2485 = vmatprep.mubr.f32.mxu0 %v1712
    %2486 = vmatmul.mubr.f32.gmra.mrb[0].mxu0 %v1711
    %v2487 = vpop.f32.mrb[0].mxu0
    %v2488 = vadd.f32 %v2343, %v2487
    %v2489 = vpop.f32.mrb[0].mxu0
    %2490 = vmatprep.mubr.f32.mxu0 %v1737
    %2491 = vmatmul.mubr.f32.gmra.mrb[0].mxu0 %v1736
    %v2492 = vpop.f32.mrb[0].mxu0
    %v2493 = vadd.f32 %v2348, %v2492
    %v2494 = vpop.f32.mrb[0].mxu0
    %2495 = vmatprep.mubr.f32.mxu0 %v1762
    %2496 = vmatmul.mubr.f32.gmra.mrb[0].mxu0 %v1761
    %v2497 = vpop.f32.mrb[0].mxu0
    %v2498 = vadd.f32 %v2353, %v2497
    %v2499 = vpop.f32.mrb[0].mxu0
    %2500 = vmatprep.mubr.f32.mxu0 %v1787
    %2501 = vmatmul.mubr.f32.gmra.mrb[0].mxu0 %v1786
    %v2502 = vpop.f32.mrb[0].mxu0
    %v2503 = vadd.f32 %v2358, %v2502
    %v2504 = vpop.f32.mrb[0].mxu0
    %2505 = vdwg.mxu0
    %2506 = vmatprep.subr.mxu0 0.0
    %2507 = vmatpush1.msra.mxu0 %v1873
    %2508 = vmatprep.subr.mxu0 0.0
    %2509 = vmatpush1.msra.mxu0 %v1874
    %2510 = vmatprep.subr.mxu0 0.0
    %2511 = vmatpush1.msra.mxu0 %v1875
    %2512 = vmatprep.subr.mxu0 0.0
    %2513 = vmatpush1.msra.mxu0 %v1876
    %2514 = vmatprep.subr.mxu0 0.0
    %2515 = vmatpush1.msra.mxu0 %v1877
    %2516 = vmatprep.subr.mxu0 0.0
    %2517 = vmatpush1.msra.mxu0 %v1878
    %2518 = vmatprep.subr.mxu0 0.0
    %2519 = vmatpush1.msra.mxu0 %v1879
    %2520 = vmatprep.subr.mxu0 0.0
    %2521 = vmatpush1.msra.mxu0 %v1880
    %2522 = vmatprep.subr.mxu0 0.0
    %2523 = vmatpush1.msra.mxu0 %v1881
    %2524 = vmatprep.subr.mxu0 0.0
    %2525 = vmatpush1.msra.mxu0 %v1882
    %2526 = vmatprep.subr.mxu0 0.0
    %2527 = vmatpush1.msra.mxu0 %v1883
    %2528 = vmatprep.subr.mxu0 0.0
    %2529 = vmatpush1.msra.mxu0 %v1884
    %2530 = vmatprep.subr.mxu0 0.0
    %2531 = vmatpush1.msra.mxu0 %v1885
    %2532 = vmatprep.subr.mxu0 0.0
    %2533 = vmatpush1.msra.mxu0 %v1886
    %2534 = vmatprep.subr.mxu0 0.0
    %2535 = vmatpush1.msra.mxu0 %v1887
    %2536 = vmatprep.subr.mxu0 0.0
    %2537 = vmatpush1.msra.mxu0 %v1888
    %2538 = vmatprep.subr.mxu0 0.0
    %2539 = vmatpush1.msra.mxu0 %v1889
    %2540 = vmatprep.subr.mxu0 0.0
    %2541 = vmatpush1.msra.mxu0 %v1890
    %2542 = vmatprep.subr.mxu0 0.0
    %2543 = vmatpush1.msra.mxu0 %v1891
    %2544 = vmatprep.subr.mxu0 0.0
    %2545 = vmatpush1.msra.mxu0 %v1892
    %2546 = vmatprep.subr.mxu0 0.0
    %2547 = vmatpush1.msra.mxu0 %v1893
    %2548 = vmatprep.subr.mxu0 0.0
    %2549 = vmatpush1.msra.mxu0 %v1894
    %2550 = vmatprep.subr.mxu0 0.0
    %2551 = vmatpush1.msra.mxu0 %v1895
    %2552 = vmatprep.subr.mxu0 0.0
    %2553 = vmatpush1.msra.mxu0 %v1896
    %2554 = vmatprep.subr.mxu0 0.0
    %2555 = vmatpush1.msra.mxu0 %v1897
    %2556 = vmatprep.subr.mxu0 0.0
    %2557 = vmatpush1.msra.mxu0 %v1898
    %2558 = vmatprep.subr.mxu0 0.0
    %2559 = vmatpush1.msra.mxu0 %v1899
    %2560 = vmatprep.subr.mxu0 0.0
    %2561 = vmatpush1.msra.mxu0 %v1900
    %2562 = vmatprep.subr.mxu0 0.0
    %2563 = vmatpush1.msra.mxu0 %v1901
    %2564 = vmatprep.subr.mxu0 0.0
    %2565 = vmatpush1.msra.mxu0 %v1902
    %2566 = vmatprep.subr.mxu0 0.0
    %2567 = vmatpush1.msra.mxu0 %v1903
    %2568 = vmatprep.subr.mxu0 0.0
    %2569 = vmatpush1.msra.mxu0 %v1904
    %2570 = vmatprep.mubr.f32.mxu0 %v1414
    %2571 = vmatmul.mubr.f32.gmra.mrb[0].mxu0 %v1413
    %v2572 = vpop.f32.mrb[0].mxu0
    %v2573 = vadd.f32 %v2428, %v2572
    %v2574 = vpop.f32.mrb[0].mxu0
    %2575 = vmatprep.mubr.f32.mxu0 %v1439
    %2576 = vmatmul.mubr.f32.gmra.mrb[0].mxu0 %v1438
    %v2577 = vpop.f32.mrb[0].mxu0
    %v2578 = vadd.f32 %v2433, %v2577
    %v2579 = vpop.f32.mrb[0].mxu0
    %2580 = vmatprep.mubr.f32.mxu0 %v1464
    %2581 = vmatmul.mubr.f32.gmra.mrb[0].mxu0 %v1463
    %v2582 = vpop.f32.mrb[0].mxu0
    %v2583 = vadd.f32 %v2438, %v2582
    %v2584 = vpop.f32.mrb[0].mxu0
    %2585 = vmatprep.mubr.f32.mxu0 %v1489
    %2586 = vmatmul.mubr.f32.gmra.mrb[0].mxu0 %v1488
    %v2587 = vpop.f32.mrb[0].mxu0
    %v2588 = vadd.f32 %v2443, %v2587
    %v2589 = vpop.f32.mrb[0].mxu0
    %2590 = vmatprep.mubr.f32.mxu0 %v1514
    %2591 = vmatmul.mubr.f32.gmra.mrb[0].mxu0 %v1513
    %v2592 = vpop.f32.mrb[0].mxu0
    %v2593 = vadd.f32 %v2448, %v2592
    %v2594 = vpop.f32.mrb[0].mxu0
    %2595 = vmatprep.mubr.f32.mxu0 %v1539
    %2596 = vmatmul.mubr.f32.gmra.mrb[0].mxu0 %v1538
    %v2597 = vpop.f32.mrb[0].mxu0
    %v2598 = vadd.f32 %v2453, %v2597
    %v2599 = vpop.f32.mrb[0].mxu0
    %2600 = vmatprep.mubr.f32.mxu0 %v1564
    %2601 = vmatmul.mubr.f32.gmra.mrb[0].mxu0 %v1563
    %v2602 = vpop.f32.mrb[0].mxu0
    %v2603 = vadd.f32 %v2458, %v2602
    %v2604 = vpop.f32.mrb[0].mxu0
    %2605 = vmatprep.mubr.f32.mxu0 %v1589
    %2606 = vmatmul.mubr.f32.gmra.mrb[0].mxu0 %v1588
    %v2607 = vpop.f32.mrb[0].mxu0
    %v2608 = vadd.f32 %v2463, %v2607
    %v2609 = vpop.f32.mrb[0].mxu0
    %2610 = vmatprep.mubr.f32.mxu0 %v1614
    %2611 = vmatmul.mubr.f32.gmra.mrb[0].mxu0 %v1613
    %v2612 = vpop.f32.mrb[0].mxu0
    %v2613 = vadd.f32 %v2468, %v2612
    %v2614 = vpop.f32.mrb[0].mxu0
    %2615 = vmatprep.mubr.f32.mxu0 %v1639
    %2616 = vmatmul.mubr.f32.gmra.mrb[0].mxu0 %v1638
    %v2617 = vpop.f32.mrb[0].mxu0
    %v2618 = vadd.f32 %v2473, %v2617
    %v2619 = vpop.f32.mrb[0].mxu0
    %2620 = vmatprep.mubr.f32.mxu0 %v1664
    %2621 = vmatmul.mubr.f32.gmra.mrb[0].mxu0 %v1663
    %v2622 = vpop.f32.mrb[0].mxu0
    %v2623 = vadd.f32 %v2478, %v2622
    %v2624 = vpop.f32.mrb[0].mxu0
    %2625 = vmatprep.mubr.f32.mxu0 %v1689
    %2626 = vmatmul.mubr.f32.gmra.mrb[0].mxu0 %v1688
    %v2627 = vpop.f32.mrb[0].mxu0
    %v2628 = vadd.f32 %v2483, %v2627
    %v2629 = vpop.f32.mrb[0].mxu0
    %2630 = vmatprep.mubr.f32.mxu0 %v1714
    %2631 = vmatmul.mubr.f32.gmra.mrb[0].mxu0 %v1713
    %v2632 = vpop.f32.mrb[0].mxu0
    %v2633 = vadd.f32 %v2488, %v2632
    %v2634 = vpop.f32.mrb[0].mxu0
    %2635 = vmatprep.mubr.f32.mxu0 %v1739
    %2636 = vmatmul.mubr.f32.gmra.mrb[0].mxu0 %v1738
    %v2637 = vpop.f32.mrb[0].mxu0
    %v2638 = vadd.f32 %v2493, %v2637
    %v2639 = vpop.f32.mrb[0].mxu0
    %2640 = vmatprep.mubr.f32.mxu0 %v1764
    %2641 = vmatmul.mubr.f32.gmra.mrb[0].mxu0 %v1763
    %v2642 = vpop.f32.mrb[0].mxu0
    %v2643 = vadd.f32 %v2498, %v2642
    %v2644 = vpop.f32.mrb[0].mxu0
    %2645 = vmatprep.mubr.f32.mxu0 %v1789
    %2646 = vmatmul.mubr.f32.gmra.mrb[0].mxu0 %v1788
    %v2647 = vpop.f32.mrb[0].mxu0
    %v2648 = vadd.f32 %v2503, %v2647
    %v2649 = vpop.f32.mrb[0].mxu0
    %2650 = vdwg.mxu0
    %2651 = vmatprep.subr.mxu0 0.0
    %2652 = vmatpush1.msra.mxu0 %v1905
    %2653 = vmatprep.subr.mxu0 0.0
    %2654 = vmatpush1.msra.mxu0 %v1906
    %2655 = vmatprep.subr.mxu0 0.0
    %2656 = vmatpush1.msra.mxu0 %v1907
    %2657 = vmatprep.subr.mxu0 0.0
    %2658 = vmatpush1.msra.mxu0 %v1908
    %2659 = vmatprep.subr.mxu0 0.0
    %2660 = vmatpush1.msra.mxu0 %v1909
    %2661 = vmatprep.subr.mxu0 0.0
    %2662 = vmatpush1.msra.mxu0 %v1910
    %2663 = vmatprep.subr.mxu0 0.0
    %2664 = vmatpush1.msra.mxu0 %v1911
    %2665 = vmatprep.subr.mxu0 0.0
    %2666 = vmatpush1.msra.mxu0 %v1912
    %2667 = vmatprep.subr.mxu0 0.0
    %2668 = vmatpush1.msra.mxu0 %v1913
    %2669 = vmatprep.subr.mxu0 0.0
    %2670 = vmatpush1.msra.mxu0 %v1914
    %2671 = vmatprep.subr.mxu0 0.0
    %2672 = vmatpush1.msra.mxu0 %v1915
    %2673 = vmatprep.subr.mxu0 0.0
    %2674 = vmatpush1.msra.mxu0 %v1916
    %2675 = vmatprep.subr.mxu0 0.0
    %2676 = vmatpush1.msra.mxu0 %v1917
    %2677 = vmatprep.subr.mxu0 0.0
    %2678 = vmatpush1.msra.mxu0 %v1918
    %2679 = vmatprep.subr.mxu0 0.0
    %2680 = vmatpush1.msra.mxu0 %v1919
    %2681 = vmatprep.subr.mxu0 0.0
    %2682 = vmatpush1.msra.mxu0 %v1920
    %2683 = vmatprep.subr.mxu0 0.0
    %2684 = vmatpush1.msra.mxu0 %v1921
    %2685 = vmatprep.subr.mxu0 0.0
    %2686 = vmatpush1.msra.mxu0 %v1922
    %2687 = vmatprep.subr.mxu0 0.0
    %2688 = vmatpush1.msra.mxu0 %v1923
    %2689 = vmatprep.subr.mxu0 0.0
    %2690 = vmatpush1.msra.mxu0 %v1924
    %2691 = vmatprep.subr.mxu0 0.0
    %2692 = vmatpush1.msra.mxu0 %v1925
    %2693 = vmatprep.subr.mxu0 0.0
    %2694 = vmatpush1.msra.mxu0 %v1926
    %2695 = vmatprep.subr.mxu0 0.0
    %2696 = vmatpush1.msra.mxu0 %v1927
    %2697 = vmatprep.subr.mxu0 0.0
    %2698 = vmatpush1.msra.mxu0 %v1928
    %2699 = vmatprep.subr.mxu0 0.0
    %2700 = vmatpush1.msra.mxu0 %v1929
    %2701 = vmatprep.subr.mxu0 0.0
    %2702 = vmatpush1.msra.mxu0 %v1930
    %2703 = vmatprep.subr.mxu0 0.0
    %2704 = vmatpush1.msra.mxu0 %v1931
    %2705 = vmatprep.subr.mxu0 0.0
    %2706 = vmatpush1.msra.mxu0 %v1932
    %2707 = vmatprep.subr.mxu0 0.0
    %2708 = vmatpush1.msra.mxu0 %v1933
    %2709 = vmatprep.subr.mxu0 0.0
    %2710 = vmatpush1.msra.mxu0 %v1934
    %2711 = vmatprep.subr.mxu0 0.0
    %2712 = vmatpush1.msra.mxu0 %v1935
    %2713 = vmatprep.subr.mxu0 0.0
    %2714 = vmatpush1.msra.mxu0 %v1936
    %2715 = vmatprep.mubr.f32.mxu0 %v1416
    %2716 = vmatmul.mubr.f32.gmra.mrb[0].mxu0 %v1415
    %v2717 = vpop.f32.mrb[0].mxu0
    %v2718 = vadd.f32 %v2573, %v2717
    %v2719 = vpop.f32.mrb[0].mxu0
    %2720 = vmatprep.mubr.f32.mxu0 %v1441
    %2721 = vmatmul.mubr.f32.gmra.mrb[0].mxu0 %v1440
    %v2722 = vpop.f32.mrb[0].mxu0
    %v2723 = vadd.f32 %v2578, %v2722
    %v2724 = vpop.f32.mrb[0].mxu0
    %2725 = vmatprep.mubr.f32.mxu0 %v1466
    %2726 = vmatmul.mubr.f32.gmra.mrb[0].mxu0 %v1465
    %v2727 = vpop.f32.mrb[0].mxu0
    %v2728 = vadd.f32 %v2583, %v2727
    %v2729 = vpop.f32.mrb[0].mxu0
    %2730 = vmatprep.mubr.f32.mxu0 %v1491
    %2731 = vmatmul.mubr.f32.gmra.mrb[0].mxu0 %v1490
    %v2732 = vpop.f32.mrb[0].mxu0
    %v2733 = vadd.f32 %v2588, %v2732
    %v2734 = vpop.f32.mrb[0].mxu0
    %2735 = vmatprep.mubr.f32.mxu0 %v1516
    %2736 = vmatmul.mubr.f32.gmra.mrb[0].mxu0 %v1515
    %v2737 = vpop.f32.mrb[0].mxu0
    %v2738 = vadd.f32 %v2593, %v2737
    %v2739 = vpop.f32.mrb[0].mxu0
    %2740 = vmatprep.mubr.f32.mxu0 %v1541
    %2741 = vmatmul.mubr.f32.gmra.mrb[0].mxu0 %v1540
    %v2742 = vpop.f32.mrb[0].mxu0
    %v2743 = vadd.f32 %v2598, %v2742
    %v2744 = vpop.f32.mrb[0].mxu0
    %2745 = vmatprep.mubr.f32.mxu0 %v1566
    %2746 = vmatmul.mubr.f32.gmra.mrb[0].mxu0 %v1565
    %v2747 = vpop.f32.mrb[0].mxu0
    %v2748 = vadd.f32 %v2603, %v2747
    %v2749 = vpop.f32.mrb[0].mxu0
    %2750 = vmatprep.mubr.f32.mxu0 %v1591
    %2751 = vmatmul.mubr.f32.gmra.mrb[0].mxu0 %v1590
    %v2752 = vpop.f32.mrb[0].mxu0
    %v2753 = vadd.f32 %v2608, %v2752
    %v2754 = vpop.f32.mrb[0].mxu0
    %2755 = vmatprep.mubr.f32.mxu0 %v1616
    %2756 = vmatmul.mubr.f32.gmra.mrb[0].mxu0 %v1615
    %v2757 = vpop.f32.mrb[0].mxu0
    %v2758 = vadd.f32 %v2613, %v2757
    %v2759 = vpop.f32.mrb[0].mxu0
    %2760 = vmatprep.mubr.f32.mxu0 %v1641
    %2761 = vmatmul.mubr.f32.gmra.mrb[0].mxu0 %v1640
    %v2762 = vpop.f32.mrb[0].mxu0
    %v2763 = vadd.f32 %v2618, %v2762
    %v2764 = vpop.f32.mrb[0].mxu0
    %2765 = vmatprep.mubr.f32.mxu0 %v1666
    %2766 = vmatmul.mubr.f32.gmra.mrb[0].mxu0 %v1665
    %v2767 = vpop.f32.mrb[0].mxu0
    %v2768 = vadd.f32 %v2623, %v2767
    %v2769 = vpop.f32.mrb[0].mxu0
    %2770 = vmatprep.mubr.f32.mxu0 %v1691
    %2771 = vmatmul.mubr.f32.gmra.mrb[0].mxu0 %v1690
    %v2772 = vpop.f32.mrb[0].mxu0
    %v2773 = vadd.f32 %v2628, %v2772
    %v2774 = vpop.f32.mrb[0].mxu0
    %2775 = vmatprep.mubr.f32.mxu0 %v1716
    %2776 = vmatmul.mubr.f32.gmra.mrb[0].mxu0 %v1715
    %v2777 = vpop.f32.mrb[0].mxu0
    %v2778 = vadd.f32 %v2633, %v2777
    %v2779 = vpop.f32.mrb[0].mxu0
    %2780 = vmatprep.mubr.f32.mxu0 %v1741
    %2781 = vmatmul.mubr.f32.gmra.mrb[0].mxu0 %v1740
    %v2782 = vpop.f32.mrb[0].mxu0
    %v2783 = vadd.f32 %v2638, %v2782
    %v2784 = vpop.f32.mrb[0].mxu0
    %2785 = vmatprep.mubr.f32.mxu0 %v1766
    %2786 = vmatmul.mubr.f32.gmra.mrb[0].mxu0 %v1765
    %v2787 = vpop.f32.mrb[0].mxu0
    %v2788 = vadd.f32 %v2643, %v2787
    %v2789 = vpop.f32.mrb[0].mxu0
    %2790 = vmatprep.mubr.f32.mxu0 %v1791
    %2791 = vmatmul.mubr.f32.gmra.mrb[0].mxu0 %v1790
    %v2792 = vpop.f32.mrb[0].mxu0
    %v2793 = vadd.f32 %v2648, %v2792
    %v2794 = vpop.f32.mrb[0].mxu0
    %2795 = vdwg.mxu0
    %2796 = vmatprep.subr.mxu0 0.0
    %2797 = vmatpush1.msra.mxu0 %v1937
    %2798 = vmatprep.subr.mxu0 0.0
    %2799 = vmatpush1.msra.mxu0 %v1938
    %2800 = vmatprep.subr.mxu0 0.0
    %2801 = vmatpush1.msra.mxu0 %v1939
    %2802 = vmatprep.subr.mxu0 0.0
    %2803 = vmatpush1.msra.mxu0 %v1940
    %2804 = vmatprep.subr.mxu0 0.0
    %2805 = vmatpush1.msra.mxu0 %v1941
    %2806 = vmatprep.subr.mxu0 0.0
    %2807 = vmatpush1.msra.mxu0 %v1942
    %2808 = vmatprep.subr.mxu0 0.0
    %2809 = vmatpush1.msra.mxu0 %v1943
    %2810 = vmatprep.subr.mxu0 0.0
    %2811 = vmatpush1.msra.mxu0 %v1944
    %2812 = vmatprep.subr.mxu0 0.0
    %2813 = vmatpush1.msra.mxu0 %v1945
    %2814 = vmatprep.subr.mxu0 0.0
    %2815 = vmatpush1.msra.mxu0 %v1946
    %2816 = vmatprep.subr.mxu0 0.0
    %2817 = vmatpush1.msra.mxu0 %v1947
    %2818 = vmatprep.subr.mxu0 0.0
    %2819 = vmatpush1.msra.mxu0 %v1948
    %2820 = vmatprep.subr.mxu0 0.0
    %2821 = vmatpush1.msra.mxu0 %v1949
    %2822 = vmatprep.subr.mxu0 0.0
    %2823 = vmatpush1.msra.mxu0 %v1950
    %2824 = vmatprep.subr.mxu0 0.0
    %2825 = vmatpush1.msra.mxu0 %v1951
    %2826 = vmatprep.subr.mxu0 0.0
    %2827 = vmatpush1.msra.mxu0 %v1952
    %2828 = vmatprep.subr.mxu0 0.0
    %2829 = vmatpush1.msra.mxu0 %v1953
    %2830 = vmatprep.subr.mxu0 0.0
    %2831 = vmatpush1.msra.mxu0 %v1954
    %2832 = vmatprep.subr.mxu0 0.0
    %2833 = vmatpush1.msra.mxu0 %v1955
    %2834 = vmatprep.subr.mxu0 0.0
    %2835 = vmatpush1.msra.mxu0 %v1956
    %2836 = vmatprep.subr.mxu0 0.0
    %2837 = vmatpush1.msra.mxu0 %v1957
    %2838 = vmatprep.subr.mxu0 0.0
    %2839 = vmatpush1.msra.mxu0 %v1958
    %2840 = vmatprep.subr.mxu0 0.0
    %2841 = vmatpush1.msra.mxu0 %v1959
    %2842 = vmatprep.subr.mxu0 0.0
    %2843 = vmatpush1.msra.mxu0 %v1960
    %2844 = vmatprep.subr.mxu0 0.0
    %2845 = vmatpush1.msra.mxu0 %v1961
    %2846 = vmatprep.subr.mxu0 0.0
    %2847 = vmatpush1.msra.mxu0 %v1962
    %2848 = vmatprep.subr.mxu0 0.0
    %2849 = vmatpush1.msra.mxu0 %v1963
    %2850 = vmatprep.subr.mxu0 0.0
    %2851 = vmatpush1.msra.mxu0 %v1964
    %2852 = vmatprep.subr.mxu0 0.0
    %2853 = vmatpush1.msra.mxu0 %v1965
    %2854 = vmatprep.subr.mxu0 0.0
    %2855 = vmatpush1.msra.mxu0 %v1966
    %2856 = vmatprep.subr.mxu0 0.0
    %2857 = vmatpush1.msra.mxu0 %v1967
    %2858 = vmatprep.subr.mxu0 0.0
    %2859 = vmatpush1.msra.mxu0 %v1968
    %2860 = vmatprep.mubr.f32.mxu0 %v1418
    %2861 = vmatmul.mubr.f32.gmra.mrb[0].mxu0 %v1417
    %v2862 = vpop.f32.mrb[0].mxu0
    %v2863 = vadd.f32 %v2718, %v2862
    %v2864 = vpop.f32.mrb[0].mxu0
    %2865 = vmatprep.mubr.f32.mxu0 %v1443
    %2866 = vmatmul.mubr.f32.gmra.mrb[0].mxu0 %v1442
    %v2867 = vpop.f32.mrb[0].mxu0
    %v2868 = vadd.f32 %v2723, %v2867
    %v2869 = vpop.f32.mrb[0].mxu0
    %2870 = vmatprep.mubr.f32.mxu0 %v1468
    %2871 = vmatmul.mubr.f32.gmra.mrb[0].mxu0 %v1467
    %v2872 = vpop.f32.mrb[0].mxu0
    %v2873 = vadd.f32 %v2728, %v2872
    %v2874 = vpop.f32.mrb[0].mxu0
    %2875 = vmatprep.mubr.f32.mxu0 %v1493
    %2876 = vmatmul.mubr.f32.gmra.mrb[0].mxu0 %v1492
    %v2877 = vpop.f32.mrb[0].mxu0
    %v2878 = vadd.f32 %v2733, %v2877
    %v2879 = vpop.f32.mrb[0].mxu0
    %2880 = vmatprep.mubr.f32.mxu0 %v1518
    %2881 = vmatmul.mubr.f32.gmra.mrb[0].mxu0 %v1517
    %v2882 = vpop.f32.mrb[0].mxu0
    %v2883 = vadd.f32 %v2738, %v2882
    %v2884 = vpop.f32.mrb[0].mxu0
    %2885 = vmatprep.mubr.f32.mxu0 %v1543
    %2886 = vmatmul.mubr.f32.gmra.mrb[0].mxu0 %v1542
    %v2887 = vpop.f32.mrb[0].mxu0
    %v2888 = vadd.f32 %v2743, %v2887
    %v2889 = vpop.f32.mrb[0].mxu0
    %2890 = vmatprep.mubr.f32.mxu0 %v1568
    %2891 = vmatmul.mubr.f32.gmra.mrb[0].mxu0 %v1567
    %v2892 = vpop.f32.mrb[0].mxu0
    %v2893 = vadd.f32 %v2748, %v2892
    %v2894 = vpop.f32.mrb[0].mxu0
    %2895 = vmatprep.mubr.f32.mxu0 %v1593
    %2896 = vmatmul.mubr.f32.gmra.mrb[0].mxu0 %v1592
    %v2897 = vpop.f32.mrb[0].mxu0
    %v2898 = vadd.f32 %v2753, %v2897
    %v2899 = vpop.f32.mrb[0].mxu0
    %2900 = vmatprep.mubr.f32.mxu0 %v1618
    %2901 = vmatmul.mubr.f32.gmra.mrb[0].mxu0 %v1617
    %v2902 = vpop.f32.mrb[0].mxu0
    %v2903 = vadd.f32 %v2758, %v2902
    %v2904 = vpop.f32.mrb[0].mxu0
    %2905 = vmatprep.mubr.f32.mxu0 %v1643
    %2906 = vmatmul.mubr.f32.gmra.mrb[0].mxu0 %v1642
    %v2907 = vpop.f32.mrb[0].mxu0
    %v2908 = vadd.f32 %v2763, %v2907
    %v2909 = vpop.f32.mrb[0].mxu0
    %2910 = vmatprep.mubr.f32.mxu0 %v1668
    %2911 = vmatmul.mubr.f32.gmra.mrb[0].mxu0 %v1667
    %v2912 = vpop.f32.mrb[0].mxu0
    %v2913 = vadd.f32 %v2768, %v2912
    %v2914 = vpop.f32.mrb[0].mxu0
    %2915 = vmatprep.mubr.f32.mxu0 %v1693
    %2916 = vmatmul.mubr.f32.gmra.mrb[0].mxu0 %v1692
    %v2917 = vpop.f32.mrb[0].mxu0
    %v2918 = vadd.f32 %v2773, %v2917
    %v2919 = vpop.f32.mrb[0].mxu0
    %2920 = vmatprep.mubr.f32.mxu0 %v1718
    %2921 = vmatmul.mubr.f32.gmra.mrb[0].mxu0 %v1717
    %v2922 = vpop.f32.mrb[0].mxu0
    %v2923 = vadd.f32 %v2778, %v2922
    %v2924 = vpop.f32.mrb[0].mxu0
    %2925 = vmatprep.mubr.f32.mxu0 %v1743
    %2926 = vmatmul.mubr.f32.gmra.mrb[0].mxu0 %v1742
    %v2927 = vpop.f32.mrb[0].mxu0
    %v2928 = vadd.f32 %v2783, %v2927
    %v2929 = vpop.f32.mrb[0].mxu0
    %2930 = vmatprep.mubr.f32.mxu0 %v1768
    %2931 = vmatmul.mubr.f32.gmra.mrb[0].mxu0 %v1767
    %v2932 = vpop.f32.mrb[0].mxu0
    %v2933 = vadd.f32 %v2788, %v2932
    %v2934 = vpop.f32.mrb[0].mxu0
    %2935 = vmatprep.mubr.f32.mxu0 %v1793
    %2936 = vmatmul.mubr.f32.gmra.mrb[0].mxu0 %v1792
    %v2937 = vpop.f32.mrb[0].mxu0
    %v2938 = vadd.f32 %v2793, %v2937
    %v2939 = vpop.f32.mrb[0].mxu0
    %2940 = vdwg.mxu0
    %2941 = vmatprep.subr.mxu0 0.0
    %2942 = vmatpush1.msra.mxu0 %v1969
    %2943 = vmatprep.subr.mxu0 0.0
    %2944 = vmatpush1.msra.mxu0 %v1970
    %2945 = vmatprep.subr.mxu0 0.0
    %2946 = vmatpush1.msra.mxu0 %v1971
    %2947 = vmatprep.subr.mxu0 0.0
    %2948 = vmatpush1.msra.mxu0 %v1972
    %2949 = vmatprep.subr.mxu0 0.0
    %2950 = vmatpush1.msra.mxu0 %v1973
    %2951 = vmatprep.subr.mxu0 0.0
    %2952 = vmatpush1.msra.mxu0 %v1974
    %2953 = vmatprep.subr.mxu0 0.0
    %2954 = vmatpush1.msra.mxu0 %v1975
    %2955 = vmatprep.subr.mxu0 0.0
    %2956 = vmatpush1.msra.mxu0 %v1976
    %2957 = vmatprep.subr.mxu0 0.0
    %2958 = vmatpush1.msra.mxu0 %v1977
    %2959 = vmatprep.subr.mxu0 0.0
    %2960 = vmatpush1.msra.mxu0 %v1978
    %2961 = vmatprep.subr.mxu0 0.0
    %2962 = vmatpush1.msra.mxu0 %v1979
    %2963 = vmatprep.subr.mxu0 0.0
    %2964 = vmatpush1.msra.mxu0 %v1980
    %2965 = vmatprep.subr.mxu0 0.0
    %2966 = vmatpush1.msra.mxu0 %v1981
    %2967 = vmatprep.subr.mxu0 0.0
    %2968 = vmatpush1.msra.mxu0 %v1982
    %2969 = vmatprep.subr.mxu0 0.0
    %2970 = vmatpush1.msra.mxu0 %v1983
    %2971 = vmatprep.subr.mxu0 0.0
    %2972 = vmatpush1.msra.mxu0 %v1984
    %2973 = vmatprep.subr.mxu0 0.0
    %2974 = vmatpush1.msra.mxu0 %v1985
    %2975 = vmatprep.subr.mxu0 0.0
    %2976 = vmatpush1.msra.mxu0 %v1986
    %2977 = vmatprep.subr.mxu0 0.0
    %2978 = vmatpush1.msra.mxu0 %v1987
    %2979 = vmatprep.subr.mxu0 0.0
    %2980 = vmatpush1.msra.mxu0 %v1988
    %2981 = vmatprep.subr.mxu0 0.0
    %2982 = vmatpush1.msra.mxu0 %v1989
    %2983 = vmatprep.subr.mxu0 0.0
    %2984 = vmatpush1.msra.mxu0 %v1990
    %2985 = vmatprep.subr.mxu0 0.0
    %2986 = vmatpush1.msra.mxu0 %v1991
    %2987 = vmatprep.subr.mxu0 0.0
    %2988 = vmatpush1.msra.mxu0 %v1992
    %2989 = vmatprep.subr.mxu0 0.0
    %2990 = vmatpush1.msra.mxu0 %v1993
    %2991 = vmatprep.subr.mxu0 0.0
    %2992 = vmatpush1.msra.mxu0 %v1994
    %2993 = vmatprep.subr.mxu0 0.0
    %2994 = vmatpush1.msra.mxu0 %v1995
    %2995 = vmatprep.subr.mxu0 0.0
    %2996 = vmatpush1.msra.mxu0 %v1996
    %2997 = vmatprep.subr.mxu0 0.0
    %2998 = vmatpush1.msra.mxu0 %v1997
    %2999 = vmatprep.subr.mxu0 0.0
    %3000 = vmatpush1.msra.mxu0 %v1998
    %3001 = vmatprep.subr.mxu0 0.0
    %3002 = vmatpush1.msra.mxu0 %v1999
    %3003 = vmatprep.subr.mxu0 0.0
    %3004 = vmatpush1.msra.mxu0 %v2000
    %3005 = vmatprep.mubr.f32.mxu0 %v1420
    %3006 = vmatmul.mubr.f32.gmra.mrb[0].mxu0 %v1419
    %v3007 = vpop.f32.mrb[0].mxu0
    %v3008 = vadd.f32 %v2863, %v3007
    %v3009 = vpop.f32.mrb[0].mxu0
    %3010 = vmatprep.mubr.f32.mxu0 %v1445
    %3011 = vmatmul.mubr.f32.gmra.mrb[0].mxu0 %v1444
    %v3012 = vpop.f32.mrb[0].mxu0
    %v3013 = vadd.f32 %v2868, %v3012
    %v3014 = vpop.f32.mrb[0].mxu0
    %3015 = vmatprep.mubr.f32.mxu0 %v1470
    %3016 = vmatmul.mubr.f32.gmra.mrb[0].mxu0 %v1469
    %v3017 = vpop.f32.mrb[0].mxu0
    %v3018 = vadd.f32 %v2873, %v3017
    %v3019 = vpop.f32.mrb[0].mxu0
    %3020 = vmatprep.mubr.f32.mxu0 %v1495
    %3021 = vmatmul.mubr.f32.gmra.mrb[0].mxu0 %v1494
    %v3022 = vpop.f32.mrb[0].mxu0
    %v3023 = vadd.f32 %v2878, %v3022
    %v3024 = vpop.f32.mrb[0].mxu0
    %3025 = vmatprep.mubr.f32.mxu0 %v1520
    %3026 = vmatmul.mubr.f32.gmra.mrb[0].mxu0 %v1519
    %v3027 = vpop.f32.mrb[0].mxu0
    %v3028 = vadd.f32 %v2883, %v3027
    %v3029 = vpop.f32.mrb[0].mxu0
    %3030 = vmatprep.mubr.f32.mxu0 %v1545
    %3031 = vmatmul.mubr.f32.gmra.mrb[0].mxu0 %v1544
    %v3032 = vpop.f32.mrb[0].mxu0
    %v3033 = vadd.f32 %v2888, %v3032
    %v3034 = vpop.f32.mrb[0].mxu0
    %3035 = vmatprep.mubr.f32.mxu0 %v1570
    %3036 = vmatmul.mubr.f32.gmra.mrb[0].mxu0 %v1569
    %v3037 = vpop.f32.mrb[0].mxu0
    %v3038 = vadd.f32 %v2893, %v3037
    %v3039 = vpop.f32.mrb[0].mxu0
    %3040 = vmatprep.mubr.f32.mxu0 %v1595
    %3041 = vmatmul.mubr.f32.gmra.mrb[0].mxu0 %v1594
    %v3042 = vpop.f32.mrb[0].mxu0
    %v3043 = vadd.f32 %v2898, %v3042
    %v3044 = vpop.f32.mrb[0].mxu0
    %3045 = vmatprep.mubr.f32.mxu0 %v1620
    %3046 = vmatmul.mubr.f32.gmra.mrb[0].mxu0 %v1619
    %v3047 = vpop.f32.mrb[0].mxu0
    %v3048 = vadd.f32 %v2903, %v3047
    %v3049 = vpop.f32.mrb[0].mxu0
    %3050 = vmatprep.mubr.f32.mxu0 %v1645
    %3051 = vmatmul.mubr.f32.gmra.mrb[0].mxu0 %v1644
    %v3052 = vpop.f32.mrb[0].mxu0
    %v3053 = vadd.f32 %v2908, %v3052
    %v3054 = vpop.f32.mrb[0].mxu0
    %3055 = vmatprep.mubr.f32.mxu0 %v1670
    %3056 = vmatmul.mubr.f32.gmra.mrb[0].mxu0 %v1669
    %v3057 = vpop.f32.mrb[0].mxu0
    %v3058 = vadd.f32 %v2913, %v3057
    %v3059 = vpop.f32.mrb[0].mxu0
    %3060 = vmatprep.mubr.f32.mxu0 %v1695
    %3061 = vmatmul.mubr.f32.gmra.mrb[0].mxu0 %v1694
    %v3062 = vpop.f32.mrb[0].mxu0
    %v3063 = vadd.f32 %v2918, %v3062
    %v3064 = vpop.f32.mrb[0].mxu0
    %3065 = vmatprep.mubr.f32.mxu0 %v1720
    %3066 = vmatmul.mubr.f32.gmra.mrb[0].mxu0 %v1719
    %v3067 = vpop.f32.mrb[0].mxu0
    %v3068 = vadd.f32 %v2923, %v3067
    %v3069 = vpop.f32.mrb[0].mxu0
    %3070 = vmatprep.mubr.f32.mxu0 %v1745
    %3071 = vmatmul.mubr.f32.gmra.mrb[0].mxu0 %v1744
    %v3072 = vpop.f32.mrb[0].mxu0
    %v3073 = vadd.f32 %v2928, %v3072
    %v3074 = vpop.f32.mrb[0].mxu0
    %3075 = vmatprep.mubr.f32.mxu0 %v1770
    %3076 = vmatmul.mubr.f32.gmra.mrb[0].mxu0 %v1769
    %v3077 = vpop.f32.mrb[0].mxu0
    %v3078 = vadd.f32 %v2933, %v3077
    %v3079 = vpop.f32.mrb[0].mxu0
    %3080 = vmatprep.mubr.f32.mxu0 %v1795
    %3081 = vmatmul.mubr.f32.gmra.mrb[0].mxu0 %v1794
    %v3082 = vpop.f32.mrb[0].mxu0
    %v3083 = vadd.f32 %v2938, %v3082
    %v3084 = vpop.f32.mrb[0].mxu0
    %3085 = vdwg.mxu0
    %3086 = vmatprep.subr.mxu0 0.0
    %3087 = vmatpush1.msra.mxu0 %v2001
    %3088 = vmatprep.subr.mxu0 0.0
    %3089 = vmatpush1.msra.mxu0 %v2002
    %3090 = vmatprep.subr.mxu0 0.0
    %3091 = vmatpush1.msra.mxu0 %v2003
    %3092 = vmatprep.subr.mxu0 0.0
    %3093 = vmatpush1.msra.mxu0 %v2004
    %3094 = vmatprep.subr.mxu0 0.0
    %3095 = vmatpush1.msra.mxu0 %v2005
    %3096 = vmatprep.subr.mxu0 0.0
    %3097 = vmatpush1.msra.mxu0 %v2006
    %3098 = vmatprep.subr.mxu0 0.0
    %3099 = vmatpush1.msra.mxu0 %v2007
    %3100 = vmatprep.subr.mxu0 0.0
    %3101 = vmatpush1.msra.mxu0 %v2008
    %3102 = vmatprep.subr.mxu0 0.0
    %3103 = vmatpush1.msra.mxu0 %v2009
    %3104 = vmatprep.subr.mxu0 0.0
    %3105 = vmatpush1.msra.mxu0 %v2010
    %3106 = vmatprep.subr.mxu0 0.0
    %3107 = vmatpush1.msra.mxu0 %v2011
    %3108 = vmatprep.subr.mxu0 0.0
    %3109 = vmatpush1.msra.mxu0 %v2012
    %3110 = vmatprep.subr.mxu0 0.0
    %3111 = vmatpush1.msra.mxu0 %v2013
    %3112 = vmatprep.subr.mxu0 0.0
    %3113 = vmatpush1.msra.mxu0 %v2014
    %3114 = vmatprep.subr.mxu0 0.0
    %3115 = vmatpush1.msra.mxu0 %v2015
    %3116 = vmatprep.subr.mxu0 0.0
    %3117 = vmatpush1.msra.mxu0 %v2016
    %3118 = vmatprep.subr.mxu0 0.0
    %3119 = vmatpush1.msra.mxu0 %v2017
    %3120 = vmatprep.subr.mxu0 0.0
    %3121 = vmatpush1.msra.mxu0 %v2018
    %3122 = vmatprep.subr.mxu0 0.0
    %3123 = vmatpush1.msra.mxu0 %v2019
    %3124 = vmatprep.subr.mxu0 0.0
    %3125 = vmatpush1.msra.mxu0 %v2020
    %3126 = vmatprep.subr.mxu0 0.0
    %3127 = vmatpush1.msra.mxu0 %v2021
    %3128 = vmatprep.subr.mxu0 0.0
    %3129 = vmatpush1.msra.mxu0 %v2022
    %3130 = vmatprep.subr.mxu0 0.0
    %3131 = vmatpush1.msra.mxu0 %v2023
    %3132 = vmatprep.subr.mxu0 0.0
    %3133 = vmatpush1.msra.mxu0 %v2024
    %3134 = vmatprep.subr.mxu0 0.0
    %3135 = vmatpush1.msra.mxu0 %v2025
    %3136 = vmatprep.subr.mxu0 0.0
    %3137 = vmatpush1.msra.mxu0 %v2026
    %3138 = vmatprep.subr.mxu0 0.0
    %3139 = vmatpush1.msra.mxu0 %v2027
    %3140 = vmatprep.subr.mxu0 0.0
    %3141 = vmatpush1.msra.mxu0 %v2028
    %3142 = vmatprep.subr.mxu0 0.0
    %3143 = vmatpush1.msra.mxu0 %v2029
    %3144 = vmatprep.subr.mxu0 0.0
    %3145 = vmatpush1.msra.mxu0 %v2030
    %3146 = vmatprep.subr.mxu0 0.0
    %3147 = vmatpush1.msra.mxu0 %v2031
    %3148 = vmatprep.subr.mxu0 0.0
    %3149 = vmatpush1.msra.mxu0 %v2032
    %3150 = vmatprep.mubr.f32.mxu0 %v1422
    %3151 = vmatmul.mubr.f32.gmra.mrb[0].mxu0 %v1421
    %v3152 = vpop.f32.mrb[0].mxu0
    %v3153 = vadd.f32 %v3008, %v3152
    %v3154 = vpop.f32.mrb[0].mxu0
    %3155 = vmatprep.mubr.f32.mxu0 %v1447
    %3156 = vmatmul.mubr.f32.gmra.mrb[0].mxu0 %v1446
    %v3157 = vpop.f32.mrb[0].mxu0
    %v3158 = vadd.f32 %v3013, %v3157
    %v3159 = vpop.f32.mrb[0].mxu0
    %3160 = vmatprep.mubr.f32.mxu0 %v1472
    %3161 = vmatmul.mubr.f32.gmra.mrb[0].mxu0 %v1471
    %v3162 = vpop.f32.mrb[0].mxu0
    %v3163 = vadd.f32 %v3018, %v3162
    %v3164 = vpop.f32.mrb[0].mxu0
    %3165 = vmatprep.mubr.f32.mxu0 %v1497
    %3166 = vmatmul.mubr.f32.gmra.mrb[0].mxu0 %v1496
    %v3167 = vpop.f32.mrb[0].mxu0
    %v3168 = vadd.f32 %v3023, %v3167
    %v3169 = vpop.f32.mrb[0].mxu0
    %3170 = vmatprep.mubr.f32.mxu0 %v1522
    %3171 = vmatmul.mubr.f32.gmra.mrb[0].mxu0 %v1521
    %v3172 = vpop.f32.mrb[0].mxu0
    %v3173 = vadd.f32 %v3028, %v3172
    %v3174 = vpop.f32.mrb[0].mxu0
    %3175 = vmatprep.mubr.f32.mxu0 %v1547
    %3176 = vmatmul.mubr.f32.gmra.mrb[0].mxu0 %v1546
    %v3177 = vpop.f32.mrb[0].mxu0
    %v3178 = vadd.f32 %v3033, %v3177
    %v3179 = vpop.f32.mrb[0].mxu0
    %3180 = vmatprep.mubr.f32.mxu0 %v1572
    %3181 = vmatmul.mubr.f32.gmra.mrb[0].mxu0 %v1571
    %v3182 = vpop.f32.mrb[0].mxu0
    %v3183 = vadd.f32 %v3038, %v3182
    %v3184 = vpop.f32.mrb[0].mxu0
    %3185 = vmatprep.mubr.f32.mxu0 %v1597
    %3186 = vmatmul.mubr.f32.gmra.mrb[0].mxu0 %v1596
    %v3187 = vpop.f32.mrb[0].mxu0
    %v3188 = vadd.f32 %v3043, %v3187
    %v3189 = vpop.f32.mrb[0].mxu0
    %3190 = vmatprep.mubr.f32.mxu0 %v1622
    %3191 = vmatmul.mubr.f32.gmra.mrb[0].mxu0 %v1621
    %v3192 = vpop.f32.mrb[0].mxu0
    %v3193 = vadd.f32 %v3048, %v3192
    %v3194 = vpop.f32.mrb[0].mxu0
    %3195 = vmatprep.mubr.f32.mxu0 %v1647
    %3196 = vmatmul.mubr.f32.gmra.mrb[0].mxu0 %v1646
    %v3197 = vpop.f32.mrb[0].mxu0
    %v3198 = vadd.f32 %v3053, %v3197
    %v3199 = vpop.f32.mrb[0].mxu0
    %3200 = vmatprep.mubr.f32.mxu0 %v1672
    %3201 = vmatmul.mubr.f32.gmra.mrb[0].mxu0 %v1671
    %v3202 = vpop.f32.mrb[0].mxu0
    %v3203 = vadd.f32 %v3058, %v3202
    %v3204 = vpop.f32.mrb[0].mxu0
    %3205 = vmatprep.mubr.f32.mxu0 %v1697
    %3206 = vmatmul.mubr.f32.gmra.mrb[0].mxu0 %v1696
    %v3207 = vpop.f32.mrb[0].mxu0
    %v3208 = vadd.f32 %v3063, %v3207
    %v3209 = vpop.f32.mrb[0].mxu0
    %3210 = vmatprep.mubr.f32.mxu0 %v1722
    %3211 = vmatmul.mubr.f32.gmra.mrb[0].mxu0 %v1721
    %v3212 = vpop.f32.mrb[0].mxu0
    %v3213 = vadd.f32 %v3068, %v3212
    %v3214 = vpop.f32.mrb[0].mxu0
    %3215 = vmatprep.mubr.f32.mxu0 %v1747
    %3216 = vmatmul.mubr.f32.gmra.mrb[0].mxu0 %v1746
    %v3217 = vpop.f32.mrb[0].mxu0
    %v3218 = vadd.f32 %v3073, %v3217
    %v3219 = vpop.f32.mrb[0].mxu0
    %3220 = vmatprep.mubr.f32.mxu0 %v1772
    %3221 = vmatmul.mubr.f32.gmra.mrb[0].mxu0 %v1771
    %v3222 = vpop.f32.mrb[0].mxu0
    %v3223 = vadd.f32 %v3078, %v3222
    %v3224 = vpop.f32.mrb[0].mxu0
    %3225 = vmatprep.mubr.f32.mxu0 %v1797
    %3226 = vmatmul.mubr.f32.gmra.mrb[0].mxu0 %v1796
    %v3227 = vpop.f32.mrb[0].mxu0
    %v3228 = vadd.f32 %v3083, %v3227
    %v3229 = vpop.f32.mrb[0].mxu0
    %3230 = vdwg.mxu0
    %3231 = vmatprep.subr.mxu0 0.0
    %3232 = vmatpush1.msra.mxu0 %v2033
    %3233 = vmatprep.subr.mxu0 0.0
    %3234 = vmatpush1.msra.mxu0 %v2034
    %3235 = vmatprep.subr.mxu0 0.0
    %3236 = vmatpush1.msra.mxu0 %v2035
    %3237 = vmatprep.subr.mxu0 0.0
    %3238 = vmatpush1.msra.mxu0 %v2036
    %3239 = vmatprep.subr.mxu0 0.0
    %3240 = vmatpush1.msra.mxu0 %v2037
    %3241 = vmatprep.subr.mxu0 0.0
    %3242 = vmatpush1.msra.mxu0 %v2038
    %3243 = vmatprep.subr.mxu0 0.0
    %3244 = vmatpush1.msra.mxu0 %v2039
    %3245 = vmatprep.subr.mxu0 0.0
    %3246 = vmatpush1.msra.mxu0 %v2040
    %3247 = vmatprep.subr.mxu0 0.0
    %3248 = vmatpush1.msra.mxu0 %v2041
    %3249 = vmatprep.subr.mxu0 0.0
    %3250 = vmatpush1.msra.mxu0 %v2042
    %3251 = vmatprep.subr.mxu0 0.0
    %3252 = vmatpush1.msra.mxu0 %v2043
    %3253 = vmatprep.subr.mxu0 0.0
    %3254 = vmatpush1.msra.mxu0 %v2044
    %3255 = vmatprep.subr.mxu0 0.0
    %3256 = vmatpush1.msra.mxu0 %v2045
    %3257 = vmatprep.subr.mxu0 0.0
    %3258 = vmatpush1.msra.mxu0 %v2046
    %3259 = vmatprep.subr.mxu0 0.0
    %3260 = vmatpush1.msra.mxu0 %v2047
    %3261 = vmatprep.subr.mxu0 0.0
    %3262 = vmatpush1.msra.mxu0 %v2048
    %3263 = vmatprep.subr.mxu0 0.0
    %3264 = vmatpush1.msra.mxu0 %v2049
    %3265 = vmatprep.subr.mxu0 0.0
    %3266 = vmatpush1.msra.mxu0 %v2050
    %3267 = vmatprep.subr.mxu0 0.0
    %3268 = vmatpush1.msra.mxu0 %v2051
    %3269 = vmatprep.subr.mxu0 0.0
    %3270 = vmatpush1.msra.mxu0 %v2052
    %3271 = vmatprep.subr.mxu0 0.0
    %3272 = vmatpush1.msra.mxu0 %v2053
    %3273 = vmatprep.subr.mxu0 0.0
    %3274 = vmatpush1.msra.mxu0 %v2054
    %3275 = vmatprep.subr.mxu0 0.0
    %3276 = vmatpush1.msra.mxu0 %v2055
    %3277 = vmatprep.subr.mxu0 0.0
    %3278 = vmatpush1.msra.mxu0 %v2056
    %3279 = vmatprep.subr.mxu0 0.0
    %3280 = vmatpush1.msra.mxu0 %v2057
    %3281 = vmatprep.subr.mxu0 0.0
    %3282 = vmatpush1.msra.mxu0 %v2058
    %3283 = vmatprep.subr.mxu0 0.0
    %3284 = vmatpush1.msra.mxu0 %v2059
    %3285 = vmatprep.subr.mxu0 0.0
    %3286 = vmatpush1.msra.mxu0 %v2060
    %3287 = vmatprep.subr.mxu0 0.0
    %3288 = vmatpush1.msra.mxu0 %v2061
    %3289 = vmatprep.subr.mxu0 0.0
    %3290 = vmatpush1.msra.mxu0 %v2062
    %3291 = vmatprep.subr.mxu0 0.0
    %3292 = vmatpush1.msra.mxu0 %v2063
    %3293 = vmatprep.subr.mxu0 0.0
    %3294 = vmatpush1.msra.mxu0 %v2064
    %3295 = vmatprep.mubr.f32.mxu0 %v1424
    %3296 = vmatmul.mubr.f32.gmra.mrb[0].mxu0 %v1423
    %v3297 = vpop.f32.mrb[0].mxu0
    %v3298 = vadd.f32 %v3153, %v3297
    %v3299 = vpop.f32.mrb[0].mxu0
    %3300 = vmatprep.mubr.f32.mxu0 %v1449
    %3301 = vmatmul.mubr.f32.gmra.mrb[0].mxu0 %v1448
    %v3302 = vpop.f32.mrb[0].mxu0
    %v3303 = vadd.f32 %v3158, %v3302
    %v3304 = vpop.f32.mrb[0].mxu0
    %3305 = vmatprep.mubr.f32.mxu0 %v1474
    %3306 = vmatmul.mubr.f32.gmra.mrb[0].mxu0 %v1473
    %v3307 = vpop.f32.mrb[0].mxu0
    %v3308 = vadd.f32 %v3163, %v3307
    %v3309 = vpop.f32.mrb[0].mxu0
    %3310 = vmatprep.mubr.f32.mxu0 %v1499
    %3311 = vmatmul.mubr.f32.gmra.mrb[0].mxu0 %v1498
    %v3312 = vpop.f32.mrb[0].mxu0
    %v3313 = vadd.f32 %v3168, %v3312
    %v3314 = vpop.f32.mrb[0].mxu0
    %3315 = vmatprep.mubr.f32.mxu0 %v1524
    %3316 = vmatmul.mubr.f32.gmra.mrb[0].mxu0 %v1523
    %v3317 = vpop.f32.mrb[0].mxu0
    %v3318 = vadd.f32 %v3173, %v3317
    %v3319 = vpop.f32.mrb[0].mxu0
    %3320 = vmatprep.mubr.f32.mxu0 %v1549
    %3321 = vmatmul.mubr.f32.gmra.mrb[0].mxu0 %v1548
    %v3322 = vpop.f32.mrb[0].mxu0
    %v3323 = vadd.f32 %v3178, %v3322
    %v3324 = vpop.f32.mrb[0].mxu0
    %3325 = vmatprep.mubr.f32.mxu0 %v1574
    %3326 = vmatmul.mubr.f32.gmra.mrb[0].mxu0 %v1573
    %v3327 = vpop.f32.mrb[0].mxu0
    %v3328 = vadd.f32 %v3183, %v3327
    %v3329 = vpop.f32.mrb[0].mxu0
    %3330 = vmatprep.mubr.f32.mxu0 %v1599
    %3331 = vmatmul.mubr.f32.gmra.mrb[0].mxu0 %v1598
    %v3332 = vpop.f32.mrb[0].mxu0
    %v3333 = vadd.f32 %v3188, %v3332
    %v3334 = vpop.f32.mrb[0].mxu0
    %3335 = vmatprep.mubr.f32.mxu0 %v1624
    %3336 = vmatmul.mubr.f32.gmra.mrb[0].mxu0 %v1623
    %v3337 = vpop.f32.mrb[0].mxu0
    %v3338 = vadd.f32 %v3193, %v3337
    %v3339 = vpop.f32.mrb[0].mxu0
    %3340 = vmatprep.mubr.f32.mxu0 %v1649
    %3341 = vmatmul.mubr.f32.gmra.mrb[0].mxu0 %v1648
    %v3342 = vpop.f32.mrb[0].mxu0
    %v3343 = vadd.f32 %v3198, %v3342
    %v3344 = vpop.f32.mrb[0].mxu0
    %3345 = vmatprep.mubr.f32.mxu0 %v1674
    %3346 = vmatmul.mubr.f32.gmra.mrb[0].mxu0 %v1673
    %v3347 = vpop.f32.mrb[0].mxu0
    %v3348 = vadd.f32 %v3203, %v3347
    %v3349 = vpop.f32.mrb[0].mxu0
    %3350 = vmatprep.mubr.f32.mxu0 %v1699
    %3351 = vmatmul.mubr.f32.gmra.mrb[0].mxu0 %v1698
    %v3352 = vpop.f32.mrb[0].mxu0
    %v3353 = vadd.f32 %v3208, %v3352
    %v3354 = vpop.f32.mrb[0].mxu0
    %3355 = vmatprep.mubr.f32.mxu0 %v1724
    %3356 = vmatmul.mubr.f32.gmra.mrb[0].mxu0 %v1723
    %v3357 = vpop.f32.mrb[0].mxu0
    %v3358 = vadd.f32 %v3213, %v3357
    %v3359 = vpop.f32.mrb[0].mxu0
    %3360 = vmatprep.mubr.f32.mxu0 %v1749
    %3361 = vmatmul.mubr.f32.gmra.mrb[0].mxu0 %v1748
    %v3362 = vpop.f32.mrb[0].mxu0
    %v3363 = vadd.f32 %v3218, %v3362
    %v3364 = vpop.f32.mrb[0].mxu0
    %3365 = vmatprep.mubr.f32.mxu0 %v1774
    %3366 = vmatmul.mubr.f32.gmra.mrb[0].mxu0 %v1773
    %v3367 = vpop.f32.mrb[0].mxu0
    %v3368 = vadd.f32 %v3223, %v3367
    %v3369 = vpop.f32.mrb[0].mxu0
    %3370 = vmatprep.mubr.f32.mxu0 %v1799
    %3371 = vmatmul.mubr.f32.gmra.mrb[0].mxu0 %v1798
    %v3372 = vpop.f32.mrb[0].mxu0
    %v3373 = vadd.f32 %v3228, %v3372
    %v3374 = vpop.f32.mrb[0].mxu0
    %3375 = vdwg.mxu0
    %3376 = vmatprep.subr.mxu0 0.0
    %3377 = vmatpush1.msra.mxu0 %v2065
    %3378 = vmatprep.subr.mxu0 0.0
    %3379 = vmatpush1.msra.mxu0 %v2066
    %3380 = vmatprep.subr.mxu0 0.0
    %3381 = vmatpush1.msra.mxu0 %v2067
    %3382 = vmatprep.subr.mxu0 0.0
    %3383 = vmatpush1.msra.mxu0 %v2068
    %3384 = vmatprep.subr.mxu0 0.0
    %3385 = vmatpush1.msra.mxu0 %v2069
    %3386 = vmatprep.subr.mxu0 0.0
    %3387 = vmatpush1.msra.mxu0 %v2070
    %3388 = vmatprep.subr.mxu0 0.0
    %3389 = vmatpush1.msra.mxu0 %v2071
    %3390 = vmatprep.subr.mxu0 0.0
    %3391 = vmatpush1.msra.mxu0 %v2072
    %3392 = vmatprep.subr.mxu0 0.0
    %3393 = vmatpush1.msra.mxu0 %v2073
    %3394 = vmatprep.subr.mxu0 0.0
    %3395 = vmatpush1.msra.mxu0 %v2074
    %3396 = vmatprep.subr.mxu0 0.0
    %3397 = vmatpush1.msra.mxu0 %v2075
    %3398 = vmatprep.subr.mxu0 0.0
    %3399 = vmatpush1.msra.mxu0 %v2076
    %3400 = vmatprep.subr.mxu0 0.0
    %3401 = vmatpush1.msra.mxu0 %v2077
    %3402 = vmatprep.subr.mxu0 0.0
    %3403 = vmatpush1.msra.mxu0 %v2078
    %3404 = vmatprep.subr.mxu0 0.0
    %3405 = vmatpush1.msra.mxu0 %v2079
    %3406 = vmatprep.subr.mxu0 0.0
    %3407 = vmatpush1.msra.mxu0 %v2080
    %3408 = vmatprep.subr.mxu0 0.0
    %3409 = vmatpush1.msra.mxu0 %v2081
    %3410 = vmatprep.subr.mxu0 0.0
    %3411 = vmatpush1.msra.mxu0 %v2082
    %3412 = vmatprep.subr.mxu0 0.0
    %3413 = vmatpush1.msra.mxu0 %v2083
    %3414 = vmatprep.subr.mxu0 0.0
    %3415 = vmatpush1.msra.mxu0 %v2084
    %3416 = vmatprep.subr.mxu0 0.0
    %3417 = vmatpush1.msra.mxu0 %v2085
    %3418 = vmatprep.subr.mxu0 0.0
    %3419 = vmatpush1.msra.mxu0 %v2086
    %3420 = vmatprep.subr.mxu0 0.0
    %3421 = vmatpush1.msra.mxu0 %v2087
    %3422 = vmatprep.subr.mxu0 0.0
    %3423 = vmatpush1.msra.mxu0 %v2088
    %3424 = vmatprep.subr.mxu0 0.0
    %3425 = vmatpush1.msra.mxu0 %v2089
    %3426 = vmatprep.subr.mxu0 0.0
    %3427 = vmatpush1.msra.mxu0 %v2090
    %3428 = vmatprep.subr.mxu0 0.0
    %3429 = vmatpush1.msra.mxu0 %v2091
    %3430 = vmatprep.subr.mxu0 0.0
    %3431 = vmatpush1.msra.mxu0 %v2092
    %3432 = vmatprep.subr.mxu0 0.0
    %3433 = vmatpush1.msra.mxu0 %v2093
    %3434 = vmatprep.subr.mxu0 0.0
    %3435 = vmatpush1.msra.mxu0 %v2094
    %3436 = vmatprep.subr.mxu0 0.0
    %3437 = vmatpush1.msra.mxu0 %v2095
    %3438 = vmatprep.subr.mxu0 0.0
    %3439 = vmatpush1.msra.mxu0 %v2096
    %3440 = vmatprep.mubr.f32.mxu0 %v1426
    %3441 = vmatmul.mubr.f32.gmra.mrb[0].mxu0 %v1425
    %v3442 = vpop.f32.mrb[0].mxu0
    %v3443 = vadd.f32 %v3298, %v3442
    %v3444 = vpop.f32.mrb[0].mxu0
    %3445 = vmatprep.mubr.f32.mxu0 %v1451
    %3446 = vmatmul.mubr.f32.gmra.mrb[0].mxu0 %v1450
    %v3447 = vpop.f32.mrb[0].mxu0
    %v3448 = vadd.f32 %v3303, %v3447
    %v3449 = vpop.f32.mrb[0].mxu0
    %3450 = vmatprep.mubr.f32.mxu0 %v1476
    %3451 = vmatmul.mubr.f32.gmra.mrb[0].mxu0 %v1475
    %v3452 = vpop.f32.mrb[0].mxu0
    %v3453 = vadd.f32 %v3308, %v3452
    %v3454 = vpop.f32.mrb[0].mxu0
    %3455 = vmatprep.mubr.f32.mxu0 %v1501
    %3456 = vmatmul.mubr.f32.gmra.mrb[0].mxu0 %v1500
    %v3457 = vpop.f32.mrb[0].mxu0
    %v3458 = vadd.f32 %v3313, %v3457
    %v3459 = vpop.f32.mrb[0].mxu0
    %3460 = vmatprep.mubr.f32.mxu0 %v1526
    %3461 = vmatmul.mubr.f32.gmra.mrb[0].mxu0 %v1525
    %v3462 = vpop.f32.mrb[0].mxu0
    %v3463 = vadd.f32 %v3318, %v3462
    %v3464 = vpop.f32.mrb[0].mxu0
    %3465 = vmatprep.mubr.f32.mxu0 %v1551
    %3466 = vmatmul.mubr.f32.gmra.mrb[0].mxu0 %v1550
    %v3467 = vpop.f32.mrb[0].mxu0
    %v3468 = vadd.f32 %v3323, %v3467
    %v3469 = vpop.f32.mrb[0].mxu0
    %3470 = vmatprep.mubr.f32.mxu0 %v1576
    %3471 = vmatmul.mubr.f32.gmra.mrb[0].mxu0 %v1575
    %v3472 = vpop.f32.mrb[0].mxu0
    %v3473 = vadd.f32 %v3328, %v3472
    %v3474 = vpop.f32.mrb[0].mxu0
    %3475 = vmatprep.mubr.f32.mxu0 %v1601
    %3476 = vmatmul.mubr.f32.gmra.mrb[0].mxu0 %v1600
    %v3477 = vpop.f32.mrb[0].mxu0
    %v3478 = vadd.f32 %v3333, %v3477
    %v3479 = vpop.f32.mrb[0].mxu0
    %3480 = vmatprep.mubr.f32.mxu0 %v1626
    %3481 = vmatmul.mubr.f32.gmra.mrb[0].mxu0 %v1625
    %v3482 = vpop.f32.mrb[0].mxu0
    %v3483 = vadd.f32 %v3338, %v3482
    %v3484 = vpop.f32.mrb[0].mxu0
    %3485 = vmatprep.mubr.f32.mxu0 %v1651
    %3486 = vmatmul.mubr.f32.gmra.mrb[0].mxu0 %v1650
    %v3487 = vpop.f32.mrb[0].mxu0
    %v3488 = vadd.f32 %v3343, %v3487
    %v3489 = vpop.f32.mrb[0].mxu0
    %3490 = vmatprep.mubr.f32.mxu0 %v1676
    %3491 = vmatmul.mubr.f32.gmra.mrb[0].mxu0 %v1675
    %v3492 = vpop.f32.mrb[0].mxu0
    %v3493 = vadd.f32 %v3348, %v3492
    %v3494 = vpop.f32.mrb[0].mxu0
    %3495 = vmatprep.mubr.f32.mxu0 %v1701
    %3496 = vmatmul.mubr.f32.gmra.mrb[0].mxu0 %v1700
    %v3497 = vpop.f32.mrb[0].mxu0
    %v3498 = vadd.f32 %v3353, %v3497
    %v3499 = vpop.f32.mrb[0].mxu0
    %3500 = vmatprep.mubr.f32.mxu0 %v1726
    %3501 = vmatmul.mubr.f32.gmra.mrb[0].mxu0 %v1725
    %v3502 = vpop.f32.mrb[0].mxu0
    %v3503 = vadd.f32 %v3358, %v3502
    %v3504 = vpop.f32.mrb[0].mxu0
    %3505 = vmatprep.mubr.f32.mxu0 %v1751
    %3506 = vmatmul.mubr.f32.gmra.mrb[0].mxu0 %v1750
    %v3507 = vpop.f32.mrb[0].mxu0
    %v3508 = vadd.f32 %v3363, %v3507
    %v3509 = vpop.f32.mrb[0].mxu0
    %3510 = vmatprep.mubr.f32.mxu0 %v1776
    %3511 = vmatmul.mubr.f32.gmra.mrb[0].mxu0 %v1775
    %v3512 = vpop.f32.mrb[0].mxu0
    %v3513 = vadd.f32 %v3368, %v3512
    %v3514 = vpop.f32.mrb[0].mxu0
    %3515 = vmatprep.mubr.f32.mxu0 %v1801
    %3516 = vmatmul.mubr.f32.gmra.mrb[0].mxu0 %v1800
    %v3517 = vpop.f32.mrb[0].mxu0
    %v3518 = vadd.f32 %v3373, %v3517
    %v3519 = vpop.f32.mrb[0].mxu0
    %3520 = vdwg.mxu0
    %3521 = vmatprep.subr.mxu0 0.0
    %3522 = vmatpush1.msra.mxu0 %v2097
    %3523 = vmatprep.subr.mxu0 0.0
    %3524 = vmatpush1.msra.mxu0 %v2098
    %3525 = vmatprep.subr.mxu0 0.0
    %3526 = vmatpush1.msra.mxu0 %v2099
    %3527 = vmatprep.subr.mxu0 0.0
    %3528 = vmatpush1.msra.mxu0 %v2100
    %3529 = vmatprep.subr.mxu0 0.0
    %3530 = vmatpush1.msra.mxu0 %v2101
    %3531 = vmatprep.subr.mxu0 0.0
    %3532 = vmatpush1.msra.mxu0 %v2102
    %3533 = vmatprep.subr.mxu0 0.0
    %3534 = vmatpush1.msra.mxu0 %v2103
    %3535 = vmatprep.subr.mxu0 0.0
    %3536 = vmatpush1.msra.mxu0 %v2104
    %3537 = vmatprep.subr.mxu0 0.0
    %3538 = vmatpush1.msra.mxu0 %v2105
    %3539 = vmatprep.subr.mxu0 0.0
    %3540 = vmatpush1.msra.mxu0 %v2106
    %3541 = vmatprep.subr.mxu0 0.0
    %3542 = vmatpush1.msra.mxu0 %v2107
    %3543 = vmatprep.subr.mxu0 0.0
    %3544 = vmatpush1.msra.mxu0 %v2108
    %3545 = vmatprep.subr.mxu0 0.0
    %3546 = vmatpush1.msra.mxu0 %v2109
    %3547 = vmatprep.subr.mxu0 0.0
    %3548 = vmatpush1.msra.mxu0 %v2110
    %3549 = vmatprep.subr.mxu0 0.0
    %3550 = vmatpush1.msra.mxu0 %v2111
    %3551 = vmatprep.subr.mxu0 0.0
    %3552 = vmatpush1.msra.mxu0 %v2112
    %3553 = vmatprep.subr.mxu0 0.0
    %3554 = vmatpush1.msra.mxu0 %v2113
    %3555 = vmatprep.subr.mxu0 0.0
    %3556 = vmatpush1.msra.mxu0 %v2114
    %3557 = vmatprep.subr.mxu0 0.0
    %3558 = vmatpush1.msra.mxu0 %v2115
    %3559 = vmatprep.subr.mxu0 0.0
    %3560 = vmatpush1.msra.mxu0 %v2116
    %3561 = vmatprep.subr.mxu0 0.0
    %3562 = vmatpush1.msra.mxu0 %v2117
    %3563 = vmatprep.subr.mxu0 0.0
    %3564 = vmatpush1.msra.mxu0 %v2118
    %3565 = vmatprep.subr.mxu0 0.0
    %3566 = vmatpush1.msra.mxu0 %v2119
    %3567 = vmatprep.subr.mxu0 0.0
    %3568 = vmatpush1.msra.mxu0 %v2120
    %3569 = vmatprep.subr.mxu0 0.0
    %3570 = vmatpush1.msra.mxu0 %v2121
    %3571 = vmatprep.subr.mxu0 0.0
    %3572 = vmatpush1.msra.mxu0 %v2122
    %3573 = vmatprep.subr.mxu0 0.0
    %3574 = vmatpush1.msra.mxu0 %v2123
    %3575 = vmatprep.subr.mxu0 0.0
    %3576 = vmatpush1.msra.mxu0 %v2124
    %3577 = vmatprep.subr.mxu0 0.0
    %3578 = vmatpush1.msra.mxu0 %v2125
    %3579 = vmatprep.subr.mxu0 0.0
    %3580 = vmatpush1.msra.mxu0 %v2126
    %3581 = vmatprep.subr.mxu0 0.0
    %3582 = vmatpush1.msra.mxu0 %v2127
    %3583 = vmatprep.subr.mxu0 0.0
    %3584 = vmatpush1.msra.mxu0 %v2128
    %3585 = vmatprep.mubr.f32.mxu0 %v1428
    %3586 = vmatmul.mubr.f32.gmra.mrb[0].mxu0 %v1427
    %v3587 = vpop.f32.mrb[0].mxu0
    %v3588 = vadd.f32 %v3443, %v3587
    %v3589 = vpop.f32.mrb[0].mxu0
    %3590 = vmatprep.mubr.f32.mxu0 %v1453
    %3591 = vmatmul.mubr.f32.gmra.mrb[0].mxu0 %v1452
    %v3592 = vpop.f32.mrb[0].mxu0
    %v3593 = vadd.f32 %v3448, %v3592
    %v3594 = vpop.f32.mrb[0].mxu0
    %3595 = vmatprep.mubr.f32.mxu0 %v1478
    %3596 = vmatmul.mubr.f32.gmra.mrb[0].mxu0 %v1477
    %v3597 = vpop.f32.mrb[0].mxu0
    %v3598 = vadd.f32 %v3453, %v3597
    %v3599 = vpop.f32.mrb[0].mxu0
    %3600 = vmatprep.mubr.f32.mxu0 %v1503
    %3601 = vmatmul.mubr.f32.gmra.mrb[0].mxu0 %v1502
    %v3602 = vpop.f32.mrb[0].mxu0
    %v3603 = vadd.f32 %v3458, %v3602
    %v3604 = vpop.f32.mrb[0].mxu0
    %3605 = vmatprep.mubr.f32.mxu0 %v1528
    %3606 = vmatmul.mubr.f32.gmra.mrb[0].mxu0 %v1527
    %v3607 = vpop.f32.mrb[0].mxu0
    %v3608 = vadd.f32 %v3463, %v3607
    %v3609 = vpop.f32.mrb[0].mxu0
    %3610 = vmatprep.mubr.f32.mxu0 %v1553
    %3611 = vmatmul.mubr.f32.gmra.mrb[0].mxu0 %v1552
    %v3612 = vpop.f32.mrb[0].mxu0
    %v3613 = vadd.f32 %v3468, %v3612
    %v3614 = vpop.f32.mrb[0].mxu0
    %3615 = vmatprep.mubr.f32.mxu0 %v1578
    %3616 = vmatmul.mubr.f32.gmra.mrb[0].mxu0 %v1577
    %v3617 = vpop.f32.mrb[0].mxu0
    %v3618 = vadd.f32 %v3473, %v3617
    %v3619 = vpop.f32.mrb[0].mxu0
    %3620 = vmatprep.mubr.f32.mxu0 %v1603
    %3621 = vmatmul.mubr.f32.gmra.mrb[0].mxu0 %v1602
    %v3622 = vpop.f32.mrb[0].mxu0
    %v3623 = vadd.f32 %v3478, %v3622
    %v3624 = vpop.f32.mrb[0].mxu0
    %3625 = vmatprep.mubr.f32.mxu0 %v1628
    %3626 = vmatmul.mubr.f32.gmra.mrb[0].mxu0 %v1627
    %v3627 = vpop.f32.mrb[0].mxu0
    %v3628 = vadd.f32 %v3483, %v3627
    %v3629 = vpop.f32.mrb[0].mxu0
    %3630 = vmatprep.mubr.f32.mxu0 %v1653
    %3631 = vmatmul.mubr.f32.gmra.mrb[0].mxu0 %v1652
    %v3632 = vpop.f32.mrb[0].mxu0
    %v3633 = vadd.f32 %v3488, %v3632
    %v3634 = vpop.f32.mrb[0].mxu0
    %3635 = vmatprep.mubr.f32.mxu0 %v1678
    %3636 = vmatmul.mubr.f32.gmra.mrb[0].mxu0 %v1677
    %v3637 = vpop.f32.mrb[0].mxu0
    %v3638 = vadd.f32 %v3493, %v3637
    %v3639 = vpop.f32.mrb[0].mxu0
    %3640 = vmatprep.mubr.f32.mxu0 %v1703
    %3641 = vmatmul.mubr.f32.gmra.mrb[0].mxu0 %v1702
    %v3642 = vpop.f32.mrb[0].mxu0
    %v3643 = vadd.f32 %v3498, %v3642
    %v3644 = vpop.f32.mrb[0].mxu0
    %3645 = vmatprep.mubr.f32.mxu0 %v1728
    %3646 = vmatmul.mubr.f32.gmra.mrb[0].mxu0 %v1727
    %v3647 = vpop.f32.mrb[0].mxu0
    %v3648 = vadd.f32 %v3503, %v3647
    %v3649 = vpop.f32.mrb[0].mxu0
    %3650 = vmatprep.mubr.f32.mxu0 %v1753
    %3651 = vmatmul.mubr.f32.gmra.mrb[0].mxu0 %v1752
    %v3652 = vpop.f32.mrb[0].mxu0
    %v3653 = vadd.f32 %v3508, %v3652
    %v3654 = vpop.f32.mrb[0].mxu0
    %3655 = vmatprep.mubr.f32.mxu0 %v1778
    %3656 = vmatmul.mubr.f32.gmra.mrb[0].mxu0 %v1777
    %v3657 = vpop.f32.mrb[0].mxu0
    %v3658 = vadd.f32 %v3513, %v3657
    %v3659 = vpop.f32.mrb[0].mxu0
    %3660 = vmatprep.mubr.f32.mxu0 %v1803
    %3661 = vmatmul.mubr.f32.gmra.mrb[0].mxu0 %v1802
    %v3662 = vpop.f32.mrb[0].mxu0
    %v3663 = vadd.f32 %v3518, %v3662
    %v3664 = vpop.f32.mrb[0].mxu0
    %3665 = vdwg.mxu0
    %3666 = vmatprep.subr.mxu0 0.0
    %3667 = vmatpush1.msra.mxu0 %v2129
    %3668 = vmatprep.subr.mxu0 0.0
    %3669 = vmatpush1.msra.mxu0 %v2130
    %3670 = vmatprep.subr.mxu0 0.0
    %3671 = vmatpush1.msra.mxu0 %v2131
    %3672 = vmatprep.subr.mxu0 0.0
    %3673 = vmatpush1.msra.mxu0 %v2132
    %3674 = vmatprep.subr.mxu0 0.0
    %3675 = vmatpush1.msra.mxu0 %v2133
    %3676 = vmatprep.subr.mxu0 0.0
    %3677 = vmatpush1.msra.mxu0 %v2134
    %3678 = vmatprep.subr.mxu0 0.0
    %3679 = vmatpush1.msra.mxu0 %v2135
    %3680 = vmatprep.subr.mxu0 0.0
    %3681 = vmatpush1.msra.mxu0 %v2136
    %3682 = vmatprep.subr.mxu0 0.0
    %3683 = vmatpush1.msra.mxu0 %v2137
    %3684 = vmatprep.subr.mxu0 0.0
    %3685 = vmatpush1.msra.mxu0 %v2138
    %3686 = vmatprep.subr.mxu0 0.0
    %3687 = vmatpush1.msra.mxu0 %v2139
    %3688 = vmatprep.subr.mxu0 0.0
    %3689 = vmatpush1.msra.mxu0 %v2140
    %3690 = vmatprep.subr.mxu0 0.0
    %3691 = vmatpush1.msra.mxu0 %v2141
    %3692 = vmatprep.subr.mxu0 0.0
    %3693 = vmatpush1.msra.mxu0 %v2142
    %3694 = vmatprep.subr.mxu0 0.0
    %3695 = vmatpush1.msra.mxu0 %v2143
    %3696 = vmatprep.subr.mxu0 0.0
    %3697 = vmatpush1.msra.mxu0 %v2144
    %3698 = vmatprep.subr.mxu0 0.0
    %3699 = vmatpush1.msra.mxu0 %v2145
    %3700 = vmatprep.subr.mxu0 0.0
    %3701 = vmatpush1.msra.mxu0 %v2146
    %3702 = vmatprep.subr.mxu0 0.0
    %3703 = vmatpush1.msra.mxu0 %v2147
    %3704 = vmatprep.subr.mxu0 0.0
    %3705 = vmatpush1.msra.mxu0 %v2148
    %3706 = vmatprep.subr.mxu0 0.0
    %3707 = vmatpush1.msra.mxu0 %v2149
    %3708 = vmatprep.subr.mxu0 0.0
    %3709 = vmatpush1.msra.mxu0 %v2150
    %3710 = vmatprep.subr.mxu0 0.0
    %3711 = vmatpush1.msra.mxu0 %v2151
    %3712 = vmatprep.subr.mxu0 0.0
    %3713 = vmatpush1.msra.mxu0 %v2152
    %3714 = vmatprep.subr.mxu0 0.0
    %3715 = vmatpush1.msra.mxu0 %v2153
    %3716 = vmatprep.subr.mxu0 0.0
    %3717 = vmatpush1.msra.mxu0 %v2154
    %3718 = vmatprep.subr.mxu0 0.0
    %3719 = vmatpush1.msra.mxu0 %v2155
    %3720 = vmatprep.subr.mxu0 0.0
    %3721 = vmatpush1.msra.mxu0 %v2156
    %3722 = vmatprep.subr.mxu0 0.0
    %3723 = vmatpush1.msra.mxu0 %v2157
    %3724 = vmatprep.subr.mxu0 0.0
    %3725 = vmatpush1.msra.mxu0 %v2158
    %3726 = vmatprep.subr.mxu0 0.0
    %3727 = vmatpush1.msra.mxu0 %v2159
    %3728 = vmatprep.subr.mxu0 0.0
    %3729 = vmatpush1.msra.mxu0 %v2160
    %3730 = vmatprep.mubr.f32.mxu0 %v1430
    %3731 = vmatmul.mubr.f32.gmra.mrb[0].mxu0 %v1429
    %v3732 = vpop.f32.mrb[0].mxu0
    %v3733 = vadd.f32 %v3588, %v3732
    %v3734 = vpop.f32.mrb[0].mxu0
    %3735 = vmatprep.mubr.f32.mxu0 %v1455
    %3736 = vmatmul.mubr.f32.gmra.mrb[0].mxu0 %v1454
    %v3737 = vpop.f32.mrb[0].mxu0
    %v3738 = vadd.f32 %v3593, %v3737
    %v3739 = vpop.f32.mrb[0].mxu0
    %3740 = vmatprep.mubr.f32.mxu0 %v1480
    %3741 = vmatmul.mubr.f32.gmra.mrb[0].mxu0 %v1479
    %v3742 = vpop.f32.mrb[0].mxu0
    %v3743 = vadd.f32 %v3598, %v3742
    %v3744 = vpop.f32.mrb[0].mxu0
    %3745 = vmatprep.mubr.f32.mxu0 %v1505
    %3746 = vmatmul.mubr.f32.gmra.mrb[0].mxu0 %v1504
    %v3747 = vpop.f32.mrb[0].mxu0
    %v3748 = vadd.f32 %v3603, %v3747
    %v3749 = vpop.f32.mrb[0].mxu0
    %3750 = vmatprep.mubr.f32.mxu0 %v1530
    %3751 = vmatmul.mubr.f32.gmra.mrb[0].mxu0 %v1529
    %v3752 = vpop.f32.mrb[0].mxu0
    %v3753 = vadd.f32 %v3608, %v3752
    %v3754 = vpop.f32.mrb[0].mxu0
    %3755 = vmatprep.mubr.f32.mxu0 %v1555
    %3756 = vmatmul.mubr.f32.gmra.mrb[0].mxu0 %v1554
    %v3757 = vpop.f32.mrb[0].mxu0
    %v3758 = vadd.f32 %v3613, %v3757
    %v3759 = vpop.f32.mrb[0].mxu0
    %3760 = vmatprep.mubr.f32.mxu0 %v1580
    %3761 = vmatmul.mubr.f32.gmra.mrb[0].mxu0 %v1579
    %v3762 = vpop.f32.mrb[0].mxu0
    %v3763 = vadd.f32 %v3618, %v3762
    %v3764 = vpop.f32.mrb[0].mxu0
    %3765 = vmatprep.mubr.f32.mxu0 %v1605
    %3766 = vmatmul.mubr.f32.gmra.mrb[0].mxu0 %v1604
    %v3767 = vpop.f32.mrb[0].mxu0
    %v3768 = vadd.f32 %v3623, %v3767
    %v3769 = vpop.f32.mrb[0].mxu0
    %3770 = vmatprep.mubr.f32.mxu0 %v1630
    %3771 = vmatmul.mubr.f32.gmra.mrb[0].mxu0 %v1629
    %v3772 = vpop.f32.mrb[0].mxu0
    %v3773 = vadd.f32 %v3628, %v3772
    %v3774 = vpop.f32.mrb[0].mxu0
    %3775 = vmatprep.mubr.f32.mxu0 %v1655
    %3776 = vmatmul.mubr.f32.gmra.mrb[0].mxu0 %v1654
    %v3777 = vpop.f32.mrb[0].mxu0
    %v3778 = vadd.f32 %v3633, %v3777
    %v3779 = vpop.f32.mrb[0].mxu0
    %3780 = vmatprep.mubr.f32.mxu0 %v1680
    %3781 = vmatmul.mubr.f32.gmra.mrb[0].mxu0 %v1679
    %v3782 = vpop.f32.mrb[0].mxu0
    %v3783 = vadd.f32 %v3638, %v3782
    %v3784 = vpop.f32.mrb[0].mxu0
    %3785 = vmatprep.mubr.f32.mxu0 %v1705
    %3786 = vmatmul.mubr.f32.gmra.mrb[0].mxu0 %v1704
    %v3787 = vpop.f32.mrb[0].mxu0
    %v3788 = vadd.f32 %v3643, %v3787
    %v3789 = vpop.f32.mrb[0].mxu0
    %3790 = vmatprep.mubr.f32.mxu0 %v1730
    %3791 = vmatmul.mubr.f32.gmra.mrb[0].mxu0 %v1729
    %v3792 = vpop.f32.mrb[0].mxu0
    %v3793 = vadd.f32 %v3648, %v3792
    %v3794 = vpop.f32.mrb[0].mxu0
    %3795 = vmatprep.mubr.f32.mxu0 %v1755
    %3796 = vmatmul.mubr.f32.gmra.mrb[0].mxu0 %v1754
    %v3797 = vpop.f32.mrb[0].mxu0
    %v3798 = vadd.f32 %v3653, %v3797
    %v3799 = vpop.f32.mrb[0].mxu0
    %3800 = vmatprep.mubr.f32.mxu0 %v1780
    %3801 = vmatmul.mubr.f32.gmra.mrb[0].mxu0 %v1779
    %v3802 = vpop.f32.mrb[0].mxu0
    %v3803 = vadd.f32 %v3658, %v3802
    %v3804 = vpop.f32.mrb[0].mxu0
    %3805 = vmatprep.mubr.f32.mxu0 %v1805
    %3806 = vmatmul.mubr.f32.gmra.mrb[0].mxu0 %v1804
    %v3807 = vpop.f32.mrb[0].mxu0
    %v3808 = vadd.f32 %v3663, %v3807
    %v3809 = vpop.f32.mrb[0].mxu0
    %3810 = vdwg.mxu0
    %3811 = vmatprep.subr.mxu0 0.0
    %3812 = vmatpush1.msra.mxu0 %v2161
    %3813 = vmatprep.subr.mxu0 0.0
    %3814 = vmatpush1.msra.mxu0 %v2162
    %3815 = vmatprep.subr.mxu0 0.0
    %3816 = vmatpush1.msra.mxu0 %v2163
    %3817 = vmatprep.subr.mxu0 0.0
    %3818 = vmatpush1.msra.mxu0 %v2164
    %3819 = vmatprep.subr.mxu0 0.0
    %3820 = vmatpush1.msra.mxu0 %v2165
    %3821 = vmatprep.subr.mxu0 0.0
    %3822 = vmatpush1.msra.mxu0 %v2166
    %3823 = vmatprep.subr.mxu0 0.0
    %3824 = vmatpush1.msra.mxu0 %v2167
    %3825 = vmatprep.subr.mxu0 0.0
    %3826 = vmatpush1.msra.mxu0 %v2168
    %3827 = vmatprep.subr.mxu0 0.0
    %3828 = vmatpush1.msra.mxu0 %v2169
    %3829 = vmatprep.subr.mxu0 0.0
    %3830 = vmatpush1.msra.mxu0 %v2170
    %3831 = vmatprep.subr.mxu0 0.0
    %3832 = vmatpush1.msra.mxu0 %v2171
    %3833 = vmatprep.subr.mxu0 0.0
    %3834 = vmatpush1.msra.mxu0 %v2172
    %3835 = vmatprep.subr.mxu0 0.0
    %3836 = vmatpush1.msra.mxu0 %v2173
    %3837 = vmatprep.subr.mxu0 0.0
    %3838 = vmatpush1.msra.mxu0 %v2174
    %3839 = vmatprep.subr.mxu0 0.0
    %3840 = vmatpush1.msra.mxu0 %v2175
    %3841 = vmatprep.subr.mxu0 0.0
    %3842 = vmatpush1.msra.mxu0 %v2176
    %3843 = vmatprep.subr.mxu0 0.0
    %3844 = vmatpush1.msra.mxu0 %v2177
    %3845 = vmatprep.subr.mxu0 0.0
    %3846 = vmatpush1.msra.mxu0 %v2178
    %3847 = vmatprep.subr.mxu0 0.0
    %3848 = vmatpush1.msra.mxu0 %v2179
    %3849 = vmatprep.subr.mxu0 0.0
    %3850 = vmatpush1.msra.mxu0 %v2180
    %3851 = vmatprep.subr.mxu0 0.0
    %3852 = vmatpush1.msra.mxu0 %v2181
    %3853 = vmatprep.subr.mxu0 0.0
    %3854 = vmatpush1.msra.mxu0 %v2182
    %3855 = vmatprep.subr.mxu0 0.0
    %3856 = vmatpush1.msra.mxu0 %v2183
    %3857 = vmatprep.subr.mxu0 0.0
    %3858 = vmatpush1.msra.mxu0 %v2184
    %3859 = vmatprep.subr.mxu0 0.0
    %3860 = vmatpush1.msra.mxu0 %v2185
    %3861 = vmatprep.subr.mxu0 0.0
    %3862 = vmatpush1.msra.mxu0 %v2186
    %3863 = vmatprep.subr.mxu0 0.0
    %3864 = vmatpush1.msra.mxu0 %v2187
    %3865 = vmatprep.subr.mxu0 0.0
    %3866 = vmatpush1.msra.mxu0 %v2188
    %3867 = vmatprep.subr.mxu0 0.0
    %3868 = vmatpush1.msra.mxu0 %v2189
    %3869 = vmatprep.subr.mxu0 0.0
    %3870 = vmatpush1.msra.mxu0 %v2190
    %3871 = vmatprep.subr.mxu0 0.0
    %3872 = vmatpush1.msra.mxu0 %v2191
    %3873 = vmatprep.subr.mxu0 0.0
    %3874 = vmatpush1.msra.mxu0 %v2192
    %3875 = vmatprep.mubr.f32.mxu0 %v1432
    %3876 = vmatmul.mubr.f32.gmra.mrb[0].mxu0 %v1431
    %v3877 = vpop.f32.mrb[0].mxu0
    %v3878 = vadd.f32 %v3733, %v3877
    %v3879 = vpop.f32.mrb[0].mxu0
    %3880 = vmatprep.mubr.f32.mxu0 %v1457
    %3881 = vmatmul.mubr.f32.gmra.mrb[0].mxu0 %v1456
    %v3882 = vpop.f32.mrb[0].mxu0
    %v3883 = vadd.f32 %v3738, %v3882
    %v3884 = vpop.f32.mrb[0].mxu0
    %3885 = vmatprep.mubr.f32.mxu0 %v1482
    %3886 = vmatmul.mubr.f32.gmra.mrb[0].mxu0 %v1481
    %v3887 = vpop.f32.mrb[0].mxu0
    %v3888 = vadd.f32 %v3743, %v3887
    %v3889 = vpop.f32.mrb[0].mxu0
    %3890 = vmatprep.mubr.f32.mxu0 %v1507
    %3891 = vmatmul.mubr.f32.gmra.mrb[0].mxu0 %v1506
    %v3892 = vpop.f32.mrb[0].mxu0
    %v3893 = vadd.f32 %v3748, %v3892
    %v3894 = vpop.f32.mrb[0].mxu0
    %3895 = vmatprep.mubr.f32.mxu0 %v1532
    %3896 = vmatmul.mubr.f32.gmra.mrb[0].mxu0 %v1531
    %v3897 = vpop.f32.mrb[0].mxu0
    %v3898 = vadd.f32 %v3753, %v3897
    %v3899 = vpop.f32.mrb[0].mxu0
    %3900 = vmatprep.mubr.f32.mxu0 %v1557
    %3901 = vmatmul.mubr.f32.gmra.mrb[0].mxu0 %v1556
    %v3902 = vpop.f32.mrb[0].mxu0
    %v3903 = vadd.f32 %v3758, %v3902
    %v3904 = vpop.f32.mrb[0].mxu0
    %3905 = vmatprep.mubr.f32.mxu0 %v1582
    %3906 = vmatmul.mubr.f32.gmra.mrb[0].mxu0 %v1581
    %v3907 = vpop.f32.mrb[0].mxu0
    %v3908 = vadd.f32 %v3763, %v3907
    %v3909 = vpop.f32.mrb[0].mxu0
    %3910 = vmatprep.mubr.f32.mxu0 %v1607
    %3911 = vmatmul.mubr.f32.gmra.mrb[0].mxu0 %v1606
    %v3912 = vpop.f32.mrb[0].mxu0
    %v3913 = vadd.f32 %v3768, %v3912
    %v3914 = vpop.f32.mrb[0].mxu0
    %3915 = vmatprep.mubr.f32.mxu0 %v1632
    %3916 = vmatmul.mubr.f32.gmra.mrb[0].mxu0 %v1631
    %v3917 = vpop.f32.mrb[0].mxu0
    %v3918 = vadd.f32 %v3773, %v3917
    %v3919 = vpop.f32.mrb[0].mxu0
    %3920 = vmatprep.mubr.f32.mxu0 %v1657
    %3921 = vmatmul.mubr.f32.gmra.mrb[0].mxu0 %v1656
    %v3922 = vpop.f32.mrb[0].mxu0
    %v3923 = vadd.f32 %v3778, %v3922
    %v3924 = vpop.f32.mrb[0].mxu0
    %3925 = vmatprep.mubr.f32.mxu0 %v1682
    %3926 = vmatmul.mubr.f32.gmra.mrb[0].mxu0 %v1681
    %v3927 = vpop.f32.mrb[0].mxu0
    %v3928 = vadd.f32 %v3783, %v3927
    %v3929 = vpop.f32.mrb[0].mxu0
    %3930 = vmatprep.mubr.f32.mxu0 %v1707
    %3931 = vmatmul.mubr.f32.gmra.mrb[0].mxu0 %v1706
    %v3932 = vpop.f32.mrb[0].mxu0
    %v3933 = vadd.f32 %v3788, %v3932
    %v3934 = vpop.f32.mrb[0].mxu0
    %3935 = vmatprep.mubr.f32.mxu0 %v1732
    %3936 = vmatmul.mubr.f32.gmra.mrb[0].mxu0 %v1731
    %v3937 = vpop.f32.mrb[0].mxu0
    %v3938 = vadd.f32 %v3793, %v3937
    %v3939 = vpop.f32.mrb[0].mxu0
    %3940 = vmatprep.mubr.f32.mxu0 %v1757
    %3941 = vmatmul.mubr.f32.gmra.mrb[0].mxu0 %v1756
    %v3942 = vpop.f32.mrb[0].mxu0
    %v3943 = vadd.f32 %v3798, %v3942
    %v3944 = vpop.f32.mrb[0].mxu0
    %3945 = vmatprep.mubr.f32.mxu0 %v1782
    %3946 = vmatmul.mubr.f32.gmra.mrb[0].mxu0 %v1781
    %v3947 = vpop.f32.mrb[0].mxu0
    %v3948 = vadd.f32 %v3803, %v3947
    %v3949 = vpop.f32.mrb[0].mxu0
    %3950 = vmatprep.mubr.f32.mxu0 %v1807
    %3951 = vmatmul.mubr.f32.gmra.mrb[0].mxu0 %v1806
    %v3952 = vpop.f32.mrb[0].mxu0
    %v3953 = vadd.f32 %v3808, %v3952
    %v3954 = vpop.f32.mrb[0].mxu0
    %3955 = vdwg.mxu0
    %3956 = vmatprep.subr.mxu0 0.0
    %3957 = vmatpush1.msra.mxu0 %v2193
    %3958 = vmatprep.subr.mxu0 0.0
    %3959 = vmatpush1.msra.mxu0 %v2194
    %3960 = vmatprep.subr.mxu0 0.0
    %3961 = vmatpush1.msra.mxu0 %v2195
    %3962 = vmatprep.subr.mxu0 0.0
    %3963 = vmatpush1.msra.mxu0 %v2196
    %3964 = vmatprep.subr.mxu0 0.0
    %3965 = vmatpush1.msra.mxu0 %v2197
    %3966 = vmatprep.subr.mxu0 0.0
    %3967 = vmatpush1.msra.mxu0 %v2198
    %3968 = vmatprep.subr.mxu0 0.0
    %3969 = vmatpush1.msra.mxu0 %v2199
    %3970 = vmatprep.subr.mxu0 0.0
    %3971 = vmatpush1.msra.mxu0 %v2200
    %3972 = vmatprep.subr.mxu0 0.0
    %3973 = vmatpush1.msra.mxu0 %v2201
    %3974 = vmatprep.subr.mxu0 0.0
    %3975 = vmatpush1.msra.mxu0 %v2202
    %3976 = vmatprep.subr.mxu0 0.0
    %3977 = vmatpush1.msra.mxu0 %v2203
    %3978 = vmatprep.subr.mxu0 0.0
    %3979 = vmatpush1.msra.mxu0 %v2204
    %3980 = vmatprep.subr.mxu0 0.0
    %3981 = vmatpush1.msra.mxu0 %v2205
    %3982 = vmatprep.subr.mxu0 0.0
    %3983 = vmatpush1.msra.mxu0 %v2206
    %3984 = vmatprep.subr.mxu0 0.0
    %3985 = vmatpush1.msra.mxu0 %v2207
    %3986 = vmatprep.subr.mxu0 0.0
    %3987 = vmatpush1.msra.mxu0 %v2208
    %3988 = vmatprep.subr.mxu0 0.0
    %3989 = vmatpush1.msra.mxu0 0.0
    %3990 = vmatprep.subr.mxu0 0.0
    %3991 = vmatpush1.msra.mxu0 0.0
    %3992 = vmatprep.subr.mxu0 0.0
    %3993 = vmatpush1.msra.mxu0 0.0
    %3994 = vmatprep.subr.mxu0 0.0
    %3995 = vmatpush1.msra.mxu0 0.0
    %3996 = vmatprep.subr.mxu0 0.0
    %3997 = vmatpush1.msra.mxu0 0.0
    %3998 = vmatprep.subr.mxu0 0.0
    %3999 = vmatpush1.msra.mxu0 0.0
    %4000 = vmatprep.subr.mxu0 0.0
    %4001 = vmatpush1.msra.mxu0 0.0
    %4002 = vmatprep.subr.mxu0 0.0
    %4003 = vmatpush1.msra.mxu0 0.0
    %4004 = vmatprep.subr.mxu0 0.0
    %4005 = vmatpush1.msra.mxu0 0.0
    %4006 = vmatprep.subr.mxu0 0.0
    %4007 = vmatpush1.msra.mxu0 0.0
    %4008 = vmatprep.subr.mxu0 0.0
    %4009 = vmatpush1.msra.mxu0 0.0
    %4010 = vmatprep.subr.mxu0 0.0
    %4011 = vmatpush1.msra.mxu0 0.0
    %4012 = vmatprep.subr.mxu0 0.0
    %4013 = vmatpush1.msra.mxu0 0.0
    %4014 = vmatprep.subr.mxu0 0.0
    %4015 = vmatpush1.msra.mxu0 0.0
    %4016 = vmatprep.subr.mxu0 0.0
    %4017 = vmatpush1.msra.mxu0 0.0
    %4018 = vmatprep.subr.mxu0 0.0
    %4019 = vmatpush1.msra.mxu0 0.0
    %4020 = vmatprep.mubr.f32.mxu0 0.0
    %4021 = vmatmul.mubr.f32.gmra.mrb[0].mxu0 %v1433
    %v4022 = vpop.f32.mrb[0].mxu0
    %v4023 = vadd.f32 %v3878, %v4022
    %v4024 = vpop.f32.mrb[0].mxu0
    %4025 = vmatprep.mubr.f32.mxu0 0.0
    %4026 = vmatmul.mubr.f32.gmra.mrb[0].mxu0 %v1458
    %v4027 = vpop.f32.mrb[0].mxu0
    %v4028 = vadd.f32 %v3883, %v4027
    %v4029 = vpop.f32.mrb[0].mxu0
    %4030 = vmatprep.mubr.f32.mxu0 0.0
    %4031 = vmatmul.mubr.f32.gmra.mrb[0].mxu0 %v1483
    %v4032 = vpop.f32.mrb[0].mxu0
    %v4033 = vadd.f32 %v3888, %v4032
    %v4034 = vpop.f32.mrb[0].mxu0
    %4035 = vmatprep.mubr.f32.mxu0 0.0
    %4036 = vmatmul.mubr.f32.gmra.mrb[0].mxu0 %v1508
    %v4037 = vpop.f32.mrb[0].mxu0
    %v4038 = vadd.f32 %v3893, %v4037
    %v4039 = vpop.f32.mrb[0].mxu0
    %4040 = vmatprep.mubr.f32.mxu0 0.0
    %4041 = vmatmul.mubr.f32.gmra.mrb[0].mxu0 %v1533
    %v4042 = vpop.f32.mrb[0].mxu0
    %v4043 = vadd.f32 %v3898, %v4042
    %v4044 = vpop.f32.mrb[0].mxu0
    %4045 = vmatprep.mubr.f32.mxu0 0.0
    %4046 = vmatmul.mubr.f32.gmra.mrb[0].mxu0 %v1558
    %v4047 = vpop.f32.mrb[0].mxu0
    %v4048 = vadd.f32 %v3903, %v4047
    %v4049 = vpop.f32.mrb[0].mxu0
    %4050 = vmatprep.mubr.f32.mxu0 0.0
    %4051 = vmatmul.mubr.f32.gmra.mrb[0].mxu0 %v1583
    %v4052 = vpop.f32.mrb[0].mxu0
    %v4053 = vadd.f32 %v3908, %v4052
    %v4054 = vpop.f32.mrb[0].mxu0
    %4055 = vmatprep.mubr.f32.mxu0 0.0
    %4056 = vmatmul.mubr.f32.gmra.mrb[0].mxu0 %v1608
    %v4057 = vpop.f32.mrb[0].mxu0
    %v4058 = vadd.f32 %v3913, %v4057
    %v4059 = vpop.f32.mrb[0].mxu0
    %4060 = vmatprep.mubr.f32.mxu0 0.0
    %4061 = vmatmul.mubr.f32.gmra.mrb[0].mxu0 %v1633
    %v4062 = vpop.f32.mrb[0].mxu0
    %v4063 = vadd.f32 %v3918, %v4062
    %v4064 = vpop.f32.mrb[0].mxu0
    %4065 = vmatprep.mubr.f32.mxu0 0.0
    %4066 = vmatmul.mubr.f32.gmra.mrb[0].mxu0 %v1658
    %v4067 = vpop.f32.mrb[0].mxu0
    %v4068 = vadd.f32 %v3923, %v4067
    %v4069 = vpop.f32.mrb[0].mxu0
    %4070 = vmatprep.mubr.f32.mxu0 0.0
    %4071 = vmatmul.mubr.f32.gmra.mrb[0].mxu0 %v1683
    %v4072 = vpop.f32.mrb[0].mxu0
    %v4073 = vadd.f32 %v3928, %v4072
    %v4074 = vpop.f32.mrb[0].mxu0
    %4075 = vmatprep.mubr.f32.mxu0 0.0
    %4076 = vmatmul.mubr.f32.gmra.mrb[0].mxu0 %v1708
    %v4077 = vpop.f32.mrb[0].mxu0
    %v4078 = vadd.f32 %v3933, %v4077
    %v4079 = vpop.f32.mrb[0].mxu0
    %4080 = vmatprep.mubr.f32.mxu0 0.0
    %4081 = vmatmul.mubr.f32.gmra.mrb[0].mxu0 %v1733
    %v4082 = vpop.f32.mrb[0].mxu0
    %v4083 = vadd.f32 %v3938, %v4082
    %v4084 = vpop.f32.mrb[0].mxu0
    %4085 = vmatprep.mubr.f32.mxu0 0.0
    %4086 = vmatmul.mubr.f32.gmra.mrb[0].mxu0 %v1758
    %v4087 = vpop.f32.mrb[0].mxu0
    %v4088 = vadd.f32 %v3943, %v4087
    %v4089 = vpop.f32.mrb[0].mxu0
    %4090 = vmatprep.mubr.f32.mxu0 0.0
    %4091 = vmatmul.mubr.f32.gmra.mrb[0].mxu0 %v1783
    %v4092 = vpop.f32.mrb[0].mxu0
    %v4093 = vadd.f32 %v3948, %v4092
    %v4094 = vpop.f32.mrb[0].mxu0
    %4095 = vmatprep.mubr.f32.mxu0 0.0
    %4096 = vmatmul.mubr.f32.gmra.mrb[0].mxu0 %v1808
    %v4097 = vpop.f32.mrb[0].mxu0
    %v4098 = vadd.f32 %v3953, %v4097
    %v4099 = vpop.f32.mrb[0].mxu0
    %4100 = vdwg.mxu0
    %v4101 = vmax.f32 %v4023, 0.0
    %v4102 = vmax.f32 %v4028, 0.0
    %v4103 = vmax.f32 %v4033, 0.0
    %v4104 = vmax.f32 %v4038, 0.0
    %v4105 = vmax.f32 %v4043, 0.0
    %v4106 = vmax.f32 %v4048, 0.0
    %v4107 = vmax.f32 %v4053, 0.0
    %v4108 = vmax.f32 %v4058, 0.0
    %v4109 = vmax.f32 %v4063, 0.0
    %v4110 = vmax.f32 %v4068, 0.0
    %v4111 = vmax.f32 %v4073, 0.0
    %v4112 = vmax.f32 %v4078, 0.0
    %v4113 = vmax.f32 %v4083, 0.0
    %v4114 = vmax.f32 %v4088, 0.0
    %v4115 = vmax.f32 %v4093, 0.0
    %v4116 = vmax.f32 %v4098, 0.0
    %4117 = vst [vmem:[#allocation13] sm:$0xff] %v4101
    %4118 = vst [vmem:[#allocation13 + $0x8] sm:$0xff] %v4102
    %4119 = vst [vmem:[#allocation13 + $0x10] sm:$0xff] %v4103
    %4120 = vst [vmem:[#allocation13 + $0x18] sm:$0xff] %v4104
    %4121 = vst [vmem:[#allocation13 + $0x20] sm:$0xff] %v4105
    %4122 = vst [vmem:[#allocation13 + $0x28] sm:$0xff] %v4106
    %4123 = vst [vmem:[#allocation13 + $0x30] sm:$0xff] %v4107
    %4124 = vst [vmem:[#allocation13 + $0x38] sm:$0xff] %v4108
    %4125 = vst [vmem:[#allocation13 + $0x40] sm:$0xff] %v4109
    %4126 = vst [vmem:[#allocation13 + $0x48] sm:$0xff] %v4110
    %4127 = vst [vmem:[#allocation13 + $0x50] sm:$0xff] %v4111
    %4128 = vst [vmem:[#allocation13 + $0x58] sm:$0xff] %v4112
    %4129 = vst [vmem:[#allocation13 + $0x60] sm:$0xff] %v4113
    %4130 = vst [vmem:[#allocation13 + $0x68] sm:$0xff] %v4114
    %4131 = vst [vmem:[#allocation13 + $0x70] sm:$0xff] %v4115
    %4132 = vst [vmem:[#allocation13 + $0x78] sm:$0xff] %v4116
    // Predicated region
    $region42: #{tpu_custom_call.1} parent=1 // pred_check
      _
    $region43: #{tpu_custom_call.1} parent=1 // pred_check_branch
      %4134 = sbr.rel (0) target = $region45
    $region44: #{tpu_custom_call.1} parent=1 // pred_region
      %s4136 = ssub.s32 2048, 2048
      %4137 = vsyncadd [#allocation6], %s4136
      %s4138 = sshll.u32 [#allocation13], 4
      %s4139 = int_to_ptr.vmem [resolvable:$true] %s4138
      %4144 = dma.vmem_to_hbm [thread:$0]  %s4139, 2048, %s5, [#allocation6], 128, 128, 8
    $region45: #{tpu_custom_call.1} parent=1 // pred_fallthru
      _
    // Predicated region
    $region46: #{tpu_custom_call.1} parent=1 // pred_check
      _
    $region47: #{tpu_custom_call.1} parent=1 // pred_check_branch
      %4146 = sbr.rel (0) target = $region49
    $region48: #{tpu_custom_call.1} parent=1 // pred_region
      %4147 = dma.done [#allocation6], 2048
    $region49: #{tpu_custom_call.1} parent=1 // pred_fallthru
      _
    %4148 = vsyncpa [#allocation5], 1
    %4149 = vsyncpa [#allocation8], 1
    %4150 = vsyncpa [#allocation11], 1
    %4151 = vsyncpa [#allocation6], 1

</llo_original>
